<compile_context>
chip_gen: v6e
topology: v6e:2x2x1
jax: 0.10.0
libtpu: 0.0.40
codegen_flags: <defaults>
</compile_context>

<pallas_src>
import functools

import jax
import jax.numpy as jnp
from jax.experimental import pallas as pl
from jax.experimental.pallas import tpu as pltpu


def _round_up(x, m):
    return (x + m - 1) // m * m


# ----------------------------- Pallas kernel -------------------------------

def _matmul_bias_act_kernel(x_ref, w_ref, b_ref, o_ref, *, relu):
    # MXU matmul (bf16 in, f32 accumulate) + bias + optional ReLU, all in VMEM.
    acc = jnp.dot(x_ref[...], w_ref[...], preferred_element_type=jnp.float32)
    acc = acc + b_ref[...]
    if relu:
        acc = jnp.maximum(acc, 0.0)
    o_ref[...] = acc.astype(o_ref.dtype)


def matmul_bias_act(x, w, b, *, relu, out_dtype=jnp.float32, tm_max=512):
    """x: [M, K], w: [K, N], b: [N] -> act(x @ w + b) as [M, N] (f32)."""
    M, K = x.shape
    K2, N = w.shape
    assert K == K2, (K, K2)

    # Zero-pad K and N to lane multiples (128): keeps the MXU contraction full
    # and makes output stores lane-dense. Zero rows/cols do not change results.
    Kp = _round_up(K, 128)
    Np = _round_up(N, 128)
    if Kp != K:
        x = jnp.pad(x, ((0, 0), (0, Kp - K)))
        w = jnp.pad(w, ((0, Kp - K), (0, 0)))
    if Np != N:
        w = jnp.pad(w, ((0, 0), (0, Np - N)))
        b = jnp.pad(b, (0, Np - N))

    # bf16 operands, f32 accumulation on the MXU.
    x = x.astype(jnp.bfloat16)
    w = w.astype(jnp.bfloat16)
    b2 = b.reshape(1, Np).astype(jnp.float32)

    # Tile over M: automatic double-buffering; VMEM use independent of M.
    tm = min(tm_max, _round_up(M, 8))
    grid_m = pl.cdiv(M, tm)

    cost = pl.CostEstimate(
        flops=2 * M * Kp * Np,
        transcendentals=0,
        bytes_accessed=M * Kp * 2 + Kp * Np * 2 + Np * 4 + M * Np * 4,
    )

    out = pl.pallas_call(
        functools.partial(_matmul_bias_act_kernel, relu=relu),
        out_shape=jax.ShapeDtypeStruct((M, Np), out_dtype),
        grid=(grid_m,),
        in_specs=[
            pl.BlockSpec((tm, Kp), lambda i: (i, 0)),   # streamed over M
            pl.BlockSpec((Kp, Np), lambda i: (0, 0)),   # weights resident
            pl.BlockSpec((1, Np), lambda i: (0, 0)),    # bias resident
        ],
        out_specs=pl.BlockSpec((tm, Np), lambda i: (i, 0)),
        compiler_params=pltpu.CompilerParams(
            dimension_semantics=("parallel",),          # megacore-shardable on v7x
        ),
        cost_estimate=cost,
    )(x, w, b2)

    if Np != N:
        out = out[:, :N]
    return out


# ------------------------------ JAX glue ------------------------------------

def im2col_nhwc(x, kh, kw, stride, pad):
    """x: [B, H, W, C] (NHWC). Returns ([B*Ho*Wo, kh*kw*C], Ho, Wo).

    K index ordering is (kh, kw, C) -- matches the pre-permuted conv weights.
    """
    B, H, W, C = x.shape
    xp = jnp.pad(x, ((0, 0), (pad, pad), (pad, pad), (0, 0)))
    Ho = (H + 2 * pad - kh) // stride + 1
    Wo = (W + 2 * pad - kw) // stride + 1
    patches = []
    for i in range(kh):
        for j in range(kw):
            patches.append(
                xp[:, i:i + stride * Ho:stride, j:j + stride * Wo:stride, :]
            )
    p = jnp.stack(patches, axis=3)                 # [B, Ho, Wo, kh*kw, C]
    return p.reshape(B * Ho * Wo, kh * kw * C), Ho, Wo


def conv2d_relu_nhwc(x, w2, b, kh, kw, stride, pad, relu=True):
    """x: [B, H, W, Cin]; w2: [kh*kw*Cin, Cout]; -> [B, Ho, Wo, Cout]."""
    B = x.shape[0]
    Cout = w2.shape[1]
    patches, Ho, Wo = im2col_nhwc(x, kh, kw, stride, pad)  # [M, kh*kw*Cin]
    out = matmul_bias_act(patches, w2, b, relu=relu)       # [M, Cout]
    return out.reshape(B, Ho, Wo, Cout)


# ------------------------- Parameter initialization -------------------------

def init_params(key, num_classes=10, dtype=jnp.float32):
    ks = jax.random.split(key, 8)

    def conv_w(k, cout, cin, kh, kw):
        # nn.init.kaiming_normal_(w, mode='fan_out', nonlinearity='relu'),
        # generated in PyTorch layout [Cout, Cin, kh, kw] then pre-permuted
        # ONCE to matmul layout [kh*kw*Cin, Cout] (kh, kw, Cin row ordering).
        fan_out = cout * kh * kw
        std = (2.0 / fan_out) ** 0.5
        w = jax.random.normal(k, (cout, cin, kh, kw), dtype) * std
        return w.transpose(2, 3, 1, 0).reshape(kh * kw * cin, cout)

    def conv_b(k, cout, cin, kh, kw):
        # PyTorch default conv bias: U(-1/sqrt(fan_in), 1/sqrt(fan_in))
        fan_in = cin * kh * kw
        bound = 1.0 / (fan_in ** 0.5)
        return jax.random.uniform(k, (cout,), dtype, -bound, bound)

    params = {
        "conv1_w": conv_w(ks[0], 64, 1, 8, 8),
        "conv1_b": conv_b(ks[1], 64, 1, 8, 8),
        "conv2_w": conv_w(ks[2], 128, 64, 6, 6),
        "conv2_b": conv_b(ks[3], 128, 64, 6, 6),
        "conv3_w": conv_w(ks[4], 128, 128, 5, 5),
        "conv3_b": conv_b(ks[5], 128, 128, 5, 5),
    }
    # fc: PyTorch default Linear init, weight conceptually [2048, 10] with rows
    # in NCHW-flatten order (C, H, W). Pre-permute rows ONCE to NHWC-flatten
    # order (H, W, C) so the forward needs no activation transpose before fc.
    fan_in, H, W, C = 2048, 4, 4, 128
    bound = 1.0 / (fan_in ** 0.5)
    fc_w = jax.random.uniform(ks[6], (fan_in, num_classes), dtype, -bound, bound)
    fc_w = fc_w.reshape(C, H, W, num_classes).transpose(1, 2, 0, 3)
    params["fc_w"] = fc_w.reshape(fan_in, num_classes)
    params["fc_b"] = jax.random.uniform(ks[7], (num_classes,), dtype, -bound, bound)
    return params


# ------------------------------ Forward pass ---------------------------------

@jax.jit
def basic_model_forward(params, x):
    # x: [B, 1, 28, 28] (NCHW, matches PyTorch). One transpose to NHWC at entry.
    x = jnp.transpose(x, (0, 2, 3, 1))                                          # [B,28,28,1]
    x = conv2d_relu_nhwc(x, params["conv1_w"], params["conv1_b"], 8, 8, 2, 3)   # [B,14,14,64]
    x = conv2d_relu_nhwc(x, params["conv2_w"], params["conv2_b"], 6, 6, 2, 3)   # [B,8,8,128]
    x = conv2d_relu_nhwc(x, params["conv3_w"], params["conv3_b"], 5, 5, 1, 0)   # [B,4,4,128]
    B = x.shape[0]
    x = x.reshape(B, -1)          # NHWC flatten; fc_w rows already permuted to match
    logits = matmul_bias_act(x, params["fc_w"], params["fc_b"], relu=False)     # [B, 10]
    return logits


if __name__ == "__main__":
    key = jax.random.PRNGKey(0)
    pkey, xkey = jax.random.split(key)
    params = init_params(pkey, num_classes=10)
    # MNIST-like input: batch=2, 1 channel, 28x28 (required so fc sees 2048 features)
    x = jax.random.normal(xkey, (2, 1, 28, 28), jnp.float32)

    out = basic_model_forward(params, x)
    out = jax.block_until_ready(out)
    assert out.shape == (2, 10), out.shape
    assert jnp.all(jnp.isfinite(out))
    print("KERNEL_OK")
</pallas_src>

<mosaic_0001>
module attributes {stable_mosaic.version = 11 : i64} {
  func.func @_matmul_bias_act_kernel(%arg0: i32, %arg1: memref<392x128xbf16, #tpu.memory_space<vmem>>, %arg2: memref<128x128xbf16, #tpu.memory_space<vmem>>, %arg3: memref<1x128xf32, #tpu.memory_space<vmem>>, %arg4: memref<392x128xf32, #tpu.memory_space<vmem>>) attributes {dimension_semantics = [#tpu.dimension_semantics<parallel>], iteration_bounds = array<i64: 1>, scalar_prefetch = 0 : i64, scratch_operands = 0 : i64, tpu.core_type = #tpu.core_type<tc>, window_params = [{transform_indices = @transform_0, window_bounds = array<i64: 392, 128>}, {pipeline_mode = #tpu.pipeline_mode<synchronous>, transform_indices = @transform_1, window_bounds = array<i64: 128, 128>}, {pipeline_mode = #tpu.pipeline_mode<synchronous>, transform_indices = @transform_2, window_bounds = array<i64: 1, 128>}, {transform_indices = @transform_3, window_bounds = array<i64: 392, 128>}]} {
    %c0 = arith.constant 0 : index
    %c0_0 = arith.constant 0 : index
    %0 = vector.load %arg1[%c0, %c0_0] : memref<392x128xbf16, #tpu.memory_space<vmem>>, vector<392x128xbf16>
    %c0_1 = arith.constant 0 : index
    %c0_2 = arith.constant 0 : index
    %1 = vector.load %arg2[%c0_1, %c0_2] : memref<128x128xbf16, #tpu.memory_space<vmem>>, vector<128x128xbf16>
    %cst = arith.constant dense<0.000000e+00> : vector<392x128xf32>
    %2 = tpu.matmul %0, %1, %cst {dimension_numbers = #tpu.dot_dimension_numbers<[1], [0], [0], [1], [0, 0, 1, 1], [], []>} : vector<392x128xbf16>, vector<128x128xbf16>, vector<392x128xf32> -> vector<392x128xf32>
    %c0_3 = arith.constant 0 : index
    %c0_4 = arith.constant 0 : index
    %3 = vector.load %arg3[%c0_3, %c0_4] : memref<1x128xf32, #tpu.memory_space<vmem>>, vector<1x128xf32>
    %4 = vector.broadcast %3 : vector<1x128xf32> to vector<392x128xf32>
    %5 = arith.addf %2, %4 : vector<392x128xf32>
    %cst_5 = arith.constant 0.000000e+00 : f32
    %6 = vector.broadcast %cst_5 : f32 to vector<392x128xf32>
    %7 = arith.maximumf %5, %6 : vector<392x128xf32>
    %c0_6 = arith.constant 0 : index
    %c0_7 = arith.constant 0 : index
    %8 = vector.load %arg4[%c0_6, %c0_7] : memref<392x128xf32, #tpu.memory_space<vmem>>, vector<392x128xf32>
    tpu.vector_store %arg4[%c0_6, %c0_7], %7 {strides = array<i32>} : memref<392x128xf32, #tpu.memory_space<vmem>>, vector<392x128xf32>,
    return
  }
  func.func @transform_0(%arg0: i32) -> (i32, i32) {
    %c0_i32 = arith.constant 0 : i32
    %c0_i32_0 = arith.constant 0 : i32
    return %arg0, %c0_i32 : i32, i32
  }
  func.func @transform_1(%arg0: i32) -> (i32, i32) {
    %c0_i32 = arith.constant 0 : i32
    %c0_i32_0 = arith.constant 0 : i32
    %c0_i32_1 = arith.constant 0 : i32
    return %c0_i32, %c0_i32_0 : i32, i32
  }
  func.func @transform_2(%arg0: i32) -> (i32, i32) {
    %c0_i32 = arith.constant 0 : i32
    %c0_i32_0 = arith.constant 0 : i32
    %c0_i32_1 = arith.constant 0 : i32
    return %c0_i32, %c0_i32_0 : i32, i32
  }
  func.func @transform_3(%arg0: i32) -> (i32, i32) {
    %c0_i32 = arith.constant 0 : i32
    %c0_i32_0 = arith.constant 0 : i32
    return %arg0, %c0_i32 : i32, i32
  }
}

module attributes {stable_mosaic.version = 11 : i64} {
  func.func @_matmul_bias_act_kernel(%arg0: i32, %arg1: memref<128x2304xbf16, #tpu.memory_space<vmem>>, %arg2: memref<2304x128xbf16, #tpu.memory_space<vmem>>, %arg3: memref<1x128xf32, #tpu.memory_space<vmem>>, %arg4: memref<128x128xf32, #tpu.memory_space<vmem>>) attributes {dimension_semantics = [#tpu.dimension_semantics<parallel>], iteration_bounds = array<i64: 1>, scalar_prefetch = 0 : i64, scratch_operands = 0 : i64, tpu.core_type = #tpu.core_type<tc>, window_params = [{transform_indices = @transform_0, window_bounds = array<i64: 128, 2304>}, {pipeline_mode = #tpu.pipeline_mode<synchronous>, transform_indices = @transform_1, window_bounds = array<i64: 2304, 128>}, {pipeline_mode = #tpu.pipeline_mode<synchronous>, transform_indices = @transform_2, window_bounds = array<i64: 1, 128>}, {transform_indices = @transform_3, window_bounds = array<i64: 128, 128>}]} {
    %c0 = arith.constant 0 : index
    %c0_0 = arith.constant 0 : index
    %0 = vector.load %arg1[%c0, %c0_0] : memref<128x2304xbf16, #tpu.memory_space<vmem>>, vector<128x2304xbf16>
    %c0_1 = arith.constant 0 : index
    %c0_2 = arith.constant 0 : index
    %1 = vector.load %arg2[%c0_1, %c0_2] : memref<2304x128xbf16, #tpu.memory_space<vmem>>, vector<2304x128xbf16>
    %cst = arith.constant dense<0.000000e+00> : vector<128x128xf32>
    %2 = tpu.matmul %0, %1, %cst {dimension_numbers = #tpu.dot_dimension_numbers<[1], [0], [0], [1], [0, 0, 1, 1], [], []>} : vector<128x2304xbf16>, vector<2304x128xbf16>, vector<128x128xf32> -> vector<128x128xf32>
    %c0_3 = arith.constant 0 : index
    %c0_4 = arith.constant 0 : index
    %3 = vector.load %arg3[%c0_3, %c0_4] : memref<1x128xf32, #tpu.memory_space<vmem>>, vector<1x128xf32>
    %4 = vector.broadcast %3 : vector<1x128xf32> to vector<128x128xf32>
    %5 = arith.addf %2, %4 : vector<128x128xf32>
    %cst_5 = arith.constant 0.000000e+00 : f32
    %6 = vector.broadcast %cst_5 : f32 to vector<128x128xf32>
    %7 = arith.maximumf %5, %6 : vector<128x128xf32>
    %c0_6 = arith.constant 0 : index
    %c0_7 = arith.constant 0 : index
    %8 = vector.load %arg4[%c0_6, %c0_7] : memref<128x128xf32, #tpu.memory_space<vmem>>, vector<128x128xf32>
    tpu.vector_store %arg4[%c0_6, %c0_7], %7 {strides = array<i32>} : memref<128x128xf32, #tpu.memory_space<vmem>>, vector<128x128xf32>,
    return
  }
  func.func @transform_0(%arg0: i32) -> (i32, i32) {
    %c0_i32 = arith.constant 0 : i32
    %c0_i32_0 = arith.constant 0 : i32
    return %arg0, %c0_i32 : i32, i32
  }
  func.func @transform_1(%arg0: i32) -> (i32, i32) {
    %c0_i32 = arith.constant 0 : i32
    %c0_i32_0 = arith.constant 0 : i32
    %c0_i32_1 = arith.constant 0 : i32
    return %c0_i32, %c0_i32_0 : i32, i32
  }
  func.func @transform_2(%arg0: i32) -> (i32, i32) {
    %c0_i32 = arith.constant 0 : i32
    %c0_i32_0 = arith.constant 0 : i32
    %c0_i32_1 = arith.constant 0 : i32
    return %c0_i32, %c0_i32_0 : i32, i32
  }
  func.func @transform_3(%arg0: i32) -> (i32, i32) {
    %c0_i32 = arith.constant 0 : i32
    %c0_i32_0 = arith.constant 0 : i32
    return %arg0, %c0_i32 : i32, i32
  }
}

module attributes {stable_mosaic.version = 11 : i64} {
  func.func @_matmul_bias_act_kernel(%arg0: i32, %arg1: memref<32x3200xbf16, #tpu.memory_space<vmem>>, %arg2: memref<3200x128xbf16, #tpu.memory_space<vmem>>, %arg3: memref<1x128xf32, #tpu.memory_space<vmem>>, %arg4: memref<32x128xf32, #tpu.memory_space<vmem>>) attributes {dimension_semantics = [#tpu.dimension_semantics<parallel>], iteration_bounds = array<i64: 1>, scalar_prefetch = 0 : i64, scratch_operands = 0 : i64, tpu.core_type = #tpu.core_type<tc>, window_params = [{transform_indices = @transform_0, window_bounds = array<i64: 32, 3200>}, {pipeline_mode = #tpu.pipeline_mode<synchronous>, transform_indices = @transform_1, window_bounds = array<i64: 3200, 128>}, {pipeline_mode = #tpu.pipeline_mode<synchronous>, transform_indices = @transform_2, window_bounds = array<i64: 1, 128>}, {transform_indices = @transform_3, window_bounds = array<i64: 32, 128>}]} {
    %c0 = arith.constant 0 : index
    %c0_0 = arith.constant 0 : index
    %0 = vector.load %arg1[%c0, %c0_0] : memref<32x3200xbf16, #tpu.memory_space<vmem>>, vector<32x3200xbf16>
    %c0_1 = arith.constant 0 : index
    %c0_2 = arith.constant 0 : index
    %1 = vector.load %arg2[%c0_1, %c0_2] : memref<3200x128xbf16, #tpu.memory_space<vmem>>, vector<3200x128xbf16>
    %cst = arith.constant dense<0.000000e+00> : vector<32x128xf32>
    %2 = tpu.matmul %0, %1, %cst {dimension_numbers = #tpu.dot_dimension_numbers<[1], [0], [0], [1], [0, 0, 1, 1], [], []>} : vector<32x3200xbf16>, vector<3200x128xbf16>, vector<32x128xf32> -> vector<32x128xf32>
    %c0_3 = arith.constant 0 : index
    %c0_4 = arith.constant 0 : index
    %3 = vector.load %arg3[%c0_3, %c0_4] : memref<1x128xf32, #tpu.memory_space<vmem>>, vector<1x128xf32>
    %4 = vector.broadcast %3 : vector<1x128xf32> to vector<32x128xf32>
    %5 = arith.addf %2, %4 : vector<32x128xf32>
    %cst_5 = arith.constant 0.000000e+00 : f32
    %6 = vector.broadcast %cst_5 : f32 to vector<32x128xf32>
    %7 = arith.maximumf %5, %6 : vector<32x128xf32>
    %c0_6 = arith.constant 0 : index
    %c0_7 = arith.constant 0 : index
    %8 = vector.load %arg4[%c0_6, %c0_7] : memref<32x128xf32, #tpu.memory_space<vmem>>, vector<32x128xf32>
    tpu.vector_store %arg4[%c0_6, %c0_7], %7 {strides = array<i32>} : memref<32x128xf32, #tpu.memory_space<vmem>>, vector<32x128xf32>,
    return
  }
  func.func @transform_0(%arg0: i32) -> (i32, i32) {
    %c0_i32 = arith.constant 0 : i32
    %c0_i32_0 = arith.constant 0 : i32
    return %arg0, %c0_i32 : i32, i32
  }
  func.func @transform_1(%arg0: i32) -> (i32, i32) {
    %c0_i32 = arith.constant 0 : i32
    %c0_i32_0 = arith.constant 0 : i32
    %c0_i32_1 = arith.constant 0 : i32
    return %c0_i32, %c0_i32_0 : i32, i32
  }
  func.func @transform_2(%arg0: i32) -> (i32, i32) {
    %c0_i32 = arith.constant 0 : i32
    %c0_i32_0 = arith.constant 0 : i32
    %c0_i32_1 = arith.constant 0 : i32
    return %c0_i32, %c0_i32_0 : i32, i32
  }
  func.func @transform_3(%arg0: i32) -> (i32, i32) {
    %c0_i32 = arith.constant 0 : i32
    %c0_i32_0 = arith.constant 0 : i32
    return %arg0, %c0_i32 : i32, i32
  }
}

module attributes {stable_mosaic.version = 11 : i64} {
  func.func @_matmul_bias_act_kernel(%arg0: i32, %arg1: memref<8x2048xbf16, #tpu.memory_space<vmem>>, %arg2: memref<2048x128xbf16, #tpu.memory_space<vmem>>, %arg3: memref<1x128xf32, #tpu.memory_space<vmem>>, %arg4: memref<8x128xf32, #tpu.memory_space<vmem>>) attributes {dimension_semantics = [#tpu.dimension_semantics<parallel>], iteration_bounds = array<i64: 1>, scalar_prefetch = 0 : i64, scratch_operands = 0 : i64, tpu.core_type = #tpu.core_type<tc>, window_params = [{transform_indices = @transform_0, window_bounds = array<i64: 8, 2048>}, {pipeline_mode = #tpu.pipeline_mode<synchronous>, transform_indices = @transform_1, window_bounds = array<i64: 2048, 128>}, {pipeline_mode = #tpu.pipeline_mode<synchronous>, transform_indices = @transform_2, window_bounds = array<i64: 1, 128>}, {transform_indices = @transform_3, window_bounds = array<i64: 8, 128>}]} {
    %c0 = arith.constant 0 : index
    %c0_0 = arith.constant 0 : index
    %0 = vector.load %arg1[%c0, %c0_0] : memref<8x2048xbf16, #tpu.memory_space<vmem>>, vector<8x2048xbf16>
    %c0_1 = arith.constant 0 : index
    %c0_2 = arith.constant 0 : index
    %1 = vector.load %arg2[%c0_1, %c0_2] : memref<2048x128xbf16, #tpu.memory_space<vmem>>, vector<2048x128xbf16>
    %cst = arith.constant dense<0.000000e+00> : vector<8x128xf32>
    %2 = tpu.matmul %0, %1, %cst {dimension_numbers = #tpu.dot_dimension_numbers<[1], [0], [0], [1], [0, 0, 1, 1], [], []>} : vector<8x2048xbf16>, vector<2048x128xbf16>, vector<8x128xf32> -> vector<8x128xf32>
    %c0_3 = arith.constant 0 : index
    %c0_4 = arith.constant 0 : index
    %3 = vector.load %arg3[%c0_3, %c0_4] : memref<1x128xf32, #tpu.memory_space<vmem>>, vector<1x128xf32>
    %4 = vector.broadcast %3 : vector<1x128xf32> to vector<8x128xf32>
    %5 = arith.addf %2, %4 : vector<8x128xf32>
    %c0_5 = arith.constant 0 : index
    %c0_6 = arith.constant 0 : index
    %6 = vector.load %arg4[%c0_5, %c0_6] : memref<8x128xf32, #tpu.memory_space<vmem>>, vector<8x128xf32>
    tpu.vector_store %arg4[%c0_5, %c0_6], %5 {strides = array<i32>} : memref<8x128xf32, #tpu.memory_space<vmem>>, vector<8x128xf32>,
    return
  }
  func.func @transform_0(%arg0: i32) -> (i32, i32) {
    %c0_i32 = arith.constant 0 : i32
    %c0_i32_0 = arith.constant 0 : i32
    return %arg0, %c0_i32 : i32, i32
  }
  func.func @transform_1(%arg0: i32) -> (i32, i32) {
    %c0_i32 = arith.constant 0 : i32
    %c0_i32_0 = arith.constant 0 : i32
    %c0_i32_1 = arith.constant 0 : i32
    return %c0_i32, %c0_i32_0 : i32, i32
  }
  func.func @transform_2(%arg0: i32) -> (i32, i32) {
    %c0_i32 = arith.constant 0 : i32
    %c0_i32_0 = arith.constant 0 : i32
    %c0_i32_1 = arith.constant 0 : i32
    return %c0_i32, %c0_i32_0 : i32, i32
  }
  func.func @transform_3(%arg0: i32) -> (i32, i32) {
    %c0_i32 = arith.constant 0 : i32
    %c0_i32_0 = arith.constant 0 : i32
    return %arg0, %c0_i32 : i32, i32
  }
}

</mosaic_0001>

<llo_original>
// kernel: basic_model_forward.4
$region0: #{basic_model_forward.4}
  #allocation0 [shape = 'u32[]', space=smem, size = 0x4, offset = 0x4, fixed_abs, tag = 'smem constant byte address 0x4 - core index']
  #allocation1 [shape = 'u32[144,128]{1,0:T(1,128)}', space=vmem, size = 0x12000, scoped, tag = 'internal scratch']
  %s0 = inlined_call_operand.vmem [shape: bf16[392,128], index: 0, kind: input, shape index: {}]
  %s1 = inlined_call_operand.vmem [shape: bf16[128,128], index: 1, kind: input, shape index: {}]
  %s2 = inlined_call_operand.vmem [shape: f32[1,128], index: 2, kind: input, shape index: {}]
  %s3 = inlined_call_operand.vmem [shape: f32[392,128], index: 3, kind: output, shape index: {}]
  %s4 = sld [smem:[#allocation0]]
  $region22: #{basic_model_forward.4} parent=0
    _
  %s6 = ssub.s32 1, %s4
  %s7 = scalar_select 0, %s6, %s4
  // Predicated region
  $region2: #{basic_model_forward.4} parent=0 // pred_check
    _
  $region3: #{basic_model_forward.4} parent=0 // pred_check_branch
    %9 = sbr.rel (0) target = $region5
  $region4: #{basic_model_forward.4} parent=0 // pred_region
    _
  $region5: #{basic_model_forward.4} parent=0 // pred_fallthru
    _
  // Predicated region
  $region6: #{basic_model_forward.4} parent=0 // pred_check
    _
  $region7: #{basic_model_forward.4} parent=0 // pred_check_branch
    %11 = sbr.rel (0) target = $region9
  $region8: #{basic_model_forward.4} parent=0 // pred_region
    _
  $region9: #{basic_model_forward.4} parent=0 // pred_fallthru
    _
  // Predicated region
  $region10: #{basic_model_forward.4} parent=0 // pred_check
    _
  $region11: #{basic_model_forward.4} parent=0 // pred_check_branch
    %13 = sbr.rel (0) target = $region13
  $region12: #{basic_model_forward.4} parent=0 // pred_region
    _
  $region13: #{basic_model_forward.4} parent=0 // pred_fallthru
    _
  %v15 = vld [vmem:[%s0] sm:$0xf]
  %v16 = vld [vmem:[%s0 + $0x4] sm:$0xf]
  %v17 = vld [vmem:[%s0 + $0x8] sm:$0xf]
  %v18 = vld [vmem:[%s0 + $0xc] sm:$0xf]
  %v19 = vld [vmem:[%s0 + $0x10] sm:$0xf]
  %v20 = vld [vmem:[%s0 + $0x14] sm:$0xf]
  %v21 = vld [vmem:[%s0 + $0x18] sm:$0xf]
  %v22 = vld [vmem:[%s0 + $0x1c] sm:$0xf]
  %v23 = vld [vmem:[%s0 + $0x20] sm:$0xf]
  %v24 = vld [vmem:[%s0 + $0x24] sm:$0xf]
  %v25 = vld [vmem:[%s0 + $0x28] sm:$0xf]
  %v26 = vld [vmem:[%s0 + $0x2c] sm:$0xf]
  %v27 = vld [vmem:[%s0 + $0x30] sm:$0xf]
  %v28 = vld [vmem:[%s0 + $0x34] sm:$0xf]
  %v29 = vld [vmem:[%s0 + $0x38] sm:$0xf]
  %v30 = vld [vmem:[%s0 + $0x3c] sm:$0xf]
  %v31 = vld [vmem:[%s0 + $0x40] sm:$0xf]
  %v32 = vld [vmem:[%s0 + $0x44] sm:$0xf]
  %v33 = vld [vmem:[%s0 + $0x48] sm:$0xf]
  %v34 = vld [vmem:[%s0 + $0x4c] sm:$0xf]
  %v35 = vld [vmem:[%s0 + $0x50] sm:$0xf]
  %v36 = vld [vmem:[%s0 + $0x54] sm:$0xf]
  %v37 = vld [vmem:[%s0 + $0x58] sm:$0xf]
  %v38 = vld [vmem:[%s0 + $0x5c] sm:$0xf]
  %v39 = vld [vmem:[%s0 + $0x60] sm:$0xf]
  %v40 = vld [vmem:[%s0 + $0x64] sm:$0xf]
  %v41 = vld [vmem:[%s0 + $0x68] sm:$0xf]
  %v42 = vld [vmem:[%s0 + $0x6c] sm:$0xf]
  %v43 = vld [vmem:[%s0 + $0x70] sm:$0xf]
  %v44 = vld [vmem:[%s0 + $0x74] sm:$0xf]
  %v45 = vld [vmem:[%s0 + $0x78] sm:$0xf]
  %v46 = vld [vmem:[%s0 + $0x7c] sm:$0xf]
  %v47 = vld [vmem:[%s0 + $0x80] sm:$0xf]
  %v48 = vld [vmem:[%s0 + $0x84] sm:$0xf]
  %v49 = vld [vmem:[%s0 + $0x88] sm:$0xf]
  %v50 = vld [vmem:[%s0 + $0x8c] sm:$0xf]
  %v51 = vld [vmem:[%s0 + $0x90] sm:$0xf]
  %v52 = vld [vmem:[%s0 + $0x94] sm:$0xf]
  %v53 = vld [vmem:[%s0 + $0x98] sm:$0xf]
  %v54 = vld [vmem:[%s0 + $0x9c] sm:$0xf]
  %v55 = vld [vmem:[%s0 + $0xa0] sm:$0xf]
  %v56 = vld [vmem:[%s0 + $0xa4] sm:$0xf]
  %v57 = vld [vmem:[%s0 + $0xa8] sm:$0xf]
  %v58 = vld [vmem:[%s0 + $0xac] sm:$0xf]
  %v59 = vld [vmem:[%s0 + $0xb0] sm:$0xf]
  %v60 = vld [vmem:[%s0 + $0xb4] sm:$0xf]
  %v61 = vld [vmem:[%s0 + $0xb8] sm:$0xf]
  %v62 = vld [vmem:[%s0 + $0xbc] sm:$0xf]
  %v63 = vld [vmem:[%s0 + $0xc0] sm:$0xf]
  %v64 = vld [vmem:[%s1] sm:$0xf]
  %v65 = vld [vmem:[%s1 + $0x4] sm:$0xf]
  %v66 = vld [vmem:[%s1 + $0x8] sm:$0xf]
  %v67 = vld [vmem:[%s1 + $0xc] sm:$0xf]
  %v68 = vld [vmem:[%s1 + $0x10] sm:$0xf]
  %v69 = vld [vmem:[%s1 + $0x14] sm:$0xf]
  %v70 = vld [vmem:[%s1 + $0x18] sm:$0xf]
  %v71 = vld [vmem:[%s1 + $0x1c] sm:$0xf]
  %v72 = vld [vmem:[%s1 + $0x20] sm:$0xf]
  %v73 = vld [vmem:[%s1 + $0x24] sm:$0xf]
  %v74 = vld [vmem:[%s1 + $0x28] sm:$0xf]
  %v75 = vld [vmem:[%s1 + $0x2c] sm:$0xf]
  %v76 = vld [vmem:[%s1 + $0x30] sm:$0xf]
  %v77 = vld [vmem:[%s1 + $0x34] sm:$0xf]
  %v78 = vld [vmem:[%s1 + $0x38] sm:$0xf]
  %v79 = vld [vmem:[%s1 + $0x3c] sm:$0xf]
  %v80 = vld [vmem:[%s2] sm:$0x1]
  %v82 = vlaneseq
  %v83 = vshrl.u32 %v82, 7
  %v84 = vsub.s32 0, %v83
  %v85 = vrot.slane %v80, %v84
  %v136 = vunpack.c.l.b16 %v15
  %v137 = vunpack.c.l.b16 %v16
  %v138 = vunpack.c.l.b16 %v17
  %v139 = vunpack.c.l.b16 %v18
  %v140 = vunpack.c.l.b16 %v19
  %v141 = vunpack.c.l.b16 %v20
  %v142 = vunpack.c.l.b16 %v21
  %v143 = vunpack.c.l.b16 %v22
  %v144 = vunpack.c.l.b16 %v23
  %v145 = vunpack.c.l.b16 %v24
  %v146 = vunpack.c.l.b16 %v25
  %v147 = vunpack.c.l.b16 %v26
  %v148 = vunpack.c.l.b16 %v27
  %v149 = vunpack.c.l.b16 %v28
  %v150 = vunpack.c.l.b16 %v29
  %v151 = vunpack.c.l.b16 %v30
  %v152 = vunpack.c.l.b16 %v31
  %v153 = vunpack.c.l.b16 %v32
  %v154 = vunpack.c.l.b16 %v33
  %v155 = vunpack.c.l.b16 %v34
  %v156 = vunpack.c.l.b16 %v35
  %v157 = vunpack.c.l.b16 %v36
  %v158 = vunpack.c.l.b16 %v37
  %v159 = vunpack.c.l.b16 %v38
  %v160 = vunpack.c.l.b16 %v39
  %v161 = vunpack.c.l.b16 %v40
  %v162 = vunpack.c.l.b16 %v41
  %v163 = vunpack.c.l.b16 %v42
  %v164 = vunpack.c.l.b16 %v43
  %v165 = vunpack.c.l.b16 %v44
  %v166 = vunpack.c.l.b16 %v45
  %v167 = vunpack.c.l.b16 %v46
  %v168 = vunpack.c.l.b16 %v47
  %v169 = vunpack.c.l.b16 %v48
  %v170 = vunpack.c.l.b16 %v49
  %v171 = vunpack.c.l.b16 %v50
  %v172 = vunpack.c.l.b16 %v51
  %v173 = vunpack.c.l.b16 %v52
  %v174 = vunpack.c.l.b16 %v53
  %v175 = vunpack.c.l.b16 %v54
  %v176 = vunpack.c.l.b16 %v55
  %v177 = vunpack.c.l.b16 %v56
  %v178 = vunpack.c.l.b16 %v57
  %v179 = vunpack.c.l.b16 %v58
  %v180 = vunpack.c.l.b16 %v59
  %v181 = vunpack.c.l.b16 %v60
  %v182 = vunpack.c.l.b16 %v61
  %v183 = vunpack.c.l.b16 %v62
  %v184 = vunpack.c.l.b16 %v63
  %v185 = vpack.c.b16 %v137, %v136
  %v186 = vpack.c.b16 %v139, %v138
  %v187 = vpack.c.b16 %v141, %v140
  %v188 = vpack.c.b16 %v143, %v142
  %v189 = vpack.c.b16 %v145, %v144
  %v190 = vpack.c.b16 %v147, %v146
  %v191 = vpack.c.b16 %v149, %v148
  %v192 = vpack.c.b16 %v151, %v150
  %v193 = vpack.c.b16 %v153, %v152
  %v194 = vpack.c.b16 %v155, %v154
  %v195 = vpack.c.b16 %v157, %v156
  %v196 = vpack.c.b16 %v159, %v158
  %v197 = vpack.c.b16 %v161, %v160
  %v198 = vpack.c.b16 %v163, %v162
  %v199 = vpack.c.b16 %v165, %v164
  %v200 = vpack.c.b16 %v167, %v166
  %v201 = vpack.c.b16 %v169, %v168
  %v202 = vpack.c.b16 %v171, %v170
  %v203 = vpack.c.b16 %v173, %v172
  %v204 = vpack.c.b16 %v175, %v174
  %v205 = vpack.c.b16 %v177, %v176
  %v206 = vpack.c.b16 %v179, %v178
  %v207 = vpack.c.b16 %v181, %v180
  %v208 = vpack.c.b16 %v183, %v182
  %v209 = vpack.c.b16 %v184, %v184
  %v251 = vunpack.c.l.b16 %v64
  %v252 = vunpack.c.l.b16 %v65
  %v253 = vunpack.c.l.b16 %v66
  %v254 = vunpack.c.l.b16 %v67
  %v255 = vunpack.c.l.b16 %v68
  %v256 = vunpack.c.l.b16 %v69
  %v257 = vunpack.c.l.b16 %v70
  %v258 = vunpack.c.l.b16 %v71
  %v259 = vunpack.c.l.b16 %v72
  %v260 = vunpack.c.l.b16 %v73
  %v261 = vunpack.c.l.b16 %v74
  %v262 = vunpack.c.l.b16 %v75
  %v263 = vunpack.c.l.b16 %v76
  %v264 = vunpack.c.l.b16 %v77
  %v265 = vunpack.c.l.b16 %v78
  %v266 = vunpack.c.l.b16 %v79
  %v267 = vpack.c.b16 %v252, %v251
  %v268 = vpack.c.b16 %v254, %v253
  %v269 = vpack.c.b16 %v256, %v255
  %v270 = vpack.c.b16 %v258, %v257
  %v271 = vpack.c.b16 %v260, %v259
  %v272 = vpack.c.b16 %v262, %v261
  %v273 = vpack.c.b16 %v264, %v263
  %v274 = vpack.c.b16 %v266, %v265
  %283 = vmatprep.subr.bf16.mxu0 0
  %284 = vmatpush1.bf16.msra.mxu0 %v274
  %285 = vmatprep.subr.bf16.mxu0 0
  %286 = vmatpush1.bf16.msra.mxu0 %v273
  %287 = vmatprep.subr.bf16.mxu0 0
  %288 = vmatpush1.bf16.msra.mxu0 %v272
  %289 = vmatprep.subr.bf16.mxu0 0
  %290 = vmatpush1.bf16.msra.mxu0 %v271
  %291 = vmatprep.subr.bf16.mxu0 0
  %292 = vmatpush1.bf16.msra.mxu0 %v270
  %293 = vmatprep.subr.bf16.mxu0 0
  %294 = vmatpush1.bf16.msra.mxu0 %v269
  %295 = vmatprep.subr.bf16.mxu0 0
  %296 = vmatpush1.bf16.msra.mxu0 %v268
  %297 = vmatprep.subr.bf16.mxu0 0
  %298 = vmatpush1.bf16.msra.mxu0 %v267
  %299 = vmatprep.subr.bf16.mxu0 0
  %300 = vmatpush2.bf16.msra.mxu0 0
  %301 = vmatprep.subr.bf16.mxu0 0
  %302 = vmatpush2.bf16.msra.mxu0 0
  %303 = vmatprep.subr.bf16.mxu0 0
  %304 = vmatpush2.bf16.msra.mxu0 0
  %305 = vmatprep.subr.bf16.mxu0 0
  %306 = vmatpush2.bf16.msra.mxu0 0
  %307 = vmatprep.subr.bf16.mxu0 0
  %308 = vmatpush2.bf16.msra.mxu0 0
  %309 = vmatprep.subr.bf16.mxu0 0
  %310 = vmatpush2.bf16.msra.mxu0 0
  %311 = vmatprep.subr.bf16.mxu0 0
  %312 = vmatpush2.bf16.msra.mxu0 0
  %313 = vmatprep.subr.bf16.mxu0 0
  %314 = vmatpush2.bf16.msra.mxu0 0
  %315 = vmatprep.mubr.bf16.mxu0 0
  %316 = vmatmul.mubr.bf16.gmra.mxu0 %v185
  %v317 = vpop.f32.mrf.mxu0
  %v318 = vadd.f32 %v85, %v317
  %v319 = vpop.f32.mrf.mxu0
  %v320 = vpop.f32.mrf.mxu0
  %v321 = vadd.f32 %v85, %v320
  %v322 = vpop.f32.mrf.mxu0
  %323 = vmatprep.mubr.bf16.mxu0 0
  %324 = vmatmul.mubr.bf16.gmra.mxu0 %v186
  %v325 = vpop.f32.mrf.mxu0
  %v326 = vadd.f32 %v85, %v325
  %v327 = vpop.f32.mrf.mxu0
  %v328 = vpop.f32.mrf.mxu0
  %v329 = vadd.f32 %v85, %v328
  %v330 = vpop.f32.mrf.mxu0
  %331 = vmatprep.mubr.bf16.mxu0 0
  %332 = vmatmul.mubr.bf16.gmra.mxu0 %v187
  %v333 = vpop.f32.mrf.mxu0
  %v334 = vadd.f32 %v85, %v333
  %v335 = vpop.f32.mrf.mxu0
  %v336 = vpop.f32.mrf.mxu0
  %v337 = vadd.f32 %v85, %v336
  %v338 = vpop.f32.mrf.mxu0
  %339 = vmatprep.mubr.bf16.mxu0 0
  %340 = vmatmul.mubr.bf16.gmra.mxu0 %v188
  %v341 = vpop.f32.mrf.mxu0
  %v342 = vadd.f32 %v85, %v341
  %v343 = vpop.f32.mrf.mxu0
  %v344 = vpop.f32.mrf.mxu0
  %v345 = vadd.f32 %v85, %v344
  %v346 = vpop.f32.mrf.mxu0
  %347 = vmatprep.mubr.bf16.mxu0 0
  %348 = vmatmul.mubr.bf16.gmra.mxu0 %v189
  %v349 = vpop.f32.mrf.mxu0
  %v350 = vadd.f32 %v85, %v349
  %v351 = vpop.f32.mrf.mxu0
  %v352 = vpop.f32.mrf.mxu0
  %v353 = vadd.f32 %v85, %v352
  %v354 = vpop.f32.mrf.mxu0
  %355 = vmatprep.mubr.bf16.mxu0 0
  %356 = vmatmul.mubr.bf16.gmra.mxu0 %v190
  %v357 = vpop.f32.mrf.mxu0
  %v358 = vadd.f32 %v85, %v357
  %v359 = vpop.f32.mrf.mxu0
  %v360 = vpop.f32.mrf.mxu0
  %v361 = vadd.f32 %v85, %v360
  %v362 = vpop.f32.mrf.mxu0
  %363 = vmatprep.mubr.bf16.mxu0 0
  %364 = vmatmul.mubr.bf16.gmra.mxu0 %v191
  %v365 = vpop.f32.mrf.mxu0
  %v366 = vadd.f32 %v85, %v365
  %v367 = vpop.f32.mrf.mxu0
  %v368 = vpop.f32.mrf.mxu0
  %v369 = vadd.f32 %v85, %v368
  %v370 = vpop.f32.mrf.mxu0
  %371 = vmatprep.mubr.bf16.mxu0 0
  %372 = vmatmul.mubr.bf16.gmra.mxu0 %v192
  %v373 = vpop.f32.mrf.mxu0
  %v374 = vadd.f32 %v85, %v373
  %v375 = vpop.f32.mrf.mxu0
  %v376 = vpop.f32.mrf.mxu0
  %v377 = vadd.f32 %v85, %v376
  %v378 = vpop.f32.mrf.mxu0
  %379 = vmatprep.mubr.bf16.mxu0 0
  %380 = vmatmul.mubr.bf16.gmra.mxu0 %v193
  %v381 = vpop.f32.mrf.mxu0
  %v382 = vadd.f32 %v85, %v381
  %v383 = vpop.f32.mrf.mxu0
  %v384 = vpop.f32.mrf.mxu0
  %v385 = vadd.f32 %v85, %v384
  %v386 = vpop.f32.mrf.mxu0
  %387 = vmatprep.mubr.bf16.mxu0 0
  %388 = vmatmul.mubr.bf16.gmra.mxu0 %v194
  %v389 = vpop.f32.mrf.mxu0
  %v390 = vadd.f32 %v85, %v389
  %v391 = vpop.f32.mrf.mxu0
  %v392 = vpop.f32.mrf.mxu0
  %v393 = vadd.f32 %v85, %v392
  %v394 = vpop.f32.mrf.mxu0
  %395 = vmatprep.mubr.bf16.mxu0 0
  %396 = vmatmul.mubr.bf16.gmra.mxu0 %v195
  %v397 = vpop.f32.mrf.mxu0
  %v398 = vadd.f32 %v85, %v397
  %v399 = vpop.f32.mrf.mxu0
  %v400 = vpop.f32.mrf.mxu0
  %v401 = vadd.f32 %v85, %v400
  %v402 = vpop.f32.mrf.mxu0
  %403 = vmatprep.mubr.bf16.mxu0 0
  %404 = vmatmul.mubr.bf16.gmra.mxu0 %v196
  %v405 = vpop.f32.mrf.mxu0
  %v406 = vadd.f32 %v85, %v405
  %v407 = vpop.f32.mrf.mxu0
  %v408 = vpop.f32.mrf.mxu0
  %v409 = vadd.f32 %v85, %v408
  %v410 = vpop.f32.mrf.mxu0
  %411 = vmatprep.mubr.bf16.mxu0 0
  %412 = vmatmul.mubr.bf16.gmra.mxu0 %v197
  %v413 = vpop.f32.mrf.mxu0
  %v414 = vadd.f32 %v85, %v413
  %v415 = vpop.f32.mrf.mxu0
  %v416 = vpop.f32.mrf.mxu0
  %v417 = vadd.f32 %v85, %v416
  %v418 = vpop.f32.mrf.mxu0
  %419 = vmatprep.mubr.bf16.mxu0 0
  %420 = vmatmul.mubr.bf16.gmra.mxu0 %v198
  %v421 = vpop.f32.mrf.mxu0
  %v422 = vadd.f32 %v85, %v421
  %v423 = vpop.f32.mrf.mxu0
  %v424 = vpop.f32.mrf.mxu0
  %v425 = vadd.f32 %v85, %v424
  %v426 = vpop.f32.mrf.mxu0
  %427 = vmatprep.mubr.bf16.mxu0 0
  %428 = vmatmul.mubr.bf16.gmra.mxu0 %v199
  %v429 = vpop.f32.mrf.mxu0
  %v430 = vadd.f32 %v85, %v429
  %v431 = vpop.f32.mrf.mxu0
  %v432 = vpop.f32.mrf.mxu0
  %v433 = vadd.f32 %v85, %v432
  %v434 = vpop.f32.mrf.mxu0
  %435 = vmatprep.mubr.bf16.mxu0 0
  %436 = vmatmul.mubr.bf16.gmra.mxu0 %v200
  %v437 = vpop.f32.mrf.mxu0
  %v438 = vadd.f32 %v85, %v437
  %v439 = vpop.f32.mrf.mxu0
  %v440 = vpop.f32.mrf.mxu0
  %v441 = vadd.f32 %v85, %v440
  %v442 = vpop.f32.mrf.mxu0
  %443 = vmatprep.mubr.bf16.mxu0 0
  %444 = vmatmul.mubr.bf16.gmra.mxu0 %v201
  %v445 = vpop.f32.mrf.mxu0
  %v446 = vadd.f32 %v85, %v445
  %v447 = vpop.f32.mrf.mxu0
  %v448 = vpop.f32.mrf.mxu0
  %v449 = vadd.f32 %v85, %v448
  %v450 = vpop.f32.mrf.mxu0
  %451 = vmatprep.mubr.bf16.mxu0 0
  %452 = vmatmul.mubr.bf16.gmra.mxu0 %v202
  %v453 = vpop.f32.mrf.mxu0
  %v454 = vadd.f32 %v85, %v453
  %v455 = vpop.f32.mrf.mxu0
  %v456 = vpop.f32.mrf.mxu0
  %v457 = vadd.f32 %v85, %v456
  %v458 = vpop.f32.mrf.mxu0
  %459 = vmatprep.mubr.bf16.mxu0 0
  %460 = vmatmul.mubr.bf16.gmra.mxu0 %v203
  %v461 = vpop.f32.mrf.mxu0
  %v462 = vadd.f32 %v85, %v461
  %v463 = vpop.f32.mrf.mxu0
  %v464 = vpop.f32.mrf.mxu0
  %v465 = vadd.f32 %v85, %v464
  %v466 = vpop.f32.mrf.mxu0
  %467 = vmatprep.mubr.bf16.mxu0 0
  %468 = vmatmul.mubr.bf16.gmra.mxu0 %v204
  %v469 = vpop.f32.mrf.mxu0
  %v470 = vadd.f32 %v85, %v469
  %v471 = vpop.f32.mrf.mxu0
  %v472 = vpop.f32.mrf.mxu0
  %v473 = vadd.f32 %v85, %v472
  %v474 = vpop.f32.mrf.mxu0
  %475 = vmatprep.mubr.bf16.mxu0 0
  %476 = vmatmul.mubr.bf16.gmra.mxu0 %v205
  %v477 = vpop.f32.mrf.mxu0
  %v478 = vadd.f32 %v85, %v477
  %v479 = vpop.f32.mrf.mxu0
  %v480 = vpop.f32.mrf.mxu0
  %v481 = vadd.f32 %v85, %v480
  %v482 = vpop.f32.mrf.mxu0
  %483 = vmatprep.mubr.bf16.mxu0 0
  %484 = vmatmul.mubr.bf16.gmra.mxu0 %v206
  %v485 = vpop.f32.mrf.mxu0
  %v486 = vadd.f32 %v85, %v485
  %v487 = vpop.f32.mrf.mxu0
  %v488 = vpop.f32.mrf.mxu0
  %v489 = vadd.f32 %v85, %v488
  %v490 = vpop.f32.mrf.mxu0
  %491 = vmatprep.mubr.bf16.mxu0 0
  %492 = vmatmul.mubr.bf16.gmra.mxu0 %v207
  %v493 = vpop.f32.mrf.mxu0
  %v494 = vadd.f32 %v85, %v493
  %v495 = vpop.f32.mrf.mxu0
  %v496 = vpop.f32.mrf.mxu0
  %v497 = vadd.f32 %v85, %v496
  %v498 = vpop.f32.mrf.mxu0
  %499 = vmatprep.mubr.bf16.mxu0 0
  %500 = vmatmul.mubr.bf16.gmra.mxu0 %v208
  %v501 = vpop.f32.mrf.mxu0
  %v502 = vadd.f32 %v85, %v501
  %v503 = vpop.f32.mrf.mxu0
  %v504 = vpop.f32.mrf.mxu0
  %v505 = vadd.f32 %v85, %v504
  %v506 = vpop.f32.mrf.mxu0
  %507 = vmatprep.mubr.bf16.mxu0 0
  %508 = vmatmul.mubr.bf16.gmra.mxu0 %v209
  %v509 = vpop.f32.mrf.mxu0
  %v510 = vadd.f32 %v85, %v509
  %v511 = vpop.f32.mrf.mxu0
  %v512 = vpop.f32.mrf.mxu0
  %v513 = vpop.f32.mrf.mxu0
  %514 = vdwg.mxu0
  %v515 = vmax.f32 %v318, 0.0
  %v516 = vmax.f32 %v321, 0.0
  %v517 = vmax.f32 %v326, 0.0
  %v518 = vmax.f32 %v329, 0.0
  %v519 = vmax.f32 %v334, 0.0
  %v520 = vmax.f32 %v337, 0.0
  %v521 = vmax.f32 %v342, 0.0
  %v522 = vmax.f32 %v345, 0.0
  %v523 = vmax.f32 %v350, 0.0
  %v524 = vmax.f32 %v353, 0.0
  %v525 = vmax.f32 %v358, 0.0
  %v526 = vmax.f32 %v361, 0.0
  %v527 = vmax.f32 %v366, 0.0
  %v528 = vmax.f32 %v369, 0.0
  %v529 = vmax.f32 %v374, 0.0
  %v530 = vmax.f32 %v377, 0.0
  %v531 = vmax.f32 %v382, 0.0
  %v532 = vmax.f32 %v385, 0.0
  %v533 = vmax.f32 %v390, 0.0
  %v534 = vmax.f32 %v393, 0.0
  %v535 = vmax.f32 %v398, 0.0
  %v536 = vmax.f32 %v401, 0.0
  %v537 = vmax.f32 %v406, 0.0
  %v538 = vmax.f32 %v409, 0.0
  %v539 = vmax.f32 %v414, 0.0
  %v540 = vmax.f32 %v417, 0.0
  %v541 = vmax.f32 %v422, 0.0
  %v542 = vmax.f32 %v425, 0.0
  %v543 = vmax.f32 %v430, 0.0
  %v544 = vmax.f32 %v433, 0.0
  %v545 = vmax.f32 %v438, 0.0
  %v546 = vmax.f32 %v441, 0.0
  %v547 = vmax.f32 %v446, 0.0
  %v548 = vmax.f32 %v449, 0.0
  %v549 = vmax.f32 %v454, 0.0
  %v550 = vmax.f32 %v457, 0.0
  %v551 = vmax.f32 %v462, 0.0
  %v552 = vmax.f32 %v465, 0.0
  %v553 = vmax.f32 %v470, 0.0
  %v554 = vmax.f32 %v473, 0.0
  %v555 = vmax.f32 %v478, 0.0
  %v556 = vmax.f32 %v481, 0.0
  %v557 = vmax.f32 %v486, 0.0
  %v558 = vmax.f32 %v489, 0.0
  %v559 = vmax.f32 %v494, 0.0
  %v560 = vmax.f32 %v497, 0.0
  %v561 = vmax.f32 %v502, 0.0
  %v562 = vmax.f32 %v505, 0.0
  %v563 = vmax.f32 %v510, 0.0
  %564 = vst [vmem:[%s3] sm:$0xff] %v515
  %565 = vst [vmem:[%s3 + $0x8] sm:$0xff] %v516
  %566 = vst [vmem:[%s3 + $0x10] sm:$0xff] %v517
  %567 = vst [vmem:[%s3 + $0x18] sm:$0xff] %v518
  %568 = vst [vmem:[%s3 + $0x20] sm:$0xff] %v519
  %569 = vst [vmem:[%s3 + $0x28] sm:$0xff] %v520
  %570 = vst [vmem:[%s3 + $0x30] sm:$0xff] %v521
  %571 = vst [vmem:[%s3 + $0x38] sm:$0xff] %v522
  %572 = vst [vmem:[%s3 + $0x40] sm:$0xff] %v523
  %573 = vst [vmem:[%s3 + $0x48] sm:$0xff] %v524
  %574 = vst [vmem:[%s3 + $0x50] sm:$0xff] %v525
  %575 = vst [vmem:[%s3 + $0x58] sm:$0xff] %v526
  %576 = vst [vmem:[%s3 + $0x60] sm:$0xff] %v527
  %577 = vst [vmem:[%s3 + $0x68] sm:$0xff] %v528
  %578 = vst [vmem:[%s3 + $0x70] sm:$0xff] %v529
  %579 = vst [vmem:[%s3 + $0x78] sm:$0xff] %v530
  %580 = vst [vmem:[%s3 + $0x80] sm:$0xff] %v531
  %581 = vst [vmem:[%s3 + $0x88] sm:$0xff] %v532
  %582 = vst [vmem:[%s3 + $0x90] sm:$0xff] %v533
  %583 = vst [vmem:[%s3 + $0x98] sm:$0xff] %v534
  %584 = vst [vmem:[%s3 + $0xa0] sm:$0xff] %v535
  %585 = vst [vmem:[%s3 + $0xa8] sm:$0xff] %v536
  %586 = vst [vmem:[%s3 + $0xb0] sm:$0xff] %v537
  %587 = vst [vmem:[%s3 + $0xb8] sm:$0xff] %v538
  %588 = vst [vmem:[%s3 + $0xc0] sm:$0xff] %v539
  %589 = vst [vmem:[%s3 + $0xc8] sm:$0xff] %v540
  %590 = vst [vmem:[%s3 + $0xd0] sm:$0xff] %v541
  %591 = vst [vmem:[%s3 + $0xd8] sm:$0xff] %v542
  %592 = vst [vmem:[%s3 + $0xe0] sm:$0xff] %v543
  %593 = vst [vmem:[%s3 + $0xe8] sm:$0xff] %v544
  %594 = vst [vmem:[%s3 + $0xf0] sm:$0xff] %v545
  %595 = vst [vmem:[%s3 + $0xf8] sm:$0xff] %v546
  %596 = vst [vmem:[%s3 + $0x100] sm:$0xff] %v547
  %597 = vst [vmem:[%s3 + $0x108] sm:$0xff] %v548
  %598 = vst [vmem:[%s3 + $0x110] sm:$0xff] %v549
  %599 = vst [vmem:[%s3 + $0x118] sm:$0xff] %v550
  %600 = vst [vmem:[%s3 + $0x120] sm:$0xff] %v551
  %601 = vst [vmem:[%s3 + $0x128] sm:$0xff] %v552
  %602 = vst [vmem:[%s3 + $0x130] sm:$0xff] %v553
  %603 = vst [vmem:[%s3 + $0x138] sm:$0xff] %v554
  %604 = vst [vmem:[%s3 + $0x140] sm:$0xff] %v555
  %605 = vst [vmem:[%s3 + $0x148] sm:$0xff] %v556
  %606 = vst [vmem:[%s3 + $0x150] sm:$0xff] %v557
  %607 = vst [vmem:[%s3 + $0x158] sm:$0xff] %v558
  %608 = vst [vmem:[%s3 + $0x160] sm:$0xff] %v559
  %609 = vst [vmem:[%s3 + $0x168] sm:$0xff] %v560
  %610 = vst [vmem:[%s3 + $0x170] sm:$0xff] %v561
  %611 = vst [vmem:[%s3 + $0x178] sm:$0xff] %v562
  %612 = vst [vmem:[%s3 + $0x180] sm:$0xff] %v563
  // Predicated region
  $region14: #{basic_model_forward.4} parent=0 // pred_check
    _
  $region15: #{basic_model_forward.4} parent=0 // pred_check_branch
    %614 = sbr.rel (0) target = $region17
  $region16: #{basic_model_forward.4} parent=0 // pred_region
    _
  $region17: #{basic_model_forward.4} parent=0 // pred_fallthru
    _
  // Predicated region
  $region18: #{basic_model_forward.4} parent=0 // pred_check
    _
  $region19: #{basic_model_forward.4} parent=0 // pred_check_branch
    %616 = sbr.rel (0) target = $region21
  $region20: #{basic_model_forward.4} parent=0 // pred_region
    _
  $region21: #{basic_model_forward.4} parent=0 // pred_fallthru
    _

// kernel: basic_model_forward.5
$region0: #{basic_model_forward.5}
  #allocation0 [shape = 'u32[]', space=smem, size = 0x4, offset = 0x4, fixed_abs, tag = 'smem constant byte address 0x4 - core index']
  #allocation1 [shape = 'u32[144,128]{1,0:T(1,128)}', space=vmem, size = 0x12000, scoped, tag = 'internal scratch']
  %s0 = inlined_call_operand.vmem [shape: bf16[128,2304], index: 0, kind: input, shape index: {}]
  %s1 = inlined_call_operand.vmem [shape: bf16[2304,128], index: 1, kind: input, shape index: {}]
  %s2 = inlined_call_operand.vmem [shape: f32[1,128], index: 2, kind: input, shape index: {}]
  %s3 = inlined_call_operand.vmem [shape: f32[128,128], index: 3, kind: output, shape index: {}]
  %s4 = sld [smem:[#allocation0]]
  $region22: #{basic_model_forward.5} parent=0
    _
  %s6 = ssub.s32 1, %s4
  %s7 = scalar_select 0, %s6, %s4
  // Predicated region
  $region2: #{basic_model_forward.5} parent=0 // pred_check
    _
  $region3: #{basic_model_forward.5} parent=0 // pred_check_branch
    %9 = sbr.rel (0) target = $region5
  $region4: #{basic_model_forward.5} parent=0 // pred_region
    _
  $region5: #{basic_model_forward.5} parent=0 // pred_fallthru
    _
  // Predicated region
  $region6: #{basic_model_forward.5} parent=0 // pred_check
    _
  $region7: #{basic_model_forward.5} parent=0 // pred_check_branch
    %11 = sbr.rel (0) target = $region9
  $region8: #{basic_model_forward.5} parent=0 // pred_region
    _
  $region9: #{basic_model_forward.5} parent=0 // pred_fallthru
    _
  // Predicated region
  $region10: #{basic_model_forward.5} parent=0 // pred_check
    _
  $region11: #{basic_model_forward.5} parent=0 // pred_check_branch
    %13 = sbr.rel (0) target = $region13
  $region12: #{basic_model_forward.5} parent=0 // pred_region
    _
  $region13: #{basic_model_forward.5} parent=0 // pred_fallthru
    _
  %v15 = vld [vmem:[%s0] sm:$0xff]
  %v16 = vld [vmem:[%s0 + $0x8] sm:$0xff]
  %v17 = vld [vmem:[%s0 + $0x10] sm:$0xff]
  %v18 = vld [vmem:[%s0 + $0x18] sm:$0xff]
  %v19 = vld [vmem:[%s0 + $0x20] sm:$0xff]
  %v20 = vld [vmem:[%s0 + $0x28] sm:$0xff]
  %v21 = vld [vmem:[%s0 + $0x30] sm:$0xff]
  %v22 = vld [vmem:[%s0 + $0x38] sm:$0xff]
  %v23 = vld [vmem:[%s0 + $0x40] sm:$0xff]
  %v24 = vld [vmem:[%s0 + $0x48] sm:$0xff]
  %v25 = vld [vmem:[%s0 + $0x50] sm:$0xff]
  %v26 = vld [vmem:[%s0 + $0x58] sm:$0xff]
  %v27 = vld [vmem:[%s0 + $0x60] sm:$0xff]
  %v28 = vld [vmem:[%s0 + $0x68] sm:$0xff]
  %v29 = vld [vmem:[%s0 + $0x70] sm:$0xff]
  %v30 = vld [vmem:[%s0 + $0x78] sm:$0xff]
  %v31 = vld [vmem:[%s0 + $0x80] sm:$0xff]
  %v32 = vld [vmem:[%s0 + $0x88] sm:$0xff]
  %v33 = vld [vmem:[%s0 + $0x90] sm:$0xff]
  %v34 = vld [vmem:[%s0 + $0x98] sm:$0xff]
  %v35 = vld [vmem:[%s0 + $0xa0] sm:$0xff]
  %v36 = vld [vmem:[%s0 + $0xa8] sm:$0xff]
  %v37 = vld [vmem:[%s0 + $0xb0] sm:$0xff]
  %v38 = vld [vmem:[%s0 + $0xb8] sm:$0xff]
  %v39 = vld [vmem:[%s0 + $0xc0] sm:$0xff]
  %v40 = vld [vmem:[%s0 + $0xc8] sm:$0xff]
  %v41 = vld [vmem:[%s0 + $0xd0] sm:$0xff]
  %v42 = vld [vmem:[%s0 + $0xd8] sm:$0xff]
  %v43 = vld [vmem:[%s0 + $0xe0] sm:$0xff]
  %v44 = vld [vmem:[%s0 + $0xe8] sm:$0xff]
  %v45 = vld [vmem:[%s0 + $0xf0] sm:$0xff]
  %v46 = vld [vmem:[%s0 + $0xf8] sm:$0xff]
  %v47 = vld [vmem:[%s0 + $0x100] sm:$0xff]
  %v48 = vld [vmem:[%s0 + $0x108] sm:$0xff]
  %v49 = vld [vmem:[%s0 + $0x110] sm:$0xff]
  %v50 = vld [vmem:[%s0 + $0x118] sm:$0xff]
  %v51 = vld [vmem:[%s0 + $0x120] sm:$0xff]
  %v52 = vld [vmem:[%s0 + $0x128] sm:$0xff]
  %v53 = vld [vmem:[%s0 + $0x130] sm:$0xff]
  %v54 = vld [vmem:[%s0 + $0x138] sm:$0xff]
  %v55 = vld [vmem:[%s0 + $0x140] sm:$0xff]
  %v56 = vld [vmem:[%s0 + $0x148] sm:$0xff]
  %v57 = vld [vmem:[%s0 + $0x150] sm:$0xff]
  %v58 = vld [vmem:[%s0 + $0x158] sm:$0xff]
  %v59 = vld [vmem:[%s0 + $0x160] sm:$0xff]
  %v60 = vld [vmem:[%s0 + $0x168] sm:$0xff]
  %v61 = vld [vmem:[%s0 + $0x170] sm:$0xff]
  %v62 = vld [vmem:[%s0 + $0x178] sm:$0xff]
  %v63 = vld [vmem:[%s0 + $0x180] sm:$0xff]
  %v64 = vld [vmem:[%s0 + $0x188] sm:$0xff]
  %v65 = vld [vmem:[%s0 + $0x190] sm:$0xff]
  %v66 = vld [vmem:[%s0 + $0x198] sm:$0xff]
  %v67 = vld [vmem:[%s0 + $0x1a0] sm:$0xff]
  %v68 = vld [vmem:[%s0 + $0x1a8] sm:$0xff]
  %v69 = vld [vmem:[%s0 + $0x1b0] sm:$0xff]
  %v70 = vld [vmem:[%s0 + $0x1b8] sm:$0xff]
  %v71 = vld [vmem:[%s0 + $0x1c0] sm:$0xff]
  %v72 = vld [vmem:[%s0 + $0x1c8] sm:$0xff]
  %v73 = vld [vmem:[%s0 + $0x1d0] sm:$0xff]
  %v74 = vld [vmem:[%s0 + $0x1d8] sm:$0xff]
  %v75 = vld [vmem:[%s0 + $0x1e0] sm:$0xff]
  %v76 = vld [vmem:[%s0 + $0x1e8] sm:$0xff]
  %v77 = vld [vmem:[%s0 + $0x1f0] sm:$0xff]
  %v78 = vld [vmem:[%s0 + $0x1f8] sm:$0xff]
  %v79 = vld [vmem:[%s0 + $0x200] sm:$0xff]
  %v80 = vld [vmem:[%s0 + $0x208] sm:$0xff]
  %v81 = vld [vmem:[%s0 + $0x210] sm:$0xff]
  %v82 = vld [vmem:[%s0 + $0x218] sm:$0xff]
  %v83 = vld [vmem:[%s0 + $0x220] sm:$0xff]
  %v84 = vld [vmem:[%s0 + $0x228] sm:$0xff]
  %v85 = vld [vmem:[%s0 + $0x230] sm:$0xff]
  %v86 = vld [vmem:[%s0 + $0x238] sm:$0xff]
  %v87 = vld [vmem:[%s0 + $0x240] sm:$0xff]
  %v88 = vld [vmem:[%s0 + $0x248] sm:$0xff]
  %v89 = vld [vmem:[%s0 + $0x250] sm:$0xff]
  %v90 = vld [vmem:[%s0 + $0x258] sm:$0xff]
  %v91 = vld [vmem:[%s0 + $0x260] sm:$0xff]
  %v92 = vld [vmem:[%s0 + $0x268] sm:$0xff]
  %v93 = vld [vmem:[%s0 + $0x270] sm:$0xff]
  %v94 = vld [vmem:[%s0 + $0x278] sm:$0xff]
  %v95 = vld [vmem:[%s0 + $0x280] sm:$0xff]
  %v96 = vld [vmem:[%s0 + $0x288] sm:$0xff]
  %v97 = vld [vmem:[%s0 + $0x290] sm:$0xff]
  %v98 = vld [vmem:[%s0 + $0x298] sm:$0xff]
  %v99 = vld [vmem:[%s0 + $0x2a0] sm:$0xff]
  %v100 = vld [vmem:[%s0 + $0x2a8] sm:$0xff]
  %v101 = vld [vmem:[%s0 + $0x2b0] sm:$0xff]
  %v102 = vld [vmem:[%s0 + $0x2b8] sm:$0xff]
  %v103 = vld [vmem:[%s0 + $0x2c0] sm:$0xff]
  %v104 = vld [vmem:[%s0 + $0x2c8] sm:$0xff]
  %v105 = vld [vmem:[%s0 + $0x2d0] sm:$0xff]
  %v106 = vld [vmem:[%s0 + $0x2d8] sm:$0xff]
  %v107 = vld [vmem:[%s0 + $0x2e0] sm:$0xff]
  %v108 = vld [vmem:[%s0 + $0x2e8] sm:$0xff]
  %v109 = vld [vmem:[%s0 + $0x2f0] sm:$0xff]
  %v110 = vld [vmem:[%s0 + $0x2f8] sm:$0xff]
  %v111 = vld [vmem:[%s0 + $0x300] sm:$0xff]
  %v112 = vld [vmem:[%s0 + $0x308] sm:$0xff]
  %v113 = vld [vmem:[%s0 + $0x310] sm:$0xff]
  %v114 = vld [vmem:[%s0 + $0x318] sm:$0xff]
  %v115 = vld [vmem:[%s0 + $0x320] sm:$0xff]
  %v116 = vld [vmem:[%s0 + $0x328] sm:$0xff]
  %v117 = vld [vmem:[%s0 + $0x330] sm:$0xff]
  %v118 = vld [vmem:[%s0 + $0x338] sm:$0xff]
  %v119 = vld [vmem:[%s0 + $0x340] sm:$0xff]
  %v120 = vld [vmem:[%s0 + $0x348] sm:$0xff]
  %v121 = vld [vmem:[%s0 + $0x350] sm:$0xff]
  %v122 = vld [vmem:[%s0 + $0x358] sm:$0xff]
  %v123 = vld [vmem:[%s0 + $0x360] sm:$0xff]
  %v124 = vld [vmem:[%s0 + $0x368] sm:$0xff]
  %v125 = vld [vmem:[%s0 + $0x370] sm:$0xff]
  %v126 = vld [vmem:[%s0 + $0x378] sm:$0xff]
  %v127 = vld [vmem:[%s0 + $0x380] sm:$0xff]
  %v128 = vld [vmem:[%s0 + $0x388] sm:$0xff]
  %v129 = vld [vmem:[%s0 + $0x390] sm:$0xff]
  %v130 = vld [vmem:[%s0 + $0x398] sm:$0xff]
  %v131 = vld [vmem:[%s0 + $0x3a0] sm:$0xff]
  %v132 = vld [vmem:[%s0 + $0x3a8] sm:$0xff]
  %v133 = vld [vmem:[%s0 + $0x3b0] sm:$0xff]
  %v134 = vld [vmem:[%s0 + $0x3b8] sm:$0xff]
  %v135 = vld [vmem:[%s0 + $0x3c0] sm:$0xff]
  %v136 = vld [vmem:[%s0 + $0x3c8] sm:$0xff]
  %v137 = vld [vmem:[%s0 + $0x3d0] sm:$0xff]
  %v138 = vld [vmem:[%s0 + $0x3d8] sm:$0xff]
  %v139 = vld [vmem:[%s0 + $0x3e0] sm:$0xff]
  %v140 = vld [vmem:[%s0 + $0x3e8] sm:$0xff]
  %v141 = vld [vmem:[%s0 + $0x3f0] sm:$0xff]
  %v142 = vld [vmem:[%s0 + $0x3f8] sm:$0xff]
  %v143 = vld [vmem:[%s0 + $0x400] sm:$0xff]
  %v144 = vld [vmem:[%s0 + $0x408] sm:$0xff]
  %v145 = vld [vmem:[%s0 + $0x410] sm:$0xff]
  %v146 = vld [vmem:[%s0 + $0x418] sm:$0xff]
  %v147 = vld [vmem:[%s0 + $0x420] sm:$0xff]
  %v148 = vld [vmem:[%s0 + $0x428] sm:$0xff]
  %v149 = vld [vmem:[%s0 + $0x430] sm:$0xff]
  %v150 = vld [vmem:[%s0 + $0x438] sm:$0xff]
  %v151 = vld [vmem:[%s0 + $0x440] sm:$0xff]
  %v152 = vld [vmem:[%s0 + $0x448] sm:$0xff]
  %v153 = vld [vmem:[%s0 + $0x450] sm:$0xff]
  %v154 = vld [vmem:[%s0 + $0x458] sm:$0xff]
  %v155 = vld [vmem:[%s0 + $0x460] sm:$0xff]
  %v156 = vld [vmem:[%s0 + $0x468] sm:$0xff]
  %v157 = vld [vmem:[%s0 + $0x470] sm:$0xff]
  %v158 = vld [vmem:[%s0 + $0x478] sm:$0xff]
  %v159 = vld [vmem:[%s1] sm:$0xf]
  %v160 = vld [vmem:[%s1 + $0x4] sm:$0xf]
  %v161 = vld [vmem:[%s1 + $0x8] sm:$0xf]
  %v162 = vld [vmem:[%s1 + $0xc] sm:$0xf]
  %v163 = vld [vmem:[%s1 + $0x10] sm:$0xf]
  %v164 = vld [vmem:[%s1 + $0x14] sm:$0xf]
  %v165 = vld [vmem:[%s1 + $0x18] sm:$0xf]
  %v166 = vld [vmem:[%s1 + $0x1c] sm:$0xf]
  %v167 = vld [vmem:[%s1 + $0x20] sm:$0xf]
  %v168 = vld [vmem:[%s1 + $0x24] sm:$0xf]
  %v169 = vld [vmem:[%s1 + $0x28] sm:$0xf]
  %v170 = vld [vmem:[%s1 + $0x2c] sm:$0xf]
  %v171 = vld [vmem:[%s1 + $0x30] sm:$0xf]
  %v172 = vld [vmem:[%s1 + $0x34] sm:$0xf]
  %v173 = vld [vmem:[%s1 + $0x38] sm:$0xf]
  %v174 = vld [vmem:[%s1 + $0x3c] sm:$0xf]
  %v175 = vld [vmem:[%s1 + $0x40] sm:$0xf]
  %v176 = vld [vmem:[%s1 + $0x44] sm:$0xf]
  %v177 = vld [vmem:[%s1 + $0x48] sm:$0xf]
  %v178 = vld [vmem:[%s1 + $0x4c] sm:$0xf]
  %v179 = vld [vmem:[%s1 + $0x50] sm:$0xf]
  %v180 = vld [vmem:[%s1 + $0x54] sm:$0xf]
  %v181 = vld [vmem:[%s1 + $0x58] sm:$0xf]
  %v182 = vld [vmem:[%s1 + $0x5c] sm:$0xf]
  %v183 = vld [vmem:[%s1 + $0x60] sm:$0xf]
  %v184 = vld [vmem:[%s1 + $0x64] sm:$0xf]
  %v185 = vld [vmem:[%s1 + $0x68] sm:$0xf]
  %v186 = vld [vmem:[%s1 + $0x6c] sm:$0xf]
  %v187 = vld [vmem:[%s1 + $0x70] sm:$0xf]
  %v188 = vld [vmem:[%s1 + $0x74] sm:$0xf]
  %v189 = vld [vmem:[%s1 + $0x78] sm:$0xf]
  %v190 = vld [vmem:[%s1 + $0x7c] sm:$0xf]
  %v191 = vld [vmem:[%s1 + $0x80] sm:$0xf]
  %v192 = vld [vmem:[%s1 + $0x84] sm:$0xf]
  %v193 = vld [vmem:[%s1 + $0x88] sm:$0xf]
  %v194 = vld [vmem:[%s1 + $0x8c] sm:$0xf]
  %v195 = vld [vmem:[%s1 + $0x90] sm:$0xf]
  %v196 = vld [vmem:[%s1 + $0x94] sm:$0xf]
  %v197 = vld [vmem:[%s1 + $0x98] sm:$0xf]
  %v198 = vld [vmem:[%s1 + $0x9c] sm:$0xf]
  %v199 = vld [vmem:[%s1 + $0xa0] sm:$0xf]
  %v200 = vld [vmem:[%s1 + $0xa4] sm:$0xf]
  %v201 = vld [vmem:[%s1 + $0xa8] sm:$0xf]
  %v202 = vld [vmem:[%s1 + $0xac] sm:$0xf]
  %v203 = vld [vmem:[%s1 + $0xb0] sm:$0xf]
  %v204 = vld [vmem:[%s1 + $0xb4] sm:$0xf]
  %v205 = vld [vmem:[%s1 + $0xb8] sm:$0xf]
  %v206 = vld [vmem:[%s1 + $0xbc] sm:$0xf]
  %v207 = vld [vmem:[%s1 + $0xc0] sm:$0xf]
  %v208 = vld [vmem:[%s1 + $0xc4] sm:$0xf]
  %v209 = vld [vmem:[%s1 + $0xc8] sm:$0xf]
  %v210 = vld [vmem:[%s1 + $0xcc] sm:$0xf]
  %v211 = vld [vmem:[%s1 + $0xd0] sm:$0xf]
  %v212 = vld [vmem:[%s1 + $0xd4] sm:$0xf]
  %v213 = vld [vmem:[%s1 + $0xd8] sm:$0xf]
  %v214 = vld [vmem:[%s1 + $0xdc] sm:$0xf]
  %v215 = vld [vmem:[%s1 + $0xe0] sm:$0xf]
  %v216 = vld [vmem:[%s1 + $0xe4] sm:$0xf]
  %v217 = vld [vmem:[%s1 + $0xe8] sm:$0xf]
  %v218 = vld [vmem:[%s1 + $0xec] sm:$0xf]
  %v219 = vld [vmem:[%s1 + $0xf0] sm:$0xf]
  %v220 = vld [vmem:[%s1 + $0xf4] sm:$0xf]
  %v221 = vld [vmem:[%s1 + $0xf8] sm:$0xf]
  %v222 = vld [vmem:[%s1 + $0xfc] sm:$0xf]
  %v223 = vld [vmem:[%s1 + $0x100] sm:$0xf]
  %v224 = vld [vmem:[%s1 + $0x104] sm:$0xf]
  %v225 = vld [vmem:[%s1 + $0x108] sm:$0xf]
  %v226 = vld [vmem:[%s1 + $0x10c] sm:$0xf]
  %v227 = vld [vmem:[%s1 + $0x110] sm:$0xf]
  %v228 = vld [vmem:[%s1 + $0x114] sm:$0xf]
  %v229 = vld [vmem:[%s1 + $0x118] sm:$0xf]
  %v230 = vld [vmem:[%s1 + $0x11c] sm:$0xf]
  %v231 = vld [vmem:[%s1 + $0x120] sm:$0xf]
  %v232 = vld [vmem:[%s1 + $0x124] sm:$0xf]
  %v233 = vld [vmem:[%s1 + $0x128] sm:$0xf]
  %v234 = vld [vmem:[%s1 + $0x12c] sm:$0xf]
  %v235 = vld [vmem:[%s1 + $0x130] sm:$0xf]
  %v236 = vld [vmem:[%s1 + $0x134] sm:$0xf]
  %v237 = vld [vmem:[%s1 + $0x138] sm:$0xf]
  %v238 = vld [vmem:[%s1 + $0x13c] sm:$0xf]
  %v239 = vld [vmem:[%s1 + $0x140] sm:$0xf]
  %v240 = vld [vmem:[%s1 + $0x144] sm:$0xf]
  %v241 = vld [vmem:[%s1 + $0x148] sm:$0xf]
  %v242 = vld [vmem:[%s1 + $0x14c] sm:$0xf]
  %v243 = vld [vmem:[%s1 + $0x150] sm:$0xf]
  %v244 = vld [vmem:[%s1 + $0x154] sm:$0xf]
  %v245 = vld [vmem:[%s1 + $0x158] sm:$0xf]
  %v246 = vld [vmem:[%s1 + $0x15c] sm:$0xf]
  %v247 = vld [vmem:[%s1 + $0x160] sm:$0xf]
  %v248 = vld [vmem:[%s1 + $0x164] sm:$0xf]
  %v249 = vld [vmem:[%s1 + $0x168] sm:$0xf]
  %v250 = vld [vmem:[%s1 + $0x16c] sm:$0xf]
  %v251 = vld [vmem:[%s1 + $0x170] sm:$0xf]
  %v252 = vld [vmem:[%s1 + $0x174] sm:$0xf]
  %v253 = vld [vmem:[%s1 + $0x178] sm:$0xf]
  %v254 = vld [vmem:[%s1 + $0x17c] sm:$0xf]
  %v255 = vld [vmem:[%s1 + $0x180] sm:$0xf]
  %v256 = vld [vmem:[%s1 + $0x184] sm:$0xf]
  %v257 = vld [vmem:[%s1 + $0x188] sm:$0xf]
  %v258 = vld [vmem:[%s1 + $0x18c] sm:$0xf]
  %v259 = vld [vmem:[%s1 + $0x190] sm:$0xf]
  %v260 = vld [vmem:[%s1 + $0x194] sm:$0xf]
  %v261 = vld [vmem:[%s1 + $0x198] sm:$0xf]
  %v262 = vld [vmem:[%s1 + $0x19c] sm:$0xf]
  %v263 = vld [vmem:[%s1 + $0x1a0] sm:$0xf]
  %v264 = vld [vmem:[%s1 + $0x1a4] sm:$0xf]
  %v265 = vld [vmem:[%s1 + $0x1a8] sm:$0xf]
  %v266 = vld [vmem:[%s1 + $0x1ac] sm:$0xf]
  %v267 = vld [vmem:[%s1 + $0x1b0] sm:$0xf]
  %v268 = vld [vmem:[%s1 + $0x1b4] sm:$0xf]
  %v269 = vld [vmem:[%s1 + $0x1b8] sm:$0xf]
  %v270 = vld [vmem:[%s1 + $0x1bc] sm:$0xf]
  %v271 = vld [vmem:[%s1 + $0x1c0] sm:$0xf]
  %v272 = vld [vmem:[%s1 + $0x1c4] sm:$0xf]
  %v273 = vld [vmem:[%s1 + $0x1c8] sm:$0xf]
  %v274 = vld [vmem:[%s1 + $0x1cc] sm:$0xf]
  %v275 = vld [vmem:[%s1 + $0x1d0] sm:$0xf]
  %v276 = vld [vmem:[%s1 + $0x1d4] sm:$0xf]
  %v277 = vld [vmem:[%s1 + $0x1d8] sm:$0xf]
  %v278 = vld [vmem:[%s1 + $0x1dc] sm:$0xf]
  %v279 = vld [vmem:[%s1 + $0x1e0] sm:$0xf]
  %v280 = vld [vmem:[%s1 + $0x1e4] sm:$0xf]
  %v281 = vld [vmem:[%s1 + $0x1e8] sm:$0xf]
  %v282 = vld [vmem:[%s1 + $0x1ec] sm:$0xf]
  %v283 = vld [vmem:[%s1 + $0x1f0] sm:$0xf]
  %v284 = vld [vmem:[%s1 + $0x1f4] sm:$0xf]
  %v285 = vld [vmem:[%s1 + $0x1f8] sm:$0xf]
  %v286 = vld [vmem:[%s1 + $0x1fc] sm:$0xf]
  %v287 = vld [vmem:[%s1 + $0x200] sm:$0xf]
  %v288 = vld [vmem:[%s1 + $0x204] sm:$0xf]
  %v289 = vld [vmem:[%s1 + $0x208] sm:$0xf]
  %v290 = vld [vmem:[%s1 + $0x20c] sm:$0xf]
  %v291 = vld [vmem:[%s1 + $0x210] sm:$0xf]
  %v292 = vld [vmem:[%s1 + $0x214] sm:$0xf]
  %v293 = vld [vmem:[%s1 + $0x218] sm:$0xf]
  %v294 = vld [vmem:[%s1 + $0x21c] sm:$0xf]
  %v295 = vld [vmem:[%s1 + $0x220] sm:$0xf]
  %v296 = vld [vmem:[%s1 + $0x224] sm:$0xf]
  %v297 = vld [vmem:[%s1 + $0x228] sm:$0xf]
  %v298 = vld [vmem:[%s1 + $0x22c] sm:$0xf]
  %v299 = vld [vmem:[%s1 + $0x230] sm:$0xf]
  %v300 = vld [vmem:[%s1 + $0x234] sm:$0xf]
  %v301 = vld [vmem:[%s1 + $0x238] sm:$0xf]
  %v302 = vld [vmem:[%s1 + $0x23c] sm:$0xf]
  %v303 = vld [vmem:[%s1 + $0x240] sm:$0xf]
  %v304 = vld [vmem:[%s1 + $0x244] sm:$0xf]
  %v305 = vld [vmem:[%s1 + $0x248] sm:$0xf]
  %v306 = vld [vmem:[%s1 + $0x24c] sm:$0xf]
  %v307 = vld [vmem:[%s1 + $0x250] sm:$0xf]
  %v308 = vld [vmem:[%s1 + $0x254] sm:$0xf]
  %v309 = vld [vmem:[%s1 + $0x258] sm:$0xf]
  %v310 = vld [vmem:[%s1 + $0x25c] sm:$0xf]
  %v311 = vld [vmem:[%s1 + $0x260] sm:$0xf]
  %v312 = vld [vmem:[%s1 + $0x264] sm:$0xf]
  %v313 = vld [vmem:[%s1 + $0x268] sm:$0xf]
  %v314 = vld [vmem:[%s1 + $0x26c] sm:$0xf]
  %v315 = vld [vmem:[%s1 + $0x270] sm:$0xf]
  %v316 = vld [vmem:[%s1 + $0x274] sm:$0xf]
  %v317 = vld [vmem:[%s1 + $0x278] sm:$0xf]
  %v318 = vld [vmem:[%s1 + $0x27c] sm:$0xf]
  %v319 = vld [vmem:[%s1 + $0x280] sm:$0xf]
  %v320 = vld [vmem:[%s1 + $0x284] sm:$0xf]
  %v321 = vld [vmem:[%s1 + $0x288] sm:$0xf]
  %v322 = vld [vmem:[%s1 + $0x28c] sm:$0xf]
  %v323 = vld [vmem:[%s1 + $0x290] sm:$0xf]
  %v324 = vld [vmem:[%s1 + $0x294] sm:$0xf]
  %v325 = vld [vmem:[%s1 + $0x298] sm:$0xf]
  %v326 = vld [vmem:[%s1 + $0x29c] sm:$0xf]
  %v327 = vld [vmem:[%s1 + $0x2a0] sm:$0xf]
  %v328 = vld [vmem:[%s1 + $0x2a4] sm:$0xf]
  %v329 = vld [vmem:[%s1 + $0x2a8] sm:$0xf]
  %v330 = vld [vmem:[%s1 + $0x2ac] sm:$0xf]
  %v331 = vld [vmem:[%s1 + $0x2b0] sm:$0xf]
  %v332 = vld [vmem:[%s1 + $0x2b4] sm:$0xf]
  %v333 = vld [vmem:[%s1 + $0x2b8] sm:$0xf]
  %v334 = vld [vmem:[%s1 + $0x2bc] sm:$0xf]
  %v335 = vld [vmem:[%s1 + $0x2c0] sm:$0xf]
  %v336 = vld [vmem:[%s1 + $0x2c4] sm:$0xf]
  %v337 = vld [vmem:[%s1 + $0x2c8] sm:$0xf]
  %v338 = vld [vmem:[%s1 + $0x2cc] sm:$0xf]
  %v339 = vld [vmem:[%s1 + $0x2d0] sm:$0xf]
  %v340 = vld [vmem:[%s1 + $0x2d4] sm:$0xf]
  %v341 = vld [vmem:[%s1 + $0x2d8] sm:$0xf]
  %v342 = vld [vmem:[%s1 + $0x2dc] sm:$0xf]
  %v343 = vld [vmem:[%s1 + $0x2e0] sm:$0xf]
  %v344 = vld [vmem:[%s1 + $0x2e4] sm:$0xf]
  %v345 = vld [vmem:[%s1 + $0x2e8] sm:$0xf]
  %v346 = vld [vmem:[%s1 + $0x2ec] sm:$0xf]
  %v347 = vld [vmem:[%s1 + $0x2f0] sm:$0xf]
  %v348 = vld [vmem:[%s1 + $0x2f4] sm:$0xf]
  %v349 = vld [vmem:[%s1 + $0x2f8] sm:$0xf]
  %v350 = vld [vmem:[%s1 + $0x2fc] sm:$0xf]
  %v351 = vld [vmem:[%s1 + $0x300] sm:$0xf]
  %v352 = vld [vmem:[%s1 + $0x304] sm:$0xf]
  %v353 = vld [vmem:[%s1 + $0x308] sm:$0xf]
  %v354 = vld [vmem:[%s1 + $0x30c] sm:$0xf]
  %v355 = vld [vmem:[%s1 + $0x310] sm:$0xf]
  %v356 = vld [vmem:[%s1 + $0x314] sm:$0xf]
  %v357 = vld [vmem:[%s1 + $0x318] sm:$0xf]
  %v358 = vld [vmem:[%s1 + $0x31c] sm:$0xf]
  %v359 = vld [vmem:[%s1 + $0x320] sm:$0xf]
  %v360 = vld [vmem:[%s1 + $0x324] sm:$0xf]
  %v361 = vld [vmem:[%s1 + $0x328] sm:$0xf]
  %v362 = vld [vmem:[%s1 + $0x32c] sm:$0xf]
  %v363 = vld [vmem:[%s1 + $0x330] sm:$0xf]
  %v364 = vld [vmem:[%s1 + $0x334] sm:$0xf]
  %v365 = vld [vmem:[%s1 + $0x338] sm:$0xf]
  %v366 = vld [vmem:[%s1 + $0x33c] sm:$0xf]
  %v367 = vld [vmem:[%s1 + $0x340] sm:$0xf]
  %v368 = vld [vmem:[%s1 + $0x344] sm:$0xf]
  %v369 = vld [vmem:[%s1 + $0x348] sm:$0xf]
  %v370 = vld [vmem:[%s1 + $0x34c] sm:$0xf]
  %v371 = vld [vmem:[%s1 + $0x350] sm:$0xf]
  %v372 = vld [vmem:[%s1 + $0x354] sm:$0xf]
  %v373 = vld [vmem:[%s1 + $0x358] sm:$0xf]
  %v374 = vld [vmem:[%s1 + $0x35c] sm:$0xf]
  %v375 = vld [vmem:[%s1 + $0x360] sm:$0xf]
  %v376 = vld [vmem:[%s1 + $0x364] sm:$0xf]
  %v377 = vld [vmem:[%s1 + $0x368] sm:$0xf]
  %v378 = vld [vmem:[%s1 + $0x36c] sm:$0xf]
  %v379 = vld [vmem:[%s1 + $0x370] sm:$0xf]
  %v380 = vld [vmem:[%s1 + $0x374] sm:$0xf]
  %v381 = vld [vmem:[%s1 + $0x378] sm:$0xf]
  %v382 = vld [vmem:[%s1 + $0x37c] sm:$0xf]
  %v383 = vld [vmem:[%s1 + $0x380] sm:$0xf]
  %v384 = vld [vmem:[%s1 + $0x384] sm:$0xf]
  %v385 = vld [vmem:[%s1 + $0x388] sm:$0xf]
  %v386 = vld [vmem:[%s1 + $0x38c] sm:$0xf]
  %v387 = vld [vmem:[%s1 + $0x390] sm:$0xf]
  %v388 = vld [vmem:[%s1 + $0x394] sm:$0xf]
  %v389 = vld [vmem:[%s1 + $0x398] sm:$0xf]
  %v390 = vld [vmem:[%s1 + $0x39c] sm:$0xf]
  %v391 = vld [vmem:[%s1 + $0x3a0] sm:$0xf]
  %v392 = vld [vmem:[%s1 + $0x3a4] sm:$0xf]
  %v393 = vld [vmem:[%s1 + $0x3a8] sm:$0xf]
  %v394 = vld [vmem:[%s1 + $0x3ac] sm:$0xf]
  %v395 = vld [vmem:[%s1 + $0x3b0] sm:$0xf]
  %v396 = vld [vmem:[%s1 + $0x3b4] sm:$0xf]
  %v397 = vld [vmem:[%s1 + $0x3b8] sm:$0xf]
  %v398 = vld [vmem:[%s1 + $0x3bc] sm:$0xf]
  %v399 = vld [vmem:[%s1 + $0x3c0] sm:$0xf]
  %v400 = vld [vmem:[%s1 + $0x3c4] sm:$0xf]
  %v401 = vld [vmem:[%s1 + $0x3c8] sm:$0xf]
  %v402 = vld [vmem:[%s1 + $0x3cc] sm:$0xf]
  %v403 = vld [vmem:[%s1 + $0x3d0] sm:$0xf]
  %v404 = vld [vmem:[%s1 + $0x3d4] sm:$0xf]
  %v405 = vld [vmem:[%s1 + $0x3d8] sm:$0xf]
  %v406 = vld [vmem:[%s1 + $0x3dc] sm:$0xf]
  %v407 = vld [vmem:[%s1 + $0x3e0] sm:$0xf]
  %v408 = vld [vmem:[%s1 + $0x3e4] sm:$0xf]
  %v409 = vld [vmem:[%s1 + $0x3e8] sm:$0xf]
  %v410 = vld [vmem:[%s1 + $0x3ec] sm:$0xf]
  %v411 = vld [vmem:[%s1 + $0x3f0] sm:$0xf]
  %v412 = vld [vmem:[%s1 + $0x3f4] sm:$0xf]
  %v413 = vld [vmem:[%s1 + $0x3f8] sm:$0xf]
  %v414 = vld [vmem:[%s1 + $0x3fc] sm:$0xf]
  %v415 = vld [vmem:[%s1 + $0x400] sm:$0xf]
  %v416 = vld [vmem:[%s1 + $0x404] sm:$0xf]
  %v417 = vld [vmem:[%s1 + $0x408] sm:$0xf]
  %v418 = vld [vmem:[%s1 + $0x40c] sm:$0xf]
  %v419 = vld [vmem:[%s1 + $0x410] sm:$0xf]
  %v420 = vld [vmem:[%s1 + $0x414] sm:$0xf]
  %v421 = vld [vmem:[%s1 + $0x418] sm:$0xf]
  %v422 = vld [vmem:[%s1 + $0x41c] sm:$0xf]
  %v423 = vld [vmem:[%s1 + $0x420] sm:$0xf]
  %v424 = vld [vmem:[%s1 + $0x424] sm:$0xf]
  %v425 = vld [vmem:[%s1 + $0x428] sm:$0xf]
  %v426 = vld [vmem:[%s1 + $0x42c] sm:$0xf]
  %v427 = vld [vmem:[%s1 + $0x430] sm:$0xf]
  %v428 = vld [vmem:[%s1 + $0x434] sm:$0xf]
  %v429 = vld [vmem:[%s1 + $0x438] sm:$0xf]
  %v430 = vld [vmem:[%s1 + $0x43c] sm:$0xf]
  %v431 = vld [vmem:[%s1 + $0x440] sm:$0xf]
  %v432 = vld [vmem:[%s1 + $0x444] sm:$0xf]
  %v433 = vld [vmem:[%s1 + $0x448] sm:$0xf]
  %v434 = vld [vmem:[%s1 + $0x44c] sm:$0xf]
  %v435 = vld [vmem:[%s1 + $0x450] sm:$0xf]
  %v436 = vld [vmem:[%s1 + $0x454] sm:$0xf]
  %v437 = vld [vmem:[%s1 + $0x458] sm:$0xf]
  %v438 = vld [vmem:[%s1 + $0x45c] sm:$0xf]
  %v439 = vld [vmem:[%s1 + $0x460] sm:$0xf]
  %v440 = vld [vmem:[%s1 + $0x464] sm:$0xf]
  %v441 = vld [vmem:[%s1 + $0x468] sm:$0xf]
  %v442 = vld [vmem:[%s1 + $0x46c] sm:$0xf]
  %v443 = vld [vmem:[%s1 + $0x470] sm:$0xf]
  %v444 = vld [vmem:[%s1 + $0x474] sm:$0xf]
  %v445 = vld [vmem:[%s1 + $0x478] sm:$0xf]
  %v446 = vld [vmem:[%s1 + $0x47c] sm:$0xf]
  %v447 = vld [vmem:[%s2] sm:$0x1]
  %v449 = vlaneseq
  %v450 = vshrl.u32 %v449, 7
  %v451 = vsub.s32 0, %v450
  %v452 = vrot.slane %v447, %v451
  %v598 = vunpack.c.l.b16 %v15
  %v599 = vunpack.c.h.b16 %v15
  %v600 = vunpack.c.l.b16 %v16
  %v601 = vunpack.c.h.b16 %v16
  %v602 = vunpack.c.l.b16 %v17
  %v603 = vunpack.c.h.b16 %v17
  %v604 = vunpack.c.l.b16 %v18
  %v605 = vunpack.c.h.b16 %v18
  %v606 = vunpack.c.l.b16 %v19
  %v607 = vunpack.c.h.b16 %v19
  %v608 = vunpack.c.l.b16 %v20
  %v609 = vunpack.c.h.b16 %v20
  %v610 = vunpack.c.l.b16 %v21
  %v611 = vunpack.c.h.b16 %v21
  %v612 = vunpack.c.l.b16 %v22
  %v613 = vunpack.c.h.b16 %v22
  %v614 = vunpack.c.l.b16 %v23
  %v615 = vunpack.c.h.b16 %v23
  %v616 = vunpack.c.l.b16 %v24
  %v617 = vunpack.c.h.b16 %v24
  %v618 = vunpack.c.l.b16 %v25
  %v619 = vunpack.c.h.b16 %v25
  %v620 = vunpack.c.l.b16 %v26
  %v621 = vunpack.c.h.b16 %v26
  %v622 = vunpack.c.l.b16 %v27
  %v623 = vunpack.c.h.b16 %v27
  %v624 = vunpack.c.l.b16 %v28
  %v625 = vunpack.c.h.b16 %v28
  %v626 = vunpack.c.l.b16 %v29
  %v627 = vunpack.c.h.b16 %v29
  %v628 = vunpack.c.l.b16 %v30
  %v629 = vunpack.c.h.b16 %v30
  %v630 = vunpack.c.l.b16 %v31
  %v631 = vunpack.c.h.b16 %v31
  %v632 = vunpack.c.l.b16 %v32
  %v633 = vunpack.c.h.b16 %v32
  %v634 = vunpack.c.l.b16 %v33
  %v635 = vunpack.c.h.b16 %v33
  %v636 = vunpack.c.l.b16 %v34
  %v637 = vunpack.c.h.b16 %v34
  %v638 = vunpack.c.l.b16 %v35
  %v639 = vunpack.c.h.b16 %v35
  %v640 = vunpack.c.l.b16 %v36
  %v641 = vunpack.c.h.b16 %v36
  %v642 = vunpack.c.l.b16 %v37
  %v643 = vunpack.c.h.b16 %v37
  %v644 = vunpack.c.l.b16 %v38
  %v645 = vunpack.c.h.b16 %v38
  %v646 = vunpack.c.l.b16 %v39
  %v647 = vunpack.c.h.b16 %v39
  %v648 = vunpack.c.l.b16 %v40
  %v649 = vunpack.c.h.b16 %v40
  %v650 = vunpack.c.l.b16 %v41
  %v651 = vunpack.c.h.b16 %v41
  %v652 = vunpack.c.l.b16 %v42
  %v653 = vunpack.c.h.b16 %v42
  %v654 = vunpack.c.l.b16 %v43
  %v655 = vunpack.c.h.b16 %v43
  %v656 = vunpack.c.l.b16 %v44
  %v657 = vunpack.c.h.b16 %v44
  %v658 = vunpack.c.l.b16 %v45
  %v659 = vunpack.c.h.b16 %v45
  %v660 = vunpack.c.l.b16 %v46
  %v661 = vunpack.c.h.b16 %v46
  %v662 = vunpack.c.l.b16 %v47
  %v663 = vunpack.c.h.b16 %v47
  %v664 = vunpack.c.l.b16 %v48
  %v665 = vunpack.c.h.b16 %v48
  %v666 = vunpack.c.l.b16 %v49
  %v667 = vunpack.c.h.b16 %v49
  %v668 = vunpack.c.l.b16 %v50
  %v669 = vunpack.c.h.b16 %v50
  %v670 = vunpack.c.l.b16 %v51
  %v671 = vunpack.c.h.b16 %v51
  %v672 = vunpack.c.l.b16 %v52
  %v673 = vunpack.c.h.b16 %v52
  %v674 = vunpack.c.l.b16 %v53
  %v675 = vunpack.c.h.b16 %v53
  %v676 = vunpack.c.l.b16 %v54
  %v677 = vunpack.c.h.b16 %v54
  %v678 = vunpack.c.l.b16 %v55
  %v679 = vunpack.c.h.b16 %v55
  %v680 = vunpack.c.l.b16 %v56
  %v681 = vunpack.c.h.b16 %v56
  %v682 = vunpack.c.l.b16 %v57
  %v683 = vunpack.c.h.b16 %v57
  %v684 = vunpack.c.l.b16 %v58
  %v685 = vunpack.c.h.b16 %v58
  %v686 = vunpack.c.l.b16 %v59
  %v687 = vunpack.c.h.b16 %v59
  %v688 = vunpack.c.l.b16 %v60
  %v689 = vunpack.c.h.b16 %v60
  %v690 = vunpack.c.l.b16 %v61
  %v691 = vunpack.c.h.b16 %v61
  %v692 = vunpack.c.l.b16 %v62
  %v693 = vunpack.c.h.b16 %v62
  %v694 = vunpack.c.l.b16 %v63
  %v695 = vunpack.c.h.b16 %v63
  %v696 = vunpack.c.l.b16 %v64
  %v697 = vunpack.c.h.b16 %v64
  %v698 = vunpack.c.l.b16 %v65
  %v699 = vunpack.c.h.b16 %v65
  %v700 = vunpack.c.l.b16 %v66
  %v701 = vunpack.c.h.b16 %v66
  %v702 = vunpack.c.l.b16 %v67
  %v703 = vunpack.c.h.b16 %v67
  %v704 = vunpack.c.l.b16 %v68
  %v705 = vunpack.c.h.b16 %v68
  %v706 = vunpack.c.l.b16 %v69
  %v707 = vunpack.c.h.b16 %v69
  %v708 = vunpack.c.l.b16 %v70
  %v709 = vunpack.c.h.b16 %v70
  %v710 = vunpack.c.l.b16 %v71
  %v711 = vunpack.c.h.b16 %v71
  %v712 = vunpack.c.l.b16 %v72
  %v713 = vunpack.c.h.b16 %v72
  %v714 = vunpack.c.l.b16 %v73
  %v715 = vunpack.c.h.b16 %v73
  %v716 = vunpack.c.l.b16 %v74
  %v717 = vunpack.c.h.b16 %v74
  %v718 = vunpack.c.l.b16 %v75
  %v719 = vunpack.c.h.b16 %v75
  %v720 = vunpack.c.l.b16 %v76
  %v721 = vunpack.c.h.b16 %v76
  %v722 = vunpack.c.l.b16 %v77
  %v723 = vunpack.c.h.b16 %v77
  %v724 = vunpack.c.l.b16 %v78
  %v725 = vunpack.c.h.b16 %v78
  %v726 = vunpack.c.l.b16 %v79
  %v727 = vunpack.c.h.b16 %v79
  %v728 = vunpack.c.l.b16 %v80
  %v729 = vunpack.c.h.b16 %v80
  %v730 = vunpack.c.l.b16 %v81
  %v731 = vunpack.c.h.b16 %v81
  %v732 = vunpack.c.l.b16 %v82
  %v733 = vunpack.c.h.b16 %v82
  %v734 = vunpack.c.l.b16 %v83
  %v735 = vunpack.c.h.b16 %v83
  %v736 = vunpack.c.l.b16 %v84
  %v737 = vunpack.c.h.b16 %v84
  %v738 = vunpack.c.l.b16 %v85
  %v739 = vunpack.c.h.b16 %v85
  %v740 = vunpack.c.l.b16 %v86
  %v741 = vunpack.c.h.b16 %v86
  %v742 = vunpack.c.l.b16 %v87
  %v743 = vunpack.c.h.b16 %v87
  %v744 = vunpack.c.l.b16 %v88
  %v745 = vunpack.c.h.b16 %v88
  %v746 = vunpack.c.l.b16 %v89
  %v747 = vunpack.c.h.b16 %v89
  %v748 = vunpack.c.l.b16 %v90
  %v749 = vunpack.c.h.b16 %v90
  %v750 = vunpack.c.l.b16 %v91
  %v751 = vunpack.c.h.b16 %v91
  %v752 = vunpack.c.l.b16 %v92
  %v753 = vunpack.c.h.b16 %v92
  %v754 = vunpack.c.l.b16 %v93
  %v755 = vunpack.c.h.b16 %v93
  %v756 = vunpack.c.l.b16 %v94
  %v757 = vunpack.c.h.b16 %v94
  %v758 = vunpack.c.l.b16 %v95
  %v759 = vunpack.c.h.b16 %v95
  %v760 = vunpack.c.l.b16 %v96
  %v761 = vunpack.c.h.b16 %v96
  %v762 = vunpack.c.l.b16 %v97
  %v763 = vunpack.c.h.b16 %v97
  %v764 = vunpack.c.l.b16 %v98
  %v765 = vunpack.c.h.b16 %v98
  %v766 = vunpack.c.l.b16 %v99
  %v767 = vunpack.c.h.b16 %v99
  %v768 = vunpack.c.l.b16 %v100
  %v769 = vunpack.c.h.b16 %v100
  %v770 = vunpack.c.l.b16 %v101
  %v771 = vunpack.c.h.b16 %v101
  %v772 = vunpack.c.l.b16 %v102
  %v773 = vunpack.c.h.b16 %v102
  %v774 = vunpack.c.l.b16 %v103
  %v775 = vunpack.c.h.b16 %v103
  %v776 = vunpack.c.l.b16 %v104
  %v777 = vunpack.c.h.b16 %v104
  %v778 = vunpack.c.l.b16 %v105
  %v779 = vunpack.c.h.b16 %v105
  %v780 = vunpack.c.l.b16 %v106
  %v781 = vunpack.c.h.b16 %v106
  %v782 = vunpack.c.l.b16 %v107
  %v783 = vunpack.c.h.b16 %v107
  %v784 = vunpack.c.l.b16 %v108
  %v785 = vunpack.c.h.b16 %v108
  %v786 = vunpack.c.l.b16 %v109
  %v787 = vunpack.c.h.b16 %v109
  %v788 = vunpack.c.l.b16 %v110
  %v789 = vunpack.c.h.b16 %v110
  %v790 = vunpack.c.l.b16 %v111
  %v791 = vunpack.c.h.b16 %v111
  %v792 = vunpack.c.l.b16 %v112
  %v793 = vunpack.c.h.b16 %v112
  %v794 = vunpack.c.l.b16 %v113
  %v795 = vunpack.c.h.b16 %v113
  %v796 = vunpack.c.l.b16 %v114
  %v797 = vunpack.c.h.b16 %v114
  %v798 = vunpack.c.l.b16 %v115
  %v799 = vunpack.c.h.b16 %v115
  %v800 = vunpack.c.l.b16 %v116
  %v801 = vunpack.c.h.b16 %v116
  %v802 = vunpack.c.l.b16 %v117
  %v803 = vunpack.c.h.b16 %v117
  %v804 = vunpack.c.l.b16 %v118
  %v805 = vunpack.c.h.b16 %v118
  %v806 = vunpack.c.l.b16 %v119
  %v807 = vunpack.c.h.b16 %v119
  %v808 = vunpack.c.l.b16 %v120
  %v809 = vunpack.c.h.b16 %v120
  %v810 = vunpack.c.l.b16 %v121
  %v811 = vunpack.c.h.b16 %v121
  %v812 = vunpack.c.l.b16 %v122
  %v813 = vunpack.c.h.b16 %v122
  %v814 = vunpack.c.l.b16 %v123
  %v815 = vunpack.c.h.b16 %v123
  %v816 = vunpack.c.l.b16 %v124
  %v817 = vunpack.c.h.b16 %v124
  %v818 = vunpack.c.l.b16 %v125
  %v819 = vunpack.c.h.b16 %v125
  %v820 = vunpack.c.l.b16 %v126
  %v821 = vunpack.c.h.b16 %v126
  %v822 = vunpack.c.l.b16 %v127
  %v823 = vunpack.c.h.b16 %v127
  %v824 = vunpack.c.l.b16 %v128
  %v825 = vunpack.c.h.b16 %v128
  %v826 = vunpack.c.l.b16 %v129
  %v827 = vunpack.c.h.b16 %v129
  %v828 = vunpack.c.l.b16 %v130
  %v829 = vunpack.c.h.b16 %v130
  %v830 = vunpack.c.l.b16 %v131
  %v831 = vunpack.c.h.b16 %v131
  %v832 = vunpack.c.l.b16 %v132
  %v833 = vunpack.c.h.b16 %v132
  %v834 = vunpack.c.l.b16 %v133
  %v835 = vunpack.c.h.b16 %v133
  %v836 = vunpack.c.l.b16 %v134
  %v837 = vunpack.c.h.b16 %v134
  %v838 = vunpack.c.l.b16 %v135
  %v839 = vunpack.c.h.b16 %v135
  %v840 = vunpack.c.l.b16 %v136
  %v841 = vunpack.c.h.b16 %v136
  %v842 = vunpack.c.l.b16 %v137
  %v843 = vunpack.c.h.b16 %v137
  %v844 = vunpack.c.l.b16 %v138
  %v845 = vunpack.c.h.b16 %v138
  %v846 = vunpack.c.l.b16 %v139
  %v847 = vunpack.c.h.b16 %v139
  %v848 = vunpack.c.l.b16 %v140
  %v849 = vunpack.c.h.b16 %v140
  %v850 = vunpack.c.l.b16 %v141
  %v851 = vunpack.c.h.b16 %v141
  %v852 = vunpack.c.l.b16 %v142
  %v853 = vunpack.c.h.b16 %v142
  %v854 = vunpack.c.l.b16 %v143
  %v855 = vunpack.c.h.b16 %v143
  %v856 = vunpack.c.l.b16 %v144
  %v857 = vunpack.c.h.b16 %v144
  %v858 = vunpack.c.l.b16 %v145
  %v859 = vunpack.c.h.b16 %v145
  %v860 = vunpack.c.l.b16 %v146
  %v861 = vunpack.c.h.b16 %v146
  %v862 = vunpack.c.l.b16 %v147
  %v863 = vunpack.c.h.b16 %v147
  %v864 = vunpack.c.l.b16 %v148
  %v865 = vunpack.c.h.b16 %v148
  %v866 = vunpack.c.l.b16 %v149
  %v867 = vunpack.c.h.b16 %v149
  %v868 = vunpack.c.l.b16 %v150
  %v869 = vunpack.c.h.b16 %v150
  %v870 = vunpack.c.l.b16 %v151
  %v871 = vunpack.c.h.b16 %v151
  %v872 = vunpack.c.l.b16 %v152
  %v873 = vunpack.c.h.b16 %v152
  %v874 = vunpack.c.l.b16 %v153
  %v875 = vunpack.c.h.b16 %v153
  %v876 = vunpack.c.l.b16 %v154
  %v877 = vunpack.c.h.b16 %v154
  %v878 = vunpack.c.l.b16 %v155
  %v879 = vunpack.c.h.b16 %v155
  %v880 = vunpack.c.l.b16 %v156
  %v881 = vunpack.c.h.b16 %v156
  %v882 = vunpack.c.l.b16 %v157
  %v883 = vunpack.c.h.b16 %v157
  %v884 = vunpack.c.l.b16 %v158
  %v885 = vunpack.c.h.b16 %v158
  %v886 = vpack.c.b16 %v616, %v598
  %v887 = vpack.c.b16 %v617, %v599
  %v888 = vpack.c.b16 %v618, %v600
  %v889 = vpack.c.b16 %v619, %v601
  %v890 = vpack.c.b16 %v620, %v602
  %v891 = vpack.c.b16 %v621, %v603
  %v892 = vpack.c.b16 %v622, %v604
  %v893 = vpack.c.b16 %v623, %v605
  %v894 = vpack.c.b16 %v624, %v606
  %v895 = vpack.c.b16 %v625, %v607
  %v896 = vpack.c.b16 %v626, %v608
  %v897 = vpack.c.b16 %v627, %v609
  %v898 = vpack.c.b16 %v628, %v610
  %v899 = vpack.c.b16 %v629, %v611
  %v900 = vpack.c.b16 %v630, %v612
  %v901 = vpack.c.b16 %v631, %v613
  %v902 = vpack.c.b16 %v632, %v614
  %v903 = vpack.c.b16 %v633, %v615
  %v904 = vpack.c.b16 %v652, %v634
  %v905 = vpack.c.b16 %v653, %v635
  %v906 = vpack.c.b16 %v654, %v636
  %v907 = vpack.c.b16 %v655, %v637
  %v908 = vpack.c.b16 %v656, %v638
  %v909 = vpack.c.b16 %v657, %v639
  %v910 = vpack.c.b16 %v658, %v640
  %v911 = vpack.c.b16 %v659, %v641
  %v912 = vpack.c.b16 %v660, %v642
  %v913 = vpack.c.b16 %v661, %v643
  %v914 = vpack.c.b16 %v662, %v644
  %v915 = vpack.c.b16 %v663, %v645
  %v916 = vpack.c.b16 %v664, %v646
  %v917 = vpack.c.b16 %v665, %v647
  %v918 = vpack.c.b16 %v666, %v648
  %v919 = vpack.c.b16 %v667, %v649
  %v920 = vpack.c.b16 %v668, %v650
  %v921 = vpack.c.b16 %v669, %v651
  %v922 = vpack.c.b16 %v688, %v670
  %v923 = vpack.c.b16 %v689, %v671
  %v924 = vpack.c.b16 %v690, %v672
  %v925 = vpack.c.b16 %v691, %v673
  %v926 = vpack.c.b16 %v692, %v674
  %v927 = vpack.c.b16 %v693, %v675
  %v928 = vpack.c.b16 %v694, %v676
  %v929 = vpack.c.b16 %v695, %v677
  %v930 = vpack.c.b16 %v696, %v678
  %v931 = vpack.c.b16 %v697, %v679
  %v932 = vpack.c.b16 %v698, %v680
  %v933 = vpack.c.b16 %v699, %v681
  %v934 = vpack.c.b16 %v700, %v682
  %v935 = vpack.c.b16 %v701, %v683
  %v936 = vpack.c.b16 %v702, %v684
  %v937 = vpack.c.b16 %v703, %v685
  %v938 = vpack.c.b16 %v704, %v686
  %v939 = vpack.c.b16 %v705, %v687
  %v940 = vpack.c.b16 %v724, %v706
  %v941 = vpack.c.b16 %v725, %v707
  %v942 = vpack.c.b16 %v726, %v708
  %v943 = vpack.c.b16 %v727, %v709
  %v944 = vpack.c.b16 %v728, %v710
  %v945 = vpack.c.b16 %v729, %v711
  %v946 = vpack.c.b16 %v730, %v712
  %v947 = vpack.c.b16 %v731, %v713
  %v948 = vpack.c.b16 %v732, %v714
  %v949 = vpack.c.b16 %v733, %v715
  %v950 = vpack.c.b16 %v734, %v716
  %v951 = vpack.c.b16 %v735, %v717
  %v952 = vpack.c.b16 %v736, %v718
  %v953 = vpack.c.b16 %v737, %v719
  %v954 = vpack.c.b16 %v738, %v720
  %v955 = vpack.c.b16 %v739, %v721
  %v956 = vpack.c.b16 %v740, %v722
  %v957 = vpack.c.b16 %v741, %v723
  %v958 = vpack.c.b16 %v760, %v742
  %v959 = vpack.c.b16 %v761, %v743
  %v960 = vpack.c.b16 %v762, %v744
  %v961 = vpack.c.b16 %v763, %v745
  %v962 = vpack.c.b16 %v764, %v746
  %v963 = vpack.c.b16 %v765, %v747
  %v964 = vpack.c.b16 %v766, %v748
  %v965 = vpack.c.b16 %v767, %v749
  %v966 = vpack.c.b16 %v768, %v750
  %v967 = vpack.c.b16 %v769, %v751
  %v968 = vpack.c.b16 %v770, %v752
  %v969 = vpack.c.b16 %v771, %v753
  %v970 = vpack.c.b16 %v772, %v754
  %v971 = vpack.c.b16 %v773, %v755
  %v972 = vpack.c.b16 %v774, %v756
  %v973 = vpack.c.b16 %v775, %v757
  %v974 = vpack.c.b16 %v776, %v758
  %v975 = vpack.c.b16 %v777, %v759
  %v976 = vpack.c.b16 %v796, %v778
  %v977 = vpack.c.b16 %v797, %v779
  %v978 = vpack.c.b16 %v798, %v780
  %v979 = vpack.c.b16 %v799, %v781
  %v980 = vpack.c.b16 %v800, %v782
  %v981 = vpack.c.b16 %v801, %v783
  %v982 = vpack.c.b16 %v802, %v784
  %v983 = vpack.c.b16 %v803, %v785
  %v984 = vpack.c.b16 %v804, %v786
  %v985 = vpack.c.b16 %v805, %v787
  %v986 = vpack.c.b16 %v806, %v788
  %v987 = vpack.c.b16 %v807, %v789
  %v988 = vpack.c.b16 %v808, %v790
  %v989 = vpack.c.b16 %v809, %v791
  %v990 = vpack.c.b16 %v810, %v792
  %v991 = vpack.c.b16 %v811, %v793
  %v992 = vpack.c.b16 %v812, %v794
  %v993 = vpack.c.b16 %v813, %v795
  %v994 = vpack.c.b16 %v832, %v814
  %v995 = vpack.c.b16 %v833, %v815
  %v996 = vpack.c.b16 %v834, %v816
  %v997 = vpack.c.b16 %v835, %v817
  %v998 = vpack.c.b16 %v836, %v818
  %v999 = vpack.c.b16 %v837, %v819
  %v1000 = vpack.c.b16 %v838, %v820
  %v1001 = vpack.c.b16 %v839, %v821
  %v1002 = vpack.c.b16 %v840, %v822
  %v1003 = vpack.c.b16 %v841, %v823
  %v1004 = vpack.c.b16 %v842, %v824
  %v1005 = vpack.c.b16 %v843, %v825
  %v1006 = vpack.c.b16 %v844, %v826
  %v1007 = vpack.c.b16 %v845, %v827
  %v1008 = vpack.c.b16 %v846, %v828
  %v1009 = vpack.c.b16 %v847, %v829
  %v1010 = vpack.c.b16 %v848, %v830
  %v1011 = vpack.c.b16 %v849, %v831
  %v1012 = vpack.c.b16 %v868, %v850
  %v1013 = vpack.c.b16 %v869, %v851
  %v1014 = vpack.c.b16 %v870, %v852
  %v1015 = vpack.c.b16 %v871, %v853
  %v1016 = vpack.c.b16 %v872, %v854
  %v1017 = vpack.c.b16 %v873, %v855
  %v1018 = vpack.c.b16 %v874, %v856
  %v1019 = vpack.c.b16 %v875, %v857
  %v1020 = vpack.c.b16 %v876, %v858
  %v1021 = vpack.c.b16 %v877, %v859
  %v1022 = vpack.c.b16 %v878, %v860
  %v1023 = vpack.c.b16 %v879, %v861
  %v1024 = vpack.c.b16 %v880, %v862
  %v1025 = vpack.c.b16 %v881, %v863
  %v1026 = vpack.c.b16 %v882, %v864
  %v1027 = vpack.c.b16 %v883, %v865
  %v1028 = vpack.c.b16 %v884, %v866
  %v1029 = vpack.c.b16 %v885, %v867
  %v1462 = vunpack.c.l.b16 %v159
  %v1463 = vunpack.c.l.b16 %v160
  %v1464 = vunpack.c.l.b16 %v161
  %v1465 = vunpack.c.l.b16 %v162
  %v1466 = vunpack.c.l.b16 %v163
  %v1467 = vunpack.c.l.b16 %v164
  %v1468 = vunpack.c.l.b16 %v165
  %v1469 = vunpack.c.l.b16 %v166
  %v1470 = vunpack.c.l.b16 %v167
  %v1471 = vunpack.c.l.b16 %v168
  %v1472 = vunpack.c.l.b16 %v169
  %v1473 = vunpack.c.l.b16 %v170
  %v1474 = vunpack.c.l.b16 %v171
  %v1475 = vunpack.c.l.b16 %v172
  %v1476 = vunpack.c.l.b16 %v173
  %v1477 = vunpack.c.l.b16 %v174
  %v1478 = vunpack.c.l.b16 %v175
  %v1479 = vunpack.c.l.b16 %v176
  %v1480 = vunpack.c.l.b16 %v177
  %v1481 = vunpack.c.l.b16 %v178
  %v1482 = vunpack.c.l.b16 %v179
  %v1483 = vunpack.c.l.b16 %v180
  %v1484 = vunpack.c.l.b16 %v181
  %v1485 = vunpack.c.l.b16 %v182
  %v1486 = vunpack.c.l.b16 %v183
  %v1487 = vunpack.c.l.b16 %v184
  %v1488 = vunpack.c.l.b16 %v185
  %v1489 = vunpack.c.l.b16 %v186
  %v1490 = vunpack.c.l.b16 %v187
  %v1491 = vunpack.c.l.b16 %v188
  %v1492 = vunpack.c.l.b16 %v189
  %v1493 = vunpack.c.l.b16 %v190
  %v1494 = vunpack.c.l.b16 %v191
  %v1495 = vunpack.c.l.b16 %v192
  %v1496 = vunpack.c.l.b16 %v193
  %v1497 = vunpack.c.l.b16 %v194
  %v1498 = vunpack.c.l.b16 %v195
  %v1499 = vunpack.c.l.b16 %v196
  %v1500 = vunpack.c.l.b16 %v197
  %v1501 = vunpack.c.l.b16 %v198
  %v1502 = vunpack.c.l.b16 %v199
  %v1503 = vunpack.c.l.b16 %v200
  %v1504 = vunpack.c.l.b16 %v201
  %v1505 = vunpack.c.l.b16 %v202
  %v1506 = vunpack.c.l.b16 %v203
  %v1507 = vunpack.c.l.b16 %v204
  %v1508 = vunpack.c.l.b16 %v205
  %v1509 = vunpack.c.l.b16 %v206
  %v1510 = vunpack.c.l.b16 %v207
  %v1511 = vunpack.c.l.b16 %v208
  %v1512 = vunpack.c.l.b16 %v209
  %v1513 = vunpack.c.l.b16 %v210
  %v1514 = vunpack.c.l.b16 %v211
  %v1515 = vunpack.c.l.b16 %v212
  %v1516 = vunpack.c.l.b16 %v213
  %v1517 = vunpack.c.l.b16 %v214
  %v1518 = vunpack.c.l.b16 %v215
  %v1519 = vunpack.c.l.b16 %v216
  %v1520 = vunpack.c.l.b16 %v217
  %v1521 = vunpack.c.l.b16 %v218
  %v1522 = vunpack.c.l.b16 %v219
  %v1523 = vunpack.c.l.b16 %v220
  %v1524 = vunpack.c.l.b16 %v221
  %v1525 = vunpack.c.l.b16 %v222
  %v1526 = vunpack.c.l.b16 %v223
  %v1527 = vunpack.c.l.b16 %v224
  %v1528 = vunpack.c.l.b16 %v225
  %v1529 = vunpack.c.l.b16 %v226
  %v1530 = vunpack.c.l.b16 %v227
  %v1531 = vunpack.c.l.b16 %v228
  %v1532 = vunpack.c.l.b16 %v229
  %v1533 = vunpack.c.l.b16 %v230
  %v1534 = vunpack.c.l.b16 %v231
  %v1535 = vunpack.c.l.b16 %v232
  %v1536 = vunpack.c.l.b16 %v233
  %v1537 = vunpack.c.l.b16 %v234
  %v1538 = vunpack.c.l.b16 %v235
  %v1539 = vunpack.c.l.b16 %v236
  %v1540 = vunpack.c.l.b16 %v237
  %v1541 = vunpack.c.l.b16 %v238
  %v1542 = vunpack.c.l.b16 %v239
  %v1543 = vunpack.c.l.b16 %v240
  %v1544 = vunpack.c.l.b16 %v241
  %v1545 = vunpack.c.l.b16 %v242
  %v1546 = vunpack.c.l.b16 %v243
  %v1547 = vunpack.c.l.b16 %v244
  %v1548 = vunpack.c.l.b16 %v245
  %v1549 = vunpack.c.l.b16 %v246
  %v1550 = vunpack.c.l.b16 %v247
  %v1551 = vunpack.c.l.b16 %v248
  %v1552 = vunpack.c.l.b16 %v249
  %v1553 = vunpack.c.l.b16 %v250
  %v1554 = vunpack.c.l.b16 %v251
  %v1555 = vunpack.c.l.b16 %v252
  %v1556 = vunpack.c.l.b16 %v253
  %v1557 = vunpack.c.l.b16 %v254
  %v1558 = vunpack.c.l.b16 %v255
  %v1559 = vunpack.c.l.b16 %v256
  %v1560 = vunpack.c.l.b16 %v257
  %v1561 = vunpack.c.l.b16 %v258
  %v1562 = vunpack.c.l.b16 %v259
  %v1563 = vunpack.c.l.b16 %v260
  %v1564 = vunpack.c.l.b16 %v261
  %v1565 = vunpack.c.l.b16 %v262
  %v1566 = vunpack.c.l.b16 %v263
  %v1567 = vunpack.c.l.b16 %v264
  %v1568 = vunpack.c.l.b16 %v265
  %v1569 = vunpack.c.l.b16 %v266
  %v1570 = vunpack.c.l.b16 %v267
  %v1571 = vunpack.c.l.b16 %v268
  %v1572 = vunpack.c.l.b16 %v269
  %v1573 = vunpack.c.l.b16 %v270
  %v1574 = vunpack.c.l.b16 %v271
  %v1575 = vunpack.c.l.b16 %v272
  %v1576 = vunpack.c.l.b16 %v273
  %v1577 = vunpack.c.l.b16 %v274
  %v1578 = vunpack.c.l.b16 %v275
  %v1579 = vunpack.c.l.b16 %v276
  %v1580 = vunpack.c.l.b16 %v277
  %v1581 = vunpack.c.l.b16 %v278
  %v1582 = vunpack.c.l.b16 %v279
  %v1583 = vunpack.c.l.b16 %v280
  %v1584 = vunpack.c.l.b16 %v281
  %v1585 = vunpack.c.l.b16 %v282
  %v1586 = vunpack.c.l.b16 %v283
  %v1587 = vunpack.c.l.b16 %v284
  %v1588 = vunpack.c.l.b16 %v285
  %v1589 = vunpack.c.l.b16 %v286
  %v1590 = vunpack.c.l.b16 %v287
  %v1591 = vunpack.c.l.b16 %v288
  %v1592 = vunpack.c.l.b16 %v289
  %v1593 = vunpack.c.l.b16 %v290
  %v1594 = vunpack.c.l.b16 %v291
  %v1595 = vunpack.c.l.b16 %v292
  %v1596 = vunpack.c.l.b16 %v293
  %v1597 = vunpack.c.l.b16 %v294
  %v1598 = vunpack.c.l.b16 %v295
  %v1599 = vunpack.c.l.b16 %v296
  %v1600 = vunpack.c.l.b16 %v297
  %v1601 = vunpack.c.l.b16 %v298
  %v1602 = vunpack.c.l.b16 %v299
  %v1603 = vunpack.c.l.b16 %v300
  %v1604 = vunpack.c.l.b16 %v301
  %v1605 = vunpack.c.l.b16 %v302
  %v1606 = vunpack.c.l.b16 %v303
  %v1607 = vunpack.c.l.b16 %v304
  %v1608 = vunpack.c.l.b16 %v305
  %v1609 = vunpack.c.l.b16 %v306
  %v1610 = vunpack.c.l.b16 %v307
  %v1611 = vunpack.c.l.b16 %v308
  %v1612 = vunpack.c.l.b16 %v309
  %v1613 = vunpack.c.l.b16 %v310
  %v1614 = vunpack.c.l.b16 %v311
  %v1615 = vunpack.c.l.b16 %v312
  %v1616 = vunpack.c.l.b16 %v313
  %v1617 = vunpack.c.l.b16 %v314
  %v1618 = vunpack.c.l.b16 %v315
  %v1619 = vunpack.c.l.b16 %v316
  %v1620 = vunpack.c.l.b16 %v317
  %v1621 = vunpack.c.l.b16 %v318
  %v1622 = vunpack.c.l.b16 %v319
  %v1623 = vunpack.c.l.b16 %v320
  %v1624 = vunpack.c.l.b16 %v321
  %v1625 = vunpack.c.l.b16 %v322
  %v1626 = vunpack.c.l.b16 %v323
  %v1627 = vunpack.c.l.b16 %v324
  %v1628 = vunpack.c.l.b16 %v325
  %v1629 = vunpack.c.l.b16 %v326
  %v1630 = vunpack.c.l.b16 %v327
  %v1631 = vunpack.c.l.b16 %v328
  %v1632 = vunpack.c.l.b16 %v329
  %v1633 = vunpack.c.l.b16 %v330
  %v1634 = vunpack.c.l.b16 %v331
  %v1635 = vunpack.c.l.b16 %v332
  %v1636 = vunpack.c.l.b16 %v333
  %v1637 = vunpack.c.l.b16 %v334
  %v1638 = vunpack.c.l.b16 %v335
  %v1639 = vunpack.c.l.b16 %v336
  %v1640 = vunpack.c.l.b16 %v337
  %v1641 = vunpack.c.l.b16 %v338
  %v1642 = vunpack.c.l.b16 %v339
  %v1643 = vunpack.c.l.b16 %v340
  %v1644 = vunpack.c.l.b16 %v341
  %v1645 = vunpack.c.l.b16 %v342
  %v1646 = vunpack.c.l.b16 %v343
  %v1647 = vunpack.c.l.b16 %v344
  %v1648 = vunpack.c.l.b16 %v345
  %v1649 = vunpack.c.l.b16 %v346
  %v1650 = vunpack.c.l.b16 %v347
  %v1651 = vunpack.c.l.b16 %v348
  %v1652 = vunpack.c.l.b16 %v349
  %v1653 = vunpack.c.l.b16 %v350
  %v1654 = vunpack.c.l.b16 %v351
  %v1655 = vunpack.c.l.b16 %v352
  %v1656 = vunpack.c.l.b16 %v353
  %v1657 = vunpack.c.l.b16 %v354
  %v1658 = vunpack.c.l.b16 %v355
  %v1659 = vunpack.c.l.b16 %v356
  %v1660 = vunpack.c.l.b16 %v357
  %v1661 = vunpack.c.l.b16 %v358
  %v1662 = vunpack.c.l.b16 %v359
  %v1663 = vunpack.c.l.b16 %v360
  %v1664 = vunpack.c.l.b16 %v361
  %v1665 = vunpack.c.l.b16 %v362
  %v1666 = vunpack.c.l.b16 %v363
  %v1667 = vunpack.c.l.b16 %v364
  %v1668 = vunpack.c.l.b16 %v365
  %v1669 = vunpack.c.l.b16 %v366
  %v1670 = vunpack.c.l.b16 %v367
  %v1671 = vunpack.c.l.b16 %v368
  %v1672 = vunpack.c.l.b16 %v369
  %v1673 = vunpack.c.l.b16 %v370
  %v1674 = vunpack.c.l.b16 %v371
  %v1675 = vunpack.c.l.b16 %v372
  %v1676 = vunpack.c.l.b16 %v373
  %v1677 = vunpack.c.l.b16 %v374
  %v1678 = vunpack.c.l.b16 %v375
  %v1679 = vunpack.c.l.b16 %v376
  %v1680 = vunpack.c.l.b16 %v377
  %v1681 = vunpack.c.l.b16 %v378
  %v1682 = vunpack.c.l.b16 %v379
  %v1683 = vunpack.c.l.b16 %v380
  %v1684 = vunpack.c.l.b16 %v381
  %v1685 = vunpack.c.l.b16 %v382
  %v1686 = vunpack.c.l.b16 %v383
  %v1687 = vunpack.c.l.b16 %v384
  %v1688 = vunpack.c.l.b16 %v385
  %v1689 = vunpack.c.l.b16 %v386
  %v1690 = vunpack.c.l.b16 %v387
  %v1691 = vunpack.c.l.b16 %v388
  %v1692 = vunpack.c.l.b16 %v389
  %v1693 = vunpack.c.l.b16 %v390
  %v1694 = vunpack.c.l.b16 %v391
  %v1695 = vunpack.c.l.b16 %v392
  %v1696 = vunpack.c.l.b16 %v393
  %v1697 = vunpack.c.l.b16 %v394
  %v1698 = vunpack.c.l.b16 %v395
  %v1699 = vunpack.c.l.b16 %v396
  %v1700 = vunpack.c.l.b16 %v397
  %v1701 = vunpack.c.l.b16 %v398
  %v1702 = vunpack.c.l.b16 %v399
  %v1703 = vunpack.c.l.b16 %v400
  %v1704 = vunpack.c.l.b16 %v401
  %v1705 = vunpack.c.l.b16 %v402
  %v1706 = vunpack.c.l.b16 %v403
  %v1707 = vunpack.c.l.b16 %v404
  %v1708 = vunpack.c.l.b16 %v405
  %v1709 = vunpack.c.l.b16 %v406
  %v1710 = vunpack.c.l.b16 %v407
  %v1711 = vunpack.c.l.b16 %v408
  %v1712 = vunpack.c.l.b16 %v409
  %v1713 = vunpack.c.l.b16 %v410
  %v1714 = vunpack.c.l.b16 %v411
  %v1715 = vunpack.c.l.b16 %v412
  %v1716 = vunpack.c.l.b16 %v413
  %v1717 = vunpack.c.l.b16 %v414
  %v1718 = vunpack.c.l.b16 %v415
  %v1719 = vunpack.c.l.b16 %v416
  %v1720 = vunpack.c.l.b16 %v417
  %v1721 = vunpack.c.l.b16 %v418
  %v1722 = vunpack.c.l.b16 %v419
  %v1723 = vunpack.c.l.b16 %v420
  %v1724 = vunpack.c.l.b16 %v421
  %v1725 = vunpack.c.l.b16 %v422
  %v1726 = vunpack.c.l.b16 %v423
  %v1727 = vunpack.c.l.b16 %v424
  %v1728 = vunpack.c.l.b16 %v425
  %v1729 = vunpack.c.l.b16 %v426
  %v1730 = vunpack.c.l.b16 %v427
  %v1731 = vunpack.c.l.b16 %v428
  %v1732 = vunpack.c.l.b16 %v429
  %v1733 = vunpack.c.l.b16 %v430
  %v1734 = vunpack.c.l.b16 %v431
  %v1735 = vunpack.c.l.b16 %v432
  %v1736 = vunpack.c.l.b16 %v433
  %v1737 = vunpack.c.l.b16 %v434
  %v1738 = vunpack.c.l.b16 %v435
  %v1739 = vunpack.c.l.b16 %v436
  %v1740 = vunpack.c.l.b16 %v437
  %v1741 = vunpack.c.l.b16 %v438
  %v1742 = vunpack.c.l.b16 %v439
  %v1743 = vunpack.c.l.b16 %v440
  %v1744 = vunpack.c.l.b16 %v441
  %v1745 = vunpack.c.l.b16 %v442
  %v1746 = vunpack.c.l.b16 %v443
  %v1747 = vunpack.c.l.b16 %v444
  %v1748 = vunpack.c.l.b16 %v445
  %v1749 = vunpack.c.l.b16 %v446
  %v1750 = vpack.c.b16 %v1463, %v1462
  %v1751 = vpack.c.b16 %v1465, %v1464
  %v1752 = vpack.c.b16 %v1467, %v1466
  %v1753 = vpack.c.b16 %v1469, %v1468
  %v1754 = vpack.c.b16 %v1471, %v1470
  %v1755 = vpack.c.b16 %v1473, %v1472
  %v1756 = vpack.c.b16 %v1475, %v1474
  %v1757 = vpack.c.b16 %v1477, %v1476
  %v1758 = vpack.c.b16 %v1479, %v1478
  %v1759 = vpack.c.b16 %v1481, %v1480
  %v1760 = vpack.c.b16 %v1483, %v1482
  %v1761 = vpack.c.b16 %v1485, %v1484
  %v1762 = vpack.c.b16 %v1487, %v1486
  %v1763 = vpack.c.b16 %v1489, %v1488
  %v1764 = vpack.c.b16 %v1491, %v1490
  %v1765 = vpack.c.b16 %v1493, %v1492
  %v1766 = vpack.c.b16 %v1495, %v1494
  %v1767 = vpack.c.b16 %v1497, %v1496
  %v1768 = vpack.c.b16 %v1499, %v1498
  %v1769 = vpack.c.b16 %v1501, %v1500
  %v1770 = vpack.c.b16 %v1503, %v1502
  %v1771 = vpack.c.b16 %v1505, %v1504
  %v1772 = vpack.c.b16 %v1507, %v1506
  %v1773 = vpack.c.b16 %v1509, %v1508
  %v1774 = vpack.c.b16 %v1511, %v1510
  %v1775 = vpack.c.b16 %v1513, %v1512
  %v1776 = vpack.c.b16 %v1515, %v1514
  %v1777 = vpack.c.b16 %v1517, %v1516
  %v1778 = vpack.c.b16 %v1519, %v1518
  %v1779 = vpack.c.b16 %v1521, %v1520
  %v1780 = vpack.c.b16 %v1523, %v1522
  %v1781 = vpack.c.b16 %v1525, %v1524
  %v1782 = vpack.c.b16 %v1527, %v1526
  %v1783 = vpack.c.b16 %v1529, %v1528
  %v1784 = vpack.c.b16 %v1531, %v1530
  %v1785 = vpack.c.b16 %v1533, %v1532
  %v1786 = vpack.c.b16 %v1535, %v1534
  %v1787 = vpack.c.b16 %v1537, %v1536
  %v1788 = vpack.c.b16 %v1539, %v1538
  %v1789 = vpack.c.b16 %v1541, %v1540
  %v1790 = vpack.c.b16 %v1543, %v1542
  %v1791 = vpack.c.b16 %v1545, %v1544
  %v1792 = vpack.c.b16 %v1547, %v1546
  %v1793 = vpack.c.b16 %v1549, %v1548
  %v1794 = vpack.c.b16 %v1551, %v1550
  %v1795 = vpack.c.b16 %v1553, %v1552
  %v1796 = vpack.c.b16 %v1555, %v1554
  %v1797 = vpack.c.b16 %v1557, %v1556
  %v1798 = vpack.c.b16 %v1559, %v1558
  %v1799 = vpack.c.b16 %v1561, %v1560
  %v1800 = vpack.c.b16 %v1563, %v1562
  %v1801 = vpack.c.b16 %v1565, %v1564
  %v1802 = vpack.c.b16 %v1567, %v1566
  %v1803 = vpack.c.b16 %v1569, %v1568
  %v1804 = vpack.c.b16 %v1571, %v1570
  %v1805 = vpack.c.b16 %v1573, %v1572
  %v1806 = vpack.c.b16 %v1575, %v1574
  %v1807 = vpack.c.b16 %v1577, %v1576
  %v1808 = vpack.c.b16 %v1579, %v1578
  %v1809 = vpack.c.b16 %v1581, %v1580
  %v1810 = vpack.c.b16 %v1583, %v1582
  %v1811 = vpack.c.b16 %v1585, %v1584
  %v1812 = vpack.c.b16 %v1587, %v1586
  %v1813 = vpack.c.b16 %v1589, %v1588
  %v1814 = vpack.c.b16 %v1591, %v1590
  %v1815 = vpack.c.b16 %v1593, %v1592
  %v1816 = vpack.c.b16 %v1595, %v1594
  %v1817 = vpack.c.b16 %v1597, %v1596
  %v1818 = vpack.c.b16 %v1599, %v1598
  %v1819 = vpack.c.b16 %v1601, %v1600
  %v1820 = vpack.c.b16 %v1603, %v1602
  %v1821 = vpack.c.b16 %v1605, %v1604
  %v1822 = vpack.c.b16 %v1607, %v1606
  %v1823 = vpack.c.b16 %v1609, %v1608
  %v1824 = vpack.c.b16 %v1611, %v1610
  %v1825 = vpack.c.b16 %v1613, %v1612
  %v1826 = vpack.c.b16 %v1615, %v1614
  %v1827 = vpack.c.b16 %v1617, %v1616
  %v1828 = vpack.c.b16 %v1619, %v1618
  %v1829 = vpack.c.b16 %v1621, %v1620
  %v1830 = vpack.c.b16 %v1623, %v1622
  %v1831 = vpack.c.b16 %v1625, %v1624
  %v1832 = vpack.c.b16 %v1627, %v1626
  %v1833 = vpack.c.b16 %v1629, %v1628
  %v1834 = vpack.c.b16 %v1631, %v1630
  %v1835 = vpack.c.b16 %v1633, %v1632
  %v1836 = vpack.c.b16 %v1635, %v1634
  %v1837 = vpack.c.b16 %v1637, %v1636
  %v1838 = vpack.c.b16 %v1639, %v1638
  %v1839 = vpack.c.b16 %v1641, %v1640
  %v1840 = vpack.c.b16 %v1643, %v1642
  %v1841 = vpack.c.b16 %v1645, %v1644
  %v1842 = vpack.c.b16 %v1647, %v1646
  %v1843 = vpack.c.b16 %v1649, %v1648
  %v1844 = vpack.c.b16 %v1651, %v1650
  %v1845 = vpack.c.b16 %v1653, %v1652
  %v1846 = vpack.c.b16 %v1655, %v1654
  %v1847 = vpack.c.b16 %v1657, %v1656
  %v1848 = vpack.c.b16 %v1659, %v1658
  %v1849 = vpack.c.b16 %v1661, %v1660
  %v1850 = vpack.c.b16 %v1663, %v1662
  %v1851 = vpack.c.b16 %v1665, %v1664
  %v1852 = vpack.c.b16 %v1667, %v1666
  %v1853 = vpack.c.b16 %v1669, %v1668
  %v1854 = vpack.c.b16 %v1671, %v1670
  %v1855 = vpack.c.b16 %v1673, %v1672
  %v1856 = vpack.c.b16 %v1675, %v1674
  %v1857 = vpack.c.b16 %v1677, %v1676
  %v1858 = vpack.c.b16 %v1679, %v1678
  %v1859 = vpack.c.b16 %v1681, %v1680
  %v1860 = vpack.c.b16 %v1683, %v1682
  %v1861 = vpack.c.b16 %v1685, %v1684
  %v1862 = vpack.c.b16 %v1687, %v1686
  %v1863 = vpack.c.b16 %v1689, %v1688
  %v1864 = vpack.c.b16 %v1691, %v1690
  %v1865 = vpack.c.b16 %v1693, %v1692
  %v1866 = vpack.c.b16 %v1695, %v1694
  %v1867 = vpack.c.b16 %v1697, %v1696
  %v1868 = vpack.c.b16 %v1699, %v1698
  %v1869 = vpack.c.b16 %v1701, %v1700
  %v1870 = vpack.c.b16 %v1703, %v1702
  %v1871 = vpack.c.b16 %v1705, %v1704
  %v1872 = vpack.c.b16 %v1707, %v1706
  %v1873 = vpack.c.b16 %v1709, %v1708
  %v1874 = vpack.c.b16 %v1711, %v1710
  %v1875 = vpack.c.b16 %v1713, %v1712
  %v1876 = vpack.c.b16 %v1715, %v1714
  %v1877 = vpack.c.b16 %v1717, %v1716
  %v1878 = vpack.c.b16 %v1719, %v1718
  %v1879 = vpack.c.b16 %v1721, %v1720
  %v1880 = vpack.c.b16 %v1723, %v1722
  %v1881 = vpack.c.b16 %v1725, %v1724
  %v1882 = vpack.c.b16 %v1727, %v1726
  %v1883 = vpack.c.b16 %v1729, %v1728
  %v1884 = vpack.c.b16 %v1731, %v1730
  %v1885 = vpack.c.b16 %v1733, %v1732
  %v1886 = vpack.c.b16 %v1735, %v1734
  %v1887 = vpack.c.b16 %v1737, %v1736
  %v1888 = vpack.c.b16 %v1739, %v1738
  %v1889 = vpack.c.b16 %v1741, %v1740
  %v1890 = vpack.c.b16 %v1743, %v1742
  %v1891 = vpack.c.b16 %v1745, %v1744
  %v1892 = vpack.c.b16 %v1747, %v1746
  %v1893 = vpack.c.b16 %v1749, %v1748
  %2038 = vmatprep.subr.bf16.mxu0 0
  %2039 = vmatpush1.bf16.msra.mxu0 %v1757
  %2040 = vmatprep.subr.bf16.mxu0 0
  %2041 = vmatpush1.bf16.msra.mxu0 %v1756
  %2042 = vmatprep.subr.bf16.mxu0 0
  %2043 = vmatpush1.bf16.msra.mxu0 %v1755
  %2044 = vmatprep.subr.bf16.mxu0 0
  %2045 = vmatpush1.bf16.msra.mxu0 %v1754
  %2046 = vmatprep.subr.bf16.mxu0 0
  %2047 = vmatpush1.bf16.msra.mxu0 %v1753
  %2048 = vmatprep.subr.bf16.mxu0 0
  %2049 = vmatpush1.bf16.msra.mxu0 %v1752
  %2050 = vmatprep.subr.bf16.mxu0 0
  %2051 = vmatpush1.bf16.msra.mxu0 %v1751
  %2052 = vmatprep.subr.bf16.mxu0 0
  %2053 = vmatpush1.bf16.msra.mxu0 %v1750
  %2054 = vmatprep.subr.bf16.mxu0 0
  %2055 = vmatpush2.bf16.msra.mxu0 %v1765
  %2056 = vmatprep.subr.bf16.mxu0 0
  %2057 = vmatpush2.bf16.msra.mxu0 %v1764
  %2058 = vmatprep.subr.bf16.mxu0 0
  %2059 = vmatpush2.bf16.msra.mxu0 %v1763
  %2060 = vmatprep.subr.bf16.mxu0 0
  %2061 = vmatpush2.bf16.msra.mxu0 %v1762
  %2062 = vmatprep.subr.bf16.mxu0 0
  %2063 = vmatpush2.bf16.msra.mxu0 %v1761
  %2064 = vmatprep.subr.bf16.mxu0 0
  %2065 = vmatpush2.bf16.msra.mxu0 %v1760
  %2066 = vmatprep.subr.bf16.mxu0 0
  %2067 = vmatpush2.bf16.msra.mxu0 %v1759
  %2068 = vmatprep.subr.bf16.mxu0 0
  %2069 = vmatpush2.bf16.msra.mxu0 %v1758
  %2070 = vmatprep.mubr.bf16.mxu0 %v887
  %2071 = vmatmul.mubr.bf16.gmra.mxu0 %v886
  %v2072 = vpop.f32.mrf.mxu0
  %v2073 = vadd.f32 %v452, %v2072
  %v2074 = vpop.f32.mrf.mxu0
  %v2075 = vpop.f32.mrf.mxu0
  %v2076 = vadd.f32 %v452, %v2075
  %v2077 = vpop.f32.mrf.mxu0
  %2078 = vmatprep.mubr.bf16.mxu0 %v905
  %2079 = vmatmul.mubr.bf16.gmra.mxu0 %v904
  %v2080 = vpop.f32.mrf.mxu0
  %v2081 = vadd.f32 %v452, %v2080
  %v2082 = vpop.f32.mrf.mxu0
  %v2083 = vpop.f32.mrf.mxu0
  %v2084 = vadd.f32 %v452, %v2083
  %v2085 = vpop.f32.mrf.mxu0
  %2086 = vmatprep.mubr.bf16.mxu0 %v923
  %2087 = vmatmul.mubr.bf16.gmra.mxu0 %v922
  %v2088 = vpop.f32.mrf.mxu0
  %v2089 = vadd.f32 %v452, %v2088
  %v2090 = vpop.f32.mrf.mxu0
  %v2091 = vpop.f32.mrf.mxu0
  %v2092 = vadd.f32 %v452, %v2091
  %v2093 = vpop.f32.mrf.mxu0
  %2094 = vmatprep.mubr.bf16.mxu0 %v941
  %2095 = vmatmul.mubr.bf16.gmra.mxu0 %v940
  %v2096 = vpop.f32.mrf.mxu0
  %v2097 = vadd.f32 %v452, %v2096
  %v2098 = vpop.f32.mrf.mxu0
  %v2099 = vpop.f32.mrf.mxu0
  %v2100 = vadd.f32 %v452, %v2099
  %v2101 = vpop.f32.mrf.mxu0
  %2102 = vmatprep.mubr.bf16.mxu0 %v959
  %2103 = vmatmul.mubr.bf16.gmra.mxu0 %v958
  %v2104 = vpop.f32.mrf.mxu0
  %v2105 = vadd.f32 %v452, %v2104
  %v2106 = vpop.f32.mrf.mxu0
  %v2107 = vpop.f32.mrf.mxu0
  %v2108 = vadd.f32 %v452, %v2107
  %v2109 = vpop.f32.mrf.mxu0
  %2110 = vmatprep.mubr.bf16.mxu0 %v977
  %2111 = vmatmul.mubr.bf16.gmra.mxu0 %v976
  %v2112 = vpop.f32.mrf.mxu0
  %v2113 = vadd.f32 %v452, %v2112
  %v2114 = vpop.f32.mrf.mxu0
  %v2115 = vpop.f32.mrf.mxu0
  %v2116 = vadd.f32 %v452, %v2115
  %v2117 = vpop.f32.mrf.mxu0
  %2118 = vmatprep.mubr.bf16.mxu0 %v995
  %2119 = vmatmul.mubr.bf16.gmra.mxu0 %v994
  %v2120 = vpop.f32.mrf.mxu0
  %v2121 = vadd.f32 %v452, %v2120
  %v2122 = vpop.f32.mrf.mxu0
  %v2123 = vpop.f32.mrf.mxu0
  %v2124 = vadd.f32 %v452, %v2123
  %v2125 = vpop.f32.mrf.mxu0
  %2126 = vmatprep.mubr.bf16.mxu0 %v1013
  %2127 = vmatmul.mubr.bf16.gmra.mxu0 %v1012
  %v2128 = vpop.f32.mrf.mxu0
  %v2129 = vadd.f32 %v452, %v2128
  %v2130 = vpop.f32.mrf.mxu0
  %v2131 = vpop.f32.mrf.mxu0
  %v2132 = vadd.f32 %v452, %v2131
  %v2133 = vpop.f32.mrf.mxu0
  %2134 = vdwg.mxu0
  %2135 = vmatprep.subr.bf16.mxu0 0
  %2136 = vmatpush1.bf16.msra.mxu0 %v1773
  %2137 = vmatprep.subr.bf16.mxu0 0
  %2138 = vmatpush1.bf16.msra.mxu0 %v1772
  %2139 = vmatprep.subr.bf16.mxu0 0
  %2140 = vmatpush1.bf16.msra.mxu0 %v1771
  %2141 = vmatprep.subr.bf16.mxu0 0
  %2142 = vmatpush1.bf16.msra.mxu0 %v1770
  %2143 = vmatprep.subr.bf16.mxu0 0
  %2144 = vmatpush1.bf16.msra.mxu0 %v1769
  %2145 = vmatprep.subr.bf16.mxu0 0
  %2146 = vmatpush1.bf16.msra.mxu0 %v1768
  %2147 = vmatprep.subr.bf16.mxu0 0
  %2148 = vmatpush1.bf16.msra.mxu0 %v1767
  %2149 = vmatprep.subr.bf16.mxu0 0
  %2150 = vmatpush1.bf16.msra.mxu0 %v1766
  %2151 = vmatprep.subr.bf16.mxu0 0
  %2152 = vmatpush2.bf16.msra.mxu0 %v1781
  %2153 = vmatprep.subr.bf16.mxu0 0
  %2154 = vmatpush2.bf16.msra.mxu0 %v1780
  %2155 = vmatprep.subr.bf16.mxu0 0
  %2156 = vmatpush2.bf16.msra.mxu0 %v1779
  %2157 = vmatprep.subr.bf16.mxu0 0
  %2158 = vmatpush2.bf16.msra.mxu0 %v1778
  %2159 = vmatprep.subr.bf16.mxu0 0
  %2160 = vmatpush2.bf16.msra.mxu0 %v1777
  %2161 = vmatprep.subr.bf16.mxu0 0
  %2162 = vmatpush2.bf16.msra.mxu0 %v1776
  %2163 = vmatprep.subr.bf16.mxu0 0
  %2164 = vmatpush2.bf16.msra.mxu0 %v1775
  %2165 = vmatprep.subr.bf16.mxu0 0
  %2166 = vmatpush2.bf16.msra.mxu0 %v1774
  %2167 = vmatprep.mubr.bf16.mxu0 %v889
  %2168 = vmatmul.mubr.bf16.gmra.mxu0 %v888
  %v2169 = vpop.f32.mrf.mxu0
  %v2170 = vadd.f32 %v2073, %v2169
  %v2171 = vpop.f32.mrf.mxu0
  %v2172 = vpop.f32.mrf.mxu0
  %v2173 = vadd.f32 %v2076, %v2172
  %v2174 = vpop.f32.mrf.mxu0
  %2175 = vmatprep.mubr.bf16.mxu0 %v907
  %2176 = vmatmul.mubr.bf16.gmra.mxu0 %v906
  %v2177 = vpop.f32.mrf.mxu0
  %v2178 = vadd.f32 %v2081, %v2177
  %v2179 = vpop.f32.mrf.mxu0
  %v2180 = vpop.f32.mrf.mxu0
  %v2181 = vadd.f32 %v2084, %v2180
  %v2182 = vpop.f32.mrf.mxu0
  %2183 = vmatprep.mubr.bf16.mxu0 %v925
  %2184 = vmatmul.mubr.bf16.gmra.mxu0 %v924
  %v2185 = vpop.f32.mrf.mxu0
  %v2186 = vadd.f32 %v2089, %v2185
  %v2187 = vpop.f32.mrf.mxu0
  %v2188 = vpop.f32.mrf.mxu0
  %v2189 = vadd.f32 %v2092, %v2188
  %v2190 = vpop.f32.mrf.mxu0
  %2191 = vmatprep.mubr.bf16.mxu0 %v943
  %2192 = vmatmul.mubr.bf16.gmra.mxu0 %v942
  %v2193 = vpop.f32.mrf.mxu0
  %v2194 = vadd.f32 %v2097, %v2193
  %v2195 = vpop.f32.mrf.mxu0
  %v2196 = vpop.f32.mrf.mxu0
  %v2197 = vadd.f32 %v2100, %v2196
  %v2198 = vpop.f32.mrf.mxu0
  %2199 = vmatprep.mubr.bf16.mxu0 %v961
  %2200 = vmatmul.mubr.bf16.gmra.mxu0 %v960
  %v2201 = vpop.f32.mrf.mxu0
  %v2202 = vadd.f32 %v2105, %v2201
  %v2203 = vpop.f32.mrf.mxu0
  %v2204 = vpop.f32.mrf.mxu0
  %v2205 = vadd.f32 %v2108, %v2204
  %v2206 = vpop.f32.mrf.mxu0
  %2207 = vmatprep.mubr.bf16.mxu0 %v979
  %2208 = vmatmul.mubr.bf16.gmra.mxu0 %v978
  %v2209 = vpop.f32.mrf.mxu0
  %v2210 = vadd.f32 %v2113, %v2209
  %v2211 = vpop.f32.mrf.mxu0
  %v2212 = vpop.f32.mrf.mxu0
  %v2213 = vadd.f32 %v2116, %v2212
  %v2214 = vpop.f32.mrf.mxu0
  %2215 = vmatprep.mubr.bf16.mxu0 %v997
  %2216 = vmatmul.mubr.bf16.gmra.mxu0 %v996
  %v2217 = vpop.f32.mrf.mxu0
  %v2218 = vadd.f32 %v2121, %v2217
  %v2219 = vpop.f32.mrf.mxu0
  %v2220 = vpop.f32.mrf.mxu0
  %v2221 = vadd.f32 %v2124, %v2220
  %v2222 = vpop.f32.mrf.mxu0
  %2223 = vmatprep.mubr.bf16.mxu0 %v1015
  %2224 = vmatmul.mubr.bf16.gmra.mxu0 %v1014
  %v2225 = vpop.f32.mrf.mxu0
  %v2226 = vadd.f32 %v2129, %v2225
  %v2227 = vpop.f32.mrf.mxu0
  %v2228 = vpop.f32.mrf.mxu0
  %v2229 = vadd.f32 %v2132, %v2228
  %v2230 = vpop.f32.mrf.mxu0
  %2231 = vdwg.mxu0
  %2232 = vmatprep.subr.bf16.mxu0 0
  %2233 = vmatpush1.bf16.msra.mxu0 %v1789
  %2234 = vmatprep.subr.bf16.mxu0 0
  %2235 = vmatpush1.bf16.msra.mxu0 %v1788
  %2236 = vmatprep.subr.bf16.mxu0 0
  %2237 = vmatpush1.bf16.msra.mxu0 %v1787
  %2238 = vmatprep.subr.bf16.mxu0 0
  %2239 = vmatpush1.bf16.msra.mxu0 %v1786
  %2240 = vmatprep.subr.bf16.mxu0 0
  %2241 = vmatpush1.bf16.msra.mxu0 %v1785
  %2242 = vmatprep.subr.bf16.mxu0 0
  %2243 = vmatpush1.bf16.msra.mxu0 %v1784
  %2244 = vmatprep.subr.bf16.mxu0 0
  %2245 = vmatpush1.bf16.msra.mxu0 %v1783
  %2246 = vmatprep.subr.bf16.mxu0 0
  %2247 = vmatpush1.bf16.msra.mxu0 %v1782
  %2248 = vmatprep.subr.bf16.mxu0 0
  %2249 = vmatpush2.bf16.msra.mxu0 %v1797
  %2250 = vmatprep.subr.bf16.mxu0 0
  %2251 = vmatpush2.bf16.msra.mxu0 %v1796
  %2252 = vmatprep.subr.bf16.mxu0 0
  %2253 = vmatpush2.bf16.msra.mxu0 %v1795
  %2254 = vmatprep.subr.bf16.mxu0 0
  %2255 = vmatpush2.bf16.msra.mxu0 %v1794
  %2256 = vmatprep.subr.bf16.mxu0 0
  %2257 = vmatpush2.bf16.msra.mxu0 %v1793
  %2258 = vmatprep.subr.bf16.mxu0 0
  %2259 = vmatpush2.bf16.msra.mxu0 %v1792
  %2260 = vmatprep.subr.bf16.mxu0 0
  %2261 = vmatpush2.bf16.msra.mxu0 %v1791
  %2262 = vmatprep.subr.bf16.mxu0 0
  %2263 = vmatpush2.bf16.msra.mxu0 %v1790
  %2264 = vmatprep.mubr.bf16.mxu0 %v891
  %2265 = vmatmul.mubr.bf16.gmra.mxu0 %v890
  %v2266 = vpop.f32.mrf.mxu0
  %v2267 = vadd.f32 %v2170, %v2266
  %v2268 = vpop.f32.mrf.mxu0
  %v2269 = vpop.f32.mrf.mxu0
  %v2270 = vadd.f32 %v2173, %v2269
  %v2271 = vpop.f32.mrf.mxu0
  %2272 = vmatprep.mubr.bf16.mxu0 %v909
  %2273 = vmatmul.mubr.bf16.gmra.mxu0 %v908
  %v2274 = vpop.f32.mrf.mxu0
  %v2275 = vadd.f32 %v2178, %v2274
  %v2276 = vpop.f32.mrf.mxu0
  %v2277 = vpop.f32.mrf.mxu0
  %v2278 = vadd.f32 %v2181, %v2277
  %v2279 = vpop.f32.mrf.mxu0
  %2280 = vmatprep.mubr.bf16.mxu0 %v927
  %2281 = vmatmul.mubr.bf16.gmra.mxu0 %v926
  %v2282 = vpop.f32.mrf.mxu0
  %v2283 = vadd.f32 %v2186, %v2282
  %v2284 = vpop.f32.mrf.mxu0
  %v2285 = vpop.f32.mrf.mxu0
  %v2286 = vadd.f32 %v2189, %v2285
  %v2287 = vpop.f32.mrf.mxu0
  %2288 = vmatprep.mubr.bf16.mxu0 %v945
  %2289 = vmatmul.mubr.bf16.gmra.mxu0 %v944
  %v2290 = vpop.f32.mrf.mxu0
  %v2291 = vadd.f32 %v2194, %v2290
  %v2292 = vpop.f32.mrf.mxu0
  %v2293 = vpop.f32.mrf.mxu0
  %v2294 = vadd.f32 %v2197, %v2293
  %v2295 = vpop.f32.mrf.mxu0
  %2296 = vmatprep.mubr.bf16.mxu0 %v963
  %2297 = vmatmul.mubr.bf16.gmra.mxu0 %v962
  %v2298 = vpop.f32.mrf.mxu0
  %v2299 = vadd.f32 %v2202, %v2298
  %v2300 = vpop.f32.mrf.mxu0
  %v2301 = vpop.f32.mrf.mxu0
  %v2302 = vadd.f32 %v2205, %v2301
  %v2303 = vpop.f32.mrf.mxu0
  %2304 = vmatprep.mubr.bf16.mxu0 %v981
  %2305 = vmatmul.mubr.bf16.gmra.mxu0 %v980
  %v2306 = vpop.f32.mrf.mxu0
  %v2307 = vadd.f32 %v2210, %v2306
  %v2308 = vpop.f32.mrf.mxu0
  %v2309 = vpop.f32.mrf.mxu0
  %v2310 = vadd.f32 %v2213, %v2309
  %v2311 = vpop.f32.mrf.mxu0
  %2312 = vmatprep.mubr.bf16.mxu0 %v999
  %2313 = vmatmul.mubr.bf16.gmra.mxu0 %v998
  %v2314 = vpop.f32.mrf.mxu0
  %v2315 = vadd.f32 %v2218, %v2314
  %v2316 = vpop.f32.mrf.mxu0
  %v2317 = vpop.f32.mrf.mxu0
  %v2318 = vadd.f32 %v2221, %v2317
  %v2319 = vpop.f32.mrf.mxu0
  %2320 = vmatprep.mubr.bf16.mxu0 %v1017
  %2321 = vmatmul.mubr.bf16.gmra.mxu0 %v1016
  %v2322 = vpop.f32.mrf.mxu0
  %v2323 = vadd.f32 %v2226, %v2322
  %v2324 = vpop.f32.mrf.mxu0
  %v2325 = vpop.f32.mrf.mxu0
  %v2326 = vadd.f32 %v2229, %v2325
  %v2327 = vpop.f32.mrf.mxu0
  %2328 = vdwg.mxu0
  %2329 = vmatprep.subr.bf16.mxu0 0
  %2330 = vmatpush1.bf16.msra.mxu0 %v1805
  %2331 = vmatprep.subr.bf16.mxu0 0
  %2332 = vmatpush1.bf16.msra.mxu0 %v1804
  %2333 = vmatprep.subr.bf16.mxu0 0
  %2334 = vmatpush1.bf16.msra.mxu0 %v1803
  %2335 = vmatprep.subr.bf16.mxu0 0
  %2336 = vmatpush1.bf16.msra.mxu0 %v1802
  %2337 = vmatprep.subr.bf16.mxu0 0
  %2338 = vmatpush1.bf16.msra.mxu0 %v1801
  %2339 = vmatprep.subr.bf16.mxu0 0
  %2340 = vmatpush1.bf16.msra.mxu0 %v1800
  %2341 = vmatprep.subr.bf16.mxu0 0
  %2342 = vmatpush1.bf16.msra.mxu0 %v1799
  %2343 = vmatprep.subr.bf16.mxu0 0
  %2344 = vmatpush1.bf16.msra.mxu0 %v1798
  %2345 = vmatprep.subr.bf16.mxu0 0
  %2346 = vmatpush2.bf16.msra.mxu0 %v1813
  %2347 = vmatprep.subr.bf16.mxu0 0
  %2348 = vmatpush2.bf16.msra.mxu0 %v1812
  %2349 = vmatprep.subr.bf16.mxu0 0
  %2350 = vmatpush2.bf16.msra.mxu0 %v1811
  %2351 = vmatprep.subr.bf16.mxu0 0
  %2352 = vmatpush2.bf16.msra.mxu0 %v1810
  %2353 = vmatprep.subr.bf16.mxu0 0
  %2354 = vmatpush2.bf16.msra.mxu0 %v1809
  %2355 = vmatprep.subr.bf16.mxu0 0
  %2356 = vmatpush2.bf16.msra.mxu0 %v1808
  %2357 = vmatprep.subr.bf16.mxu0 0
  %2358 = vmatpush2.bf16.msra.mxu0 %v1807
  %2359 = vmatprep.subr.bf16.mxu0 0
  %2360 = vmatpush2.bf16.msra.mxu0 %v1806
  %2361 = vmatprep.mubr.bf16.mxu0 %v893
  %2362 = vmatmul.mubr.bf16.gmra.mxu0 %v892
  %v2363 = vpop.f32.mrf.mxu0
  %v2364 = vadd.f32 %v2267, %v2363
  %v2365 = vpop.f32.mrf.mxu0
  %v2366 = vpop.f32.mrf.mxu0
  %v2367 = vadd.f32 %v2270, %v2366
  %v2368 = vpop.f32.mrf.mxu0
  %2369 = vmatprep.mubr.bf16.mxu0 %v911
  %2370 = vmatmul.mubr.bf16.gmra.mxu0 %v910
  %v2371 = vpop.f32.mrf.mxu0
  %v2372 = vadd.f32 %v2275, %v2371
  %v2373 = vpop.f32.mrf.mxu0
  %v2374 = vpop.f32.mrf.mxu0
  %v2375 = vadd.f32 %v2278, %v2374
  %v2376 = vpop.f32.mrf.mxu0
  %2377 = vmatprep.mubr.bf16.mxu0 %v929
  %2378 = vmatmul.mubr.bf16.gmra.mxu0 %v928
  %v2379 = vpop.f32.mrf.mxu0
  %v2380 = vadd.f32 %v2283, %v2379
  %v2381 = vpop.f32.mrf.mxu0
  %v2382 = vpop.f32.mrf.mxu0
  %v2383 = vadd.f32 %v2286, %v2382
  %v2384 = vpop.f32.mrf.mxu0
  %2385 = vmatprep.mubr.bf16.mxu0 %v947
  %2386 = vmatmul.mubr.bf16.gmra.mxu0 %v946
  %v2387 = vpop.f32.mrf.mxu0
  %v2388 = vadd.f32 %v2291, %v2387
  %v2389 = vpop.f32.mrf.mxu0
  %v2390 = vpop.f32.mrf.mxu0
  %v2391 = vadd.f32 %v2294, %v2390
  %v2392 = vpop.f32.mrf.mxu0
  %2393 = vmatprep.mubr.bf16.mxu0 %v965
  %2394 = vmatmul.mubr.bf16.gmra.mxu0 %v964
  %v2395 = vpop.f32.mrf.mxu0
  %v2396 = vadd.f32 %v2299, %v2395
  %v2397 = vpop.f32.mrf.mxu0
  %v2398 = vpop.f32.mrf.mxu0
  %v2399 = vadd.f32 %v2302, %v2398
  %v2400 = vpop.f32.mrf.mxu0
  %2401 = vmatprep.mubr.bf16.mxu0 %v983
  %2402 = vmatmul.mubr.bf16.gmra.mxu0 %v982
  %v2403 = vpop.f32.mrf.mxu0
  %v2404 = vadd.f32 %v2307, %v2403
  %v2405 = vpop.f32.mrf.mxu0
  %v2406 = vpop.f32.mrf.mxu0
  %v2407 = vadd.f32 %v2310, %v2406
  %v2408 = vpop.f32.mrf.mxu0
  %2409 = vmatprep.mubr.bf16.mxu0 %v1001
  %2410 = vmatmul.mubr.bf16.gmra.mxu0 %v1000
  %v2411 = vpop.f32.mrf.mxu0
  %v2412 = vadd.f32 %v2315, %v2411
  %v2413 = vpop.f32.mrf.mxu0
  %v2414 = vpop.f32.mrf.mxu0
  %v2415 = vadd.f32 %v2318, %v2414
  %v2416 = vpop.f32.mrf.mxu0
  %2417 = vmatprep.mubr.bf16.mxu0 %v1019
  %2418 = vmatmul.mubr.bf16.gmra.mxu0 %v1018
  %v2419 = vpop.f32.mrf.mxu0
  %v2420 = vadd.f32 %v2323, %v2419
  %v2421 = vpop.f32.mrf.mxu0
  %v2422 = vpop.f32.mrf.mxu0
  %v2423 = vadd.f32 %v2326, %v2422
  %v2424 = vpop.f32.mrf.mxu0
  %2425 = vdwg.mxu0
  %2426 = vmatprep.subr.bf16.mxu0 0
  %2427 = vmatpush1.bf16.msra.mxu0 %v1821
  %2428 = vmatprep.subr.bf16.mxu0 0
  %2429 = vmatpush1.bf16.msra.mxu0 %v1820
  %2430 = vmatprep.subr.bf16.mxu0 0
  %2431 = vmatpush1.bf16.msra.mxu0 %v1819
  %2432 = vmatprep.subr.bf16.mxu0 0
  %2433 = vmatpush1.bf16.msra.mxu0 %v1818
  %2434 = vmatprep.subr.bf16.mxu0 0
  %2435 = vmatpush1.bf16.msra.mxu0 %v1817
  %2436 = vmatprep.subr.bf16.mxu0 0
  %2437 = vmatpush1.bf16.msra.mxu0 %v1816
  %2438 = vmatprep.subr.bf16.mxu0 0
  %2439 = vmatpush1.bf16.msra.mxu0 %v1815
  %2440 = vmatprep.subr.bf16.mxu0 0
  %2441 = vmatpush1.bf16.msra.mxu0 %v1814
  %2442 = vmatprep.subr.bf16.mxu0 0
  %2443 = vmatpush2.bf16.msra.mxu0 %v1829
  %2444 = vmatprep.subr.bf16.mxu0 0
  %2445 = vmatpush2.bf16.msra.mxu0 %v1828
  %2446 = vmatprep.subr.bf16.mxu0 0
  %2447 = vmatpush2.bf16.msra.mxu0 %v1827
  %2448 = vmatprep.subr.bf16.mxu0 0
  %2449 = vmatpush2.bf16.msra.mxu0 %v1826
  %2450 = vmatprep.subr.bf16.mxu0 0
  %2451 = vmatpush2.bf16.msra.mxu0 %v1825
  %2452 = vmatprep.subr.bf16.mxu0 0
  %2453 = vmatpush2.bf16.msra.mxu0 %v1824
  %2454 = vmatprep.subr.bf16.mxu0 0
  %2455 = vmatpush2.bf16.msra.mxu0 %v1823
  %2456 = vmatprep.subr.bf16.mxu0 0
  %2457 = vmatpush2.bf16.msra.mxu0 %v1822
  %2458 = vmatprep.mubr.bf16.mxu0 %v895
  %2459 = vmatmul.mubr.bf16.gmra.mxu0 %v894
  %v2460 = vpop.f32.mrf.mxu0
  %v2461 = vadd.f32 %v2364, %v2460
  %v2462 = vpop.f32.mrf.mxu0
  %v2463 = vpop.f32.mrf.mxu0
  %v2464 = vadd.f32 %v2367, %v2463
  %v2465 = vpop.f32.mrf.mxu0
  %2466 = vmatprep.mubr.bf16.mxu0 %v913
  %2467 = vmatmul.mubr.bf16.gmra.mxu0 %v912
  %v2468 = vpop.f32.mrf.mxu0
  %v2469 = vadd.f32 %v2372, %v2468
  %v2470 = vpop.f32.mrf.mxu0
  %v2471 = vpop.f32.mrf.mxu0
  %v2472 = vadd.f32 %v2375, %v2471
  %v2473 = vpop.f32.mrf.mxu0
  %2474 = vmatprep.mubr.bf16.mxu0 %v931
  %2475 = vmatmul.mubr.bf16.gmra.mxu0 %v930
  %v2476 = vpop.f32.mrf.mxu0
  %v2477 = vadd.f32 %v2380, %v2476
  %v2478 = vpop.f32.mrf.mxu0
  %v2479 = vpop.f32.mrf.mxu0
  %v2480 = vadd.f32 %v2383, %v2479
  %v2481 = vpop.f32.mrf.mxu0
  %2482 = vmatprep.mubr.bf16.mxu0 %v949
  %2483 = vmatmul.mubr.bf16.gmra.mxu0 %v948
  %v2484 = vpop.f32.mrf.mxu0
  %v2485 = vadd.f32 %v2388, %v2484
  %v2486 = vpop.f32.mrf.mxu0
  %v2487 = vpop.f32.mrf.mxu0
  %v2488 = vadd.f32 %v2391, %v2487
  %v2489 = vpop.f32.mrf.mxu0
  %2490 = vmatprep.mubr.bf16.mxu0 %v967
  %2491 = vmatmul.mubr.bf16.gmra.mxu0 %v966
  %v2492 = vpop.f32.mrf.mxu0
  %v2493 = vadd.f32 %v2396, %v2492
  %v2494 = vpop.f32.mrf.mxu0
  %v2495 = vpop.f32.mrf.mxu0
  %v2496 = vadd.f32 %v2399, %v2495
  %v2497 = vpop.f32.mrf.mxu0
  %2498 = vmatprep.mubr.bf16.mxu0 %v985
  %2499 = vmatmul.mubr.bf16.gmra.mxu0 %v984
  %v2500 = vpop.f32.mrf.mxu0
  %v2501 = vadd.f32 %v2404, %v2500
  %v2502 = vpop.f32.mrf.mxu0
  %v2503 = vpop.f32.mrf.mxu0
  %v2504 = vadd.f32 %v2407, %v2503
  %v2505 = vpop.f32.mrf.mxu0
  %2506 = vmatprep.mubr.bf16.mxu0 %v1003
  %2507 = vmatmul.mubr.bf16.gmra.mxu0 %v1002
  %v2508 = vpop.f32.mrf.mxu0
  %v2509 = vadd.f32 %v2412, %v2508
  %v2510 = vpop.f32.mrf.mxu0
  %v2511 = vpop.f32.mrf.mxu0
  %v2512 = vadd.f32 %v2415, %v2511
  %v2513 = vpop.f32.mrf.mxu0
  %2514 = vmatprep.mubr.bf16.mxu0 %v1021
  %2515 = vmatmul.mubr.bf16.gmra.mxu0 %v1020
  %v2516 = vpop.f32.mrf.mxu0
  %v2517 = vadd.f32 %v2420, %v2516
  %v2518 = vpop.f32.mrf.mxu0
  %v2519 = vpop.f32.mrf.mxu0
  %v2520 = vadd.f32 %v2423, %v2519
  %v2521 = vpop.f32.mrf.mxu0
  %2522 = vdwg.mxu0
  %2523 = vmatprep.subr.bf16.mxu0 0
  %2524 = vmatpush1.bf16.msra.mxu0 %v1837
  %2525 = vmatprep.subr.bf16.mxu0 0
  %2526 = vmatpush1.bf16.msra.mxu0 %v1836
  %2527 = vmatprep.subr.bf16.mxu0 0
  %2528 = vmatpush1.bf16.msra.mxu0 %v1835
  %2529 = vmatprep.subr.bf16.mxu0 0
  %2530 = vmatpush1.bf16.msra.mxu0 %v1834
  %2531 = vmatprep.subr.bf16.mxu0 0
  %2532 = vmatpush1.bf16.msra.mxu0 %v1833
  %2533 = vmatprep.subr.bf16.mxu0 0
  %2534 = vmatpush1.bf16.msra.mxu0 %v1832
  %2535 = vmatprep.subr.bf16.mxu0 0
  %2536 = vmatpush1.bf16.msra.mxu0 %v1831
  %2537 = vmatprep.subr.bf16.mxu0 0
  %2538 = vmatpush1.bf16.msra.mxu0 %v1830
  %2539 = vmatprep.subr.bf16.mxu0 0
  %2540 = vmatpush2.bf16.msra.mxu0 %v1845
  %2541 = vmatprep.subr.bf16.mxu0 0
  %2542 = vmatpush2.bf16.msra.mxu0 %v1844
  %2543 = vmatprep.subr.bf16.mxu0 0
  %2544 = vmatpush2.bf16.msra.mxu0 %v1843
  %2545 = vmatprep.subr.bf16.mxu0 0
  %2546 = vmatpush2.bf16.msra.mxu0 %v1842
  %2547 = vmatprep.subr.bf16.mxu0 0
  %2548 = vmatpush2.bf16.msra.mxu0 %v1841
  %2549 = vmatprep.subr.bf16.mxu0 0
  %2550 = vmatpush2.bf16.msra.mxu0 %v1840
  %2551 = vmatprep.subr.bf16.mxu0 0
  %2552 = vmatpush2.bf16.msra.mxu0 %v1839
  %2553 = vmatprep.subr.bf16.mxu0 0
  %2554 = vmatpush2.bf16.msra.mxu0 %v1838
  %2555 = vmatprep.mubr.bf16.mxu0 %v897
  %2556 = vmatmul.mubr.bf16.gmra.mxu0 %v896
  %v2557 = vpop.f32.mrf.mxu0
  %v2558 = vadd.f32 %v2461, %v2557
  %v2559 = vpop.f32.mrf.mxu0
  %v2560 = vpop.f32.mrf.mxu0
  %v2561 = vadd.f32 %v2464, %v2560
  %v2562 = vpop.f32.mrf.mxu0
  %2563 = vmatprep.mubr.bf16.mxu0 %v915
  %2564 = vmatmul.mubr.bf16.gmra.mxu0 %v914
  %v2565 = vpop.f32.mrf.mxu0
  %v2566 = vadd.f32 %v2469, %v2565
  %v2567 = vpop.f32.mrf.mxu0
  %v2568 = vpop.f32.mrf.mxu0
  %v2569 = vadd.f32 %v2472, %v2568
  %v2570 = vpop.f32.mrf.mxu0
  %2571 = vmatprep.mubr.bf16.mxu0 %v933
  %2572 = vmatmul.mubr.bf16.gmra.mxu0 %v932
  %v2573 = vpop.f32.mrf.mxu0
  %v2574 = vadd.f32 %v2477, %v2573
  %v2575 = vpop.f32.mrf.mxu0
  %v2576 = vpop.f32.mrf.mxu0
  %v2577 = vadd.f32 %v2480, %v2576
  %v2578 = vpop.f32.mrf.mxu0
  %2579 = vmatprep.mubr.bf16.mxu0 %v951
  %2580 = vmatmul.mubr.bf16.gmra.mxu0 %v950
  %v2581 = vpop.f32.mrf.mxu0
  %v2582 = vadd.f32 %v2485, %v2581
  %v2583 = vpop.f32.mrf.mxu0
  %v2584 = vpop.f32.mrf.mxu0
  %v2585 = vadd.f32 %v2488, %v2584
  %v2586 = vpop.f32.mrf.mxu0
  %2587 = vmatprep.mubr.bf16.mxu0 %v969
  %2588 = vmatmul.mubr.bf16.gmra.mxu0 %v968
  %v2589 = vpop.f32.mrf.mxu0
  %v2590 = vadd.f32 %v2493, %v2589
  %v2591 = vpop.f32.mrf.mxu0
  %v2592 = vpop.f32.mrf.mxu0
  %v2593 = vadd.f32 %v2496, %v2592
  %v2594 = vpop.f32.mrf.mxu0
  %2595 = vmatprep.mubr.bf16.mxu0 %v987
  %2596 = vmatmul.mubr.bf16.gmra.mxu0 %v986
  %v2597 = vpop.f32.mrf.mxu0
  %v2598 = vadd.f32 %v2501, %v2597
  %v2599 = vpop.f32.mrf.mxu0
  %v2600 = vpop.f32.mrf.mxu0
  %v2601 = vadd.f32 %v2504, %v2600
  %v2602 = vpop.f32.mrf.mxu0
  %2603 = vmatprep.mubr.bf16.mxu0 %v1005
  %2604 = vmatmul.mubr.bf16.gmra.mxu0 %v1004
  %v2605 = vpop.f32.mrf.mxu0
  %v2606 = vadd.f32 %v2509, %v2605
  %v2607 = vpop.f32.mrf.mxu0
  %v2608 = vpop.f32.mrf.mxu0
  %v2609 = vadd.f32 %v2512, %v2608
  %v2610 = vpop.f32.mrf.mxu0
  %2611 = vmatprep.mubr.bf16.mxu0 %v1023
  %2612 = vmatmul.mubr.bf16.gmra.mxu0 %v1022
  %v2613 = vpop.f32.mrf.mxu0
  %v2614 = vadd.f32 %v2517, %v2613
  %v2615 = vpop.f32.mrf.mxu0
  %v2616 = vpop.f32.mrf.mxu0
  %v2617 = vadd.f32 %v2520, %v2616
  %v2618 = vpop.f32.mrf.mxu0
  %2619 = vdwg.mxu0
  %2620 = vmatprep.subr.bf16.mxu0 0
  %2621 = vmatpush1.bf16.msra.mxu0 %v1853
  %2622 = vmatprep.subr.bf16.mxu0 0
  %2623 = vmatpush1.bf16.msra.mxu0 %v1852
  %2624 = vmatprep.subr.bf16.mxu0 0
  %2625 = vmatpush1.bf16.msra.mxu0 %v1851
  %2626 = vmatprep.subr.bf16.mxu0 0
  %2627 = vmatpush1.bf16.msra.mxu0 %v1850
  %2628 = vmatprep.subr.bf16.mxu0 0
  %2629 = vmatpush1.bf16.msra.mxu0 %v1849
  %2630 = vmatprep.subr.bf16.mxu0 0
  %2631 = vmatpush1.bf16.msra.mxu0 %v1848
  %2632 = vmatprep.subr.bf16.mxu0 0
  %2633 = vmatpush1.bf16.msra.mxu0 %v1847
  %2634 = vmatprep.subr.bf16.mxu0 0
  %2635 = vmatpush1.bf16.msra.mxu0 %v1846
  %2636 = vmatprep.subr.bf16.mxu0 0
  %2637 = vmatpush2.bf16.msra.mxu0 %v1861
  %2638 = vmatprep.subr.bf16.mxu0 0
  %2639 = vmatpush2.bf16.msra.mxu0 %v1860
  %2640 = vmatprep.subr.bf16.mxu0 0
  %2641 = vmatpush2.bf16.msra.mxu0 %v1859
  %2642 = vmatprep.subr.bf16.mxu0 0
  %2643 = vmatpush2.bf16.msra.mxu0 %v1858
  %2644 = vmatprep.subr.bf16.mxu0 0
  %2645 = vmatpush2.bf16.msra.mxu0 %v1857
  %2646 = vmatprep.subr.bf16.mxu0 0
  %2647 = vmatpush2.bf16.msra.mxu0 %v1856
  %2648 = vmatprep.subr.bf16.mxu0 0
  %2649 = vmatpush2.bf16.msra.mxu0 %v1855
  %2650 = vmatprep.subr.bf16.mxu0 0
  %2651 = vmatpush2.bf16.msra.mxu0 %v1854
  %2652 = vmatprep.mubr.bf16.mxu0 %v899
  %2653 = vmatmul.mubr.bf16.gmra.mxu0 %v898
  %v2654 = vpop.f32.mrf.mxu0
  %v2655 = vadd.f32 %v2558, %v2654
  %v2656 = vpop.f32.mrf.mxu0
  %v2657 = vpop.f32.mrf.mxu0
  %v2658 = vadd.f32 %v2561, %v2657
  %v2659 = vpop.f32.mrf.mxu0
  %2660 = vmatprep.mubr.bf16.mxu0 %v917
  %2661 = vmatmul.mubr.bf16.gmra.mxu0 %v916
  %v2662 = vpop.f32.mrf.mxu0
  %v2663 = vadd.f32 %v2566, %v2662
  %v2664 = vpop.f32.mrf.mxu0
  %v2665 = vpop.f32.mrf.mxu0
  %v2666 = vadd.f32 %v2569, %v2665
  %v2667 = vpop.f32.mrf.mxu0
  %2668 = vmatprep.mubr.bf16.mxu0 %v935
  %2669 = vmatmul.mubr.bf16.gmra.mxu0 %v934
  %v2670 = vpop.f32.mrf.mxu0
  %v2671 = vadd.f32 %v2574, %v2670
  %v2672 = vpop.f32.mrf.mxu0
  %v2673 = vpop.f32.mrf.mxu0
  %v2674 = vadd.f32 %v2577, %v2673
  %v2675 = vpop.f32.mrf.mxu0
  %2676 = vmatprep.mubr.bf16.mxu0 %v953
  %2677 = vmatmul.mubr.bf16.gmra.mxu0 %v952
  %v2678 = vpop.f32.mrf.mxu0
  %v2679 = vadd.f32 %v2582, %v2678
  %v2680 = vpop.f32.mrf.mxu0
  %v2681 = vpop.f32.mrf.mxu0
  %v2682 = vadd.f32 %v2585, %v2681
  %v2683 = vpop.f32.mrf.mxu0
  %2684 = vmatprep.mubr.bf16.mxu0 %v971
  %2685 = vmatmul.mubr.bf16.gmra.mxu0 %v970
  %v2686 = vpop.f32.mrf.mxu0
  %v2687 = vadd.f32 %v2590, %v2686
  %v2688 = vpop.f32.mrf.mxu0
  %v2689 = vpop.f32.mrf.mxu0
  %v2690 = vadd.f32 %v2593, %v2689
  %v2691 = vpop.f32.mrf.mxu0
  %2692 = vmatprep.mubr.bf16.mxu0 %v989
  %2693 = vmatmul.mubr.bf16.gmra.mxu0 %v988
  %v2694 = vpop.f32.mrf.mxu0
  %v2695 = vadd.f32 %v2598, %v2694
  %v2696 = vpop.f32.mrf.mxu0
  %v2697 = vpop.f32.mrf.mxu0
  %v2698 = vadd.f32 %v2601, %v2697
  %v2699 = vpop.f32.mrf.mxu0
  %2700 = vmatprep.mubr.bf16.mxu0 %v1007
  %2701 = vmatmul.mubr.bf16.gmra.mxu0 %v1006
  %v2702 = vpop.f32.mrf.mxu0
  %v2703 = vadd.f32 %v2606, %v2702
  %v2704 = vpop.f32.mrf.mxu0
  %v2705 = vpop.f32.mrf.mxu0
  %v2706 = vadd.f32 %v2609, %v2705
  %v2707 = vpop.f32.mrf.mxu0
  %2708 = vmatprep.mubr.bf16.mxu0 %v1025
  %2709 = vmatmul.mubr.bf16.gmra.mxu0 %v1024
  %v2710 = vpop.f32.mrf.mxu0
  %v2711 = vadd.f32 %v2614, %v2710
  %v2712 = vpop.f32.mrf.mxu0
  %v2713 = vpop.f32.mrf.mxu0
  %v2714 = vadd.f32 %v2617, %v2713
  %v2715 = vpop.f32.mrf.mxu0
  %2716 = vdwg.mxu0
  %2717 = vmatprep.subr.bf16.mxu0 0
  %2718 = vmatpush1.bf16.msra.mxu0 %v1869
  %2719 = vmatprep.subr.bf16.mxu0 0
  %2720 = vmatpush1.bf16.msra.mxu0 %v1868
  %2721 = vmatprep.subr.bf16.mxu0 0
  %2722 = vmatpush1.bf16.msra.mxu0 %v1867
  %2723 = vmatprep.subr.bf16.mxu0 0
  %2724 = vmatpush1.bf16.msra.mxu0 %v1866
  %2725 = vmatprep.subr.bf16.mxu0 0
  %2726 = vmatpush1.bf16.msra.mxu0 %v1865
  %2727 = vmatprep.subr.bf16.mxu0 0
  %2728 = vmatpush1.bf16.msra.mxu0 %v1864
  %2729 = vmatprep.subr.bf16.mxu0 0
  %2730 = vmatpush1.bf16.msra.mxu0 %v1863
  %2731 = vmatprep.subr.bf16.mxu0 0
  %2732 = vmatpush1.bf16.msra.mxu0 %v1862
  %2733 = vmatprep.subr.bf16.mxu0 0
  %2734 = vmatpush2.bf16.msra.mxu0 %v1877
  %2735 = vmatprep.subr.bf16.mxu0 0
  %2736 = vmatpush2.bf16.msra.mxu0 %v1876
  %2737 = vmatprep.subr.bf16.mxu0 0
  %2738 = vmatpush2.bf16.msra.mxu0 %v1875
  %2739 = vmatprep.subr.bf16.mxu0 0
  %2740 = vmatpush2.bf16.msra.mxu0 %v1874
  %2741 = vmatprep.subr.bf16.mxu0 0
  %2742 = vmatpush2.bf16.msra.mxu0 %v1873
  %2743 = vmatprep.subr.bf16.mxu0 0
  %2744 = vmatpush2.bf16.msra.mxu0 %v1872
  %2745 = vmatprep.subr.bf16.mxu0 0
  %2746 = vmatpush2.bf16.msra.mxu0 %v1871
  %2747 = vmatprep.subr.bf16.mxu0 0
  %2748 = vmatpush2.bf16.msra.mxu0 %v1870
  %2749 = vmatprep.mubr.bf16.mxu0 %v901
  %2750 = vmatmul.mubr.bf16.gmra.mxu0 %v900
  %v2751 = vpop.f32.mrf.mxu0
  %v2752 = vadd.f32 %v2655, %v2751
  %v2753 = vpop.f32.mrf.mxu0
  %v2754 = vpop.f32.mrf.mxu0
  %v2755 = vadd.f32 %v2658, %v2754
  %v2756 = vpop.f32.mrf.mxu0
  %2757 = vmatprep.mubr.bf16.mxu0 %v919
  %2758 = vmatmul.mubr.bf16.gmra.mxu0 %v918
  %v2759 = vpop.f32.mrf.mxu0
  %v2760 = vadd.f32 %v2663, %v2759
  %v2761 = vpop.f32.mrf.mxu0
  %v2762 = vpop.f32.mrf.mxu0
  %v2763 = vadd.f32 %v2666, %v2762
  %v2764 = vpop.f32.mrf.mxu0
  %2765 = vmatprep.mubr.bf16.mxu0 %v937
  %2766 = vmatmul.mubr.bf16.gmra.mxu0 %v936
  %v2767 = vpop.f32.mrf.mxu0
  %v2768 = vadd.f32 %v2671, %v2767
  %v2769 = vpop.f32.mrf.mxu0
  %v2770 = vpop.f32.mrf.mxu0
  %v2771 = vadd.f32 %v2674, %v2770
  %v2772 = vpop.f32.mrf.mxu0
  %2773 = vmatprep.mubr.bf16.mxu0 %v955
  %2774 = vmatmul.mubr.bf16.gmra.mxu0 %v954
  %v2775 = vpop.f32.mrf.mxu0
  %v2776 = vadd.f32 %v2679, %v2775
  %v2777 = vpop.f32.mrf.mxu0
  %v2778 = vpop.f32.mrf.mxu0
  %v2779 = vadd.f32 %v2682, %v2778
  %v2780 = vpop.f32.mrf.mxu0
  %2781 = vmatprep.mubr.bf16.mxu0 %v973
  %2782 = vmatmul.mubr.bf16.gmra.mxu0 %v972
  %v2783 = vpop.f32.mrf.mxu0
  %v2784 = vadd.f32 %v2687, %v2783
  %v2785 = vpop.f32.mrf.mxu0
  %v2786 = vpop.f32.mrf.mxu0
  %v2787 = vadd.f32 %v2690, %v2786
  %v2788 = vpop.f32.mrf.mxu0
  %2789 = vmatprep.mubr.bf16.mxu0 %v991
  %2790 = vmatmul.mubr.bf16.gmra.mxu0 %v990
  %v2791 = vpop.f32.mrf.mxu0
  %v2792 = vadd.f32 %v2695, %v2791
  %v2793 = vpop.f32.mrf.mxu0
  %v2794 = vpop.f32.mrf.mxu0
  %v2795 = vadd.f32 %v2698, %v2794
  %v2796 = vpop.f32.mrf.mxu0
  %2797 = vmatprep.mubr.bf16.mxu0 %v1009
  %2798 = vmatmul.mubr.bf16.gmra.mxu0 %v1008
  %v2799 = vpop.f32.mrf.mxu0
  %v2800 = vadd.f32 %v2703, %v2799
  %v2801 = vpop.f32.mrf.mxu0
  %v2802 = vpop.f32.mrf.mxu0
  %v2803 = vadd.f32 %v2706, %v2802
  %v2804 = vpop.f32.mrf.mxu0
  %2805 = vmatprep.mubr.bf16.mxu0 %v1027
  %2806 = vmatmul.mubr.bf16.gmra.mxu0 %v1026
  %v2807 = vpop.f32.mrf.mxu0
  %v2808 = vadd.f32 %v2711, %v2807
  %v2809 = vpop.f32.mrf.mxu0
  %v2810 = vpop.f32.mrf.mxu0
  %v2811 = vadd.f32 %v2714, %v2810
  %v2812 = vpop.f32.mrf.mxu0
  %2813 = vdwg.mxu0
  %2814 = vmatprep.subr.bf16.mxu0 0
  %2815 = vmatpush1.bf16.msra.mxu0 %v1885
  %2816 = vmatprep.subr.bf16.mxu0 0
  %2817 = vmatpush1.bf16.msra.mxu0 %v1884
  %2818 = vmatprep.subr.bf16.mxu0 0
  %2819 = vmatpush1.bf16.msra.mxu0 %v1883
  %2820 = vmatprep.subr.bf16.mxu0 0
  %2821 = vmatpush1.bf16.msra.mxu0 %v1882
  %2822 = vmatprep.subr.bf16.mxu0 0
  %2823 = vmatpush1.bf16.msra.mxu0 %v1881
  %2824 = vmatprep.subr.bf16.mxu0 0
  %2825 = vmatpush1.bf16.msra.mxu0 %v1880
  %2826 = vmatprep.subr.bf16.mxu0 0
  %2827 = vmatpush1.bf16.msra.mxu0 %v1879
  %2828 = vmatprep.subr.bf16.mxu0 0
  %2829 = vmatpush1.bf16.msra.mxu0 %v1878
  %2830 = vmatprep.subr.bf16.mxu0 0
  %2831 = vmatpush2.bf16.msra.mxu0 %v1893
  %2832 = vmatprep.subr.bf16.mxu0 0
  %2833 = vmatpush2.bf16.msra.mxu0 %v1892
  %2834 = vmatprep.subr.bf16.mxu0 0
  %2835 = vmatpush2.bf16.msra.mxu0 %v1891
  %2836 = vmatprep.subr.bf16.mxu0 0
  %2837 = vmatpush2.bf16.msra.mxu0 %v1890
  %2838 = vmatprep.subr.bf16.mxu0 0
  %2839 = vmatpush2.bf16.msra.mxu0 %v1889
  %2840 = vmatprep.subr.bf16.mxu0 0
  %2841 = vmatpush2.bf16.msra.mxu0 %v1888
  %2842 = vmatprep.subr.bf16.mxu0 0
  %2843 = vmatpush2.bf16.msra.mxu0 %v1887
  %2844 = vmatprep.subr.bf16.mxu0 0
  %2845 = vmatpush2.bf16.msra.mxu0 %v1886
  %2846 = vmatprep.mubr.bf16.mxu0 %v903
  %2847 = vmatmul.mubr.bf16.gmra.mxu0 %v902
  %v2848 = vpop.f32.mrf.mxu0
  %v2849 = vadd.f32 %v2752, %v2848
  %v2850 = vpop.f32.mrf.mxu0
  %v2851 = vpop.f32.mrf.mxu0
  %v2852 = vadd.f32 %v2755, %v2851
  %v2853 = vpop.f32.mrf.mxu0
  %2854 = vmatprep.mubr.bf16.mxu0 %v921
  %2855 = vmatmul.mubr.bf16.gmra.mxu0 %v920
  %v2856 = vpop.f32.mrf.mxu0
  %v2857 = vadd.f32 %v2760, %v2856
  %v2858 = vpop.f32.mrf.mxu0
  %v2859 = vpop.f32.mrf.mxu0
  %v2860 = vadd.f32 %v2763, %v2859
  %v2861 = vpop.f32.mrf.mxu0
  %2862 = vmatprep.mubr.bf16.mxu0 %v939
  %2863 = vmatmul.mubr.bf16.gmra.mxu0 %v938
  %v2864 = vpop.f32.mrf.mxu0
  %v2865 = vadd.f32 %v2768, %v2864
  %v2866 = vpop.f32.mrf.mxu0
  %v2867 = vpop.f32.mrf.mxu0
  %v2868 = vadd.f32 %v2771, %v2867
  %v2869 = vpop.f32.mrf.mxu0
  %2870 = vmatprep.mubr.bf16.mxu0 %v957
  %2871 = vmatmul.mubr.bf16.gmra.mxu0 %v956
  %v2872 = vpop.f32.mrf.mxu0
  %v2873 = vadd.f32 %v2776, %v2872
  %v2874 = vpop.f32.mrf.mxu0
  %v2875 = vpop.f32.mrf.mxu0
  %v2876 = vadd.f32 %v2779, %v2875
  %v2877 = vpop.f32.mrf.mxu0
  %2878 = vmatprep.mubr.bf16.mxu0 %v975
  %2879 = vmatmul.mubr.bf16.gmra.mxu0 %v974
  %v2880 = vpop.f32.mrf.mxu0
  %v2881 = vadd.f32 %v2784, %v2880
  %v2882 = vpop.f32.mrf.mxu0
  %v2883 = vpop.f32.mrf.mxu0
  %v2884 = vadd.f32 %v2787, %v2883
  %v2885 = vpop.f32.mrf.mxu0
  %2886 = vmatprep.mubr.bf16.mxu0 %v993
  %2887 = vmatmul.mubr.bf16.gmra.mxu0 %v992
  %v2888 = vpop.f32.mrf.mxu0
  %v2889 = vadd.f32 %v2792, %v2888
  %v2890 = vpop.f32.mrf.mxu0
  %v2891 = vpop.f32.mrf.mxu0
  %v2892 = vadd.f32 %v2795, %v2891
  %v2893 = vpop.f32.mrf.mxu0
  %2894 = vmatprep.mubr.bf16.mxu0 %v1011
  %2895 = vmatmul.mubr.bf16.gmra.mxu0 %v1010
  %v2896 = vpop.f32.mrf.mxu0
  %v2897 = vadd.f32 %v2800, %v2896
  %v2898 = vpop.f32.mrf.mxu0
  %v2899 = vpop.f32.mrf.mxu0
  %v2900 = vadd.f32 %v2803, %v2899
  %v2901 = vpop.f32.mrf.mxu0
  %2902 = vmatprep.mubr.bf16.mxu0 %v1029
  %2903 = vmatmul.mubr.bf16.gmra.mxu0 %v1028
  %v2904 = vpop.f32.mrf.mxu0
  %v2905 = vadd.f32 %v2808, %v2904
  %v2906 = vpop.f32.mrf.mxu0
  %v2907 = vpop.f32.mrf.mxu0
  %v2908 = vadd.f32 %v2811, %v2907
  %v2909 = vpop.f32.mrf.mxu0
  %2910 = vdwg.mxu0
  %v2911 = vmax.f32 %v2849, 0.0
  %v2912 = vmax.f32 %v2852, 0.0
  %v2913 = vmax.f32 %v2857, 0.0
  %v2914 = vmax.f32 %v2860, 0.0
  %v2915 = vmax.f32 %v2865, 0.0
  %v2916 = vmax.f32 %v2868, 0.0
  %v2917 = vmax.f32 %v2873, 0.0
  %v2918 = vmax.f32 %v2876, 0.0
  %v2919 = vmax.f32 %v2881, 0.0
  %v2920 = vmax.f32 %v2884, 0.0
  %v2921 = vmax.f32 %v2889, 0.0
  %v2922 = vmax.f32 %v2892, 0.0
  %v2923 = vmax.f32 %v2897, 0.0
  %v2924 = vmax.f32 %v2900, 0.0
  %v2925 = vmax.f32 %v2905, 0.0
  %v2926 = vmax.f32 %v2908, 0.0
  %2927 = vst [vmem:[%s3] sm:$0xff] %v2911
  %2928 = vst [vmem:[%s3 + $0x8] sm:$0xff] %v2912
  %2929 = vst [vmem:[%s3 + $0x10] sm:$0xff] %v2913
  %2930 = vst [vmem:[%s3 + $0x18] sm:$0xff] %v2914
  %2931 = vst [vmem:[%s3 + $0x20] sm:$0xff] %v2915
  %2932 = vst [vmem:[%s3 + $0x28] sm:$0xff] %v2916
  %2933 = vst [vmem:[%s3 + $0x30] sm:$0xff] %v2917
  %2934 = vst [vmem:[%s3 + $0x38] sm:$0xff] %v2918
  %2935 = vst [vmem:[%s3 + $0x40] sm:$0xff] %v2919
  %2936 = vst [vmem:[%s3 + $0x48] sm:$0xff] %v2920
  %2937 = vst [vmem:[%s3 + $0x50] sm:$0xff] %v2921
  %2938 = vst [vmem:[%s3 + $0x58] sm:$0xff] %v2922
  %2939 = vst [vmem:[%s3 + $0x60] sm:$0xff] %v2923
  %2940 = vst [vmem:[%s3 + $0x68] sm:$0xff] %v2924
  %2941 = vst [vmem:[%s3 + $0x70] sm:$0xff] %v2925
  %2942 = vst [vmem:[%s3 + $0x78] sm:$0xff] %v2926
  // Predicated region
  $region14: #{basic_model_forward.5} parent=0 // pred_check
    _
  $region15: #{basic_model_forward.5} parent=0 // pred_check_branch
    %2944 = sbr.rel (0) target = $region17
  $region16: #{basic_model_forward.5} parent=0 // pred_region
    _
  $region17: #{basic_model_forward.5} parent=0 // pred_fallthru
    _
  // Predicated region
  $region18: #{basic_model_forward.5} parent=0 // pred_check
    _
  $region19: #{basic_model_forward.5} parent=0 // pred_check_branch
    %2946 = sbr.rel (0) target = $region21
  $region20: #{basic_model_forward.5} parent=0 // pred_region
    _
  $region21: #{basic_model_forward.5} parent=0 // pred_fallthru
    _

// kernel: basic_model_forward.6
$region0: #{basic_model_forward.6}
  #allocation0 [shape = 'u32[]', space=smem, size = 0x4, offset = 0x4, fixed_abs, tag = 'smem constant byte address 0x4 - core index']
  #allocation1 [shape = 'u32[144,128]{1,0:T(1,128)}', space=vmem, size = 0x12000, scoped, tag = 'internal scratch']
  %s0 = inlined_call_operand.vmem [shape: bf16[32,3200], index: 0, kind: input, shape index: {}]
  %s1 = inlined_call_operand.vmem [shape: bf16[3200,128], index: 1, kind: input, shape index: {}]
  %s2 = inlined_call_operand.vmem [shape: f32[1,128], index: 2, kind: input, shape index: {}]
  %s3 = inlined_call_operand.vmem [shape: f32[32,128], index: 3, kind: output, shape index: {}]
  %s4 = sld [smem:[#allocation0]]
  $region22: #{basic_model_forward.6} parent=0
    _
  %s6 = ssub.s32 1, %s4
  %s7 = scalar_select 0, %s6, %s4
  // Predicated region
  $region2: #{basic_model_forward.6} parent=0 // pred_check
    _
  $region3: #{basic_model_forward.6} parent=0 // pred_check_branch
    %9 = sbr.rel (0) target = $region5
  $region4: #{basic_model_forward.6} parent=0 // pred_region
    _
  $region5: #{basic_model_forward.6} parent=0 // pred_fallthru
    _
  // Predicated region
  $region6: #{basic_model_forward.6} parent=0 // pred_check
    _
  $region7: #{basic_model_forward.6} parent=0 // pred_check_branch
    %11 = sbr.rel (0) target = $region9
  $region8: #{basic_model_forward.6} parent=0 // pred_region
    _
  $region9: #{basic_model_forward.6} parent=0 // pred_fallthru
    _
  // Predicated region
  $region10: #{basic_model_forward.6} parent=0 // pred_check
    _
  $region11: #{basic_model_forward.6} parent=0 // pred_check_branch
    %13 = sbr.rel (0) target = $region13
  $region12: #{basic_model_forward.6} parent=0 // pred_region
    _
  $region13: #{basic_model_forward.6} parent=0 // pred_fallthru
    _
  %v15 = vld [vmem:[%s0] sm:$0xff]
  %v16 = vld [vmem:[%s0 + $0x8] sm:$0xff]
  %v17 = vld [vmem:[%s0 + $0x10] sm:$0xff]
  %v18 = vld [vmem:[%s0 + $0x18] sm:$0xff]
  %v19 = vld [vmem:[%s0 + $0x20] sm:$0xff]
  %v20 = vld [vmem:[%s0 + $0x28] sm:$0xff]
  %v21 = vld [vmem:[%s0 + $0x30] sm:$0xff]
  %v22 = vld [vmem:[%s0 + $0x38] sm:$0xff]
  %v23 = vld [vmem:[%s0 + $0x40] sm:$0xff]
  %v24 = vld [vmem:[%s0 + $0x48] sm:$0xff]
  %v25 = vld [vmem:[%s0 + $0x50] sm:$0xff]
  %v26 = vld [vmem:[%s0 + $0x58] sm:$0xff]
  %v27 = vld [vmem:[%s0 + $0x60] sm:$0xf]
  %v28 = vld [vmem:[%s0 + $0x64] sm:$0xff]
  %v29 = vld [vmem:[%s0 + $0x6c] sm:$0xff]
  %v30 = vld [vmem:[%s0 + $0x74] sm:$0xff]
  %v31 = vld [vmem:[%s0 + $0x7c] sm:$0xff]
  %v32 = vld [vmem:[%s0 + $0x84] sm:$0xff]
  %v33 = vld [vmem:[%s0 + $0x8c] sm:$0xff]
  %v34 = vld [vmem:[%s0 + $0x94] sm:$0xff]
  %v35 = vld [vmem:[%s0 + $0x9c] sm:$0xff]
  %v36 = vld [vmem:[%s0 + $0xa4] sm:$0xff]
  %v37 = vld [vmem:[%s0 + $0xac] sm:$0xff]
  %v38 = vld [vmem:[%s0 + $0xb4] sm:$0xff]
  %v39 = vld [vmem:[%s0 + $0xbc] sm:$0xff]
  %v40 = vld [vmem:[%s0 + $0xc4] sm:$0xf]
  %v41 = vld [vmem:[%s0 + $0xc8] sm:$0xff]
  %v42 = vld [vmem:[%s0 + $0xd0] sm:$0xff]
  %v43 = vld [vmem:[%s0 + $0xd8] sm:$0xff]
  %v44 = vld [vmem:[%s0 + $0xe0] sm:$0xff]
  %v45 = vld [vmem:[%s0 + $0xe8] sm:$0xff]
  %v46 = vld [vmem:[%s0 + $0xf0] sm:$0xff]
  %v47 = vld [vmem:[%s0 + $0xf8] sm:$0xff]
  %v48 = vld [vmem:[%s0 + $0x100] sm:$0xff]
  %v49 = vld [vmem:[%s0 + $0x108] sm:$0xff]
  %v50 = vld [vmem:[%s0 + $0x110] sm:$0xff]
  %v51 = vld [vmem:[%s0 + $0x118] sm:$0xff]
  %v52 = vld [vmem:[%s0 + $0x120] sm:$0xff]
  %v53 = vld [vmem:[%s0 + $0x128] sm:$0xf]
  %v54 = vld [vmem:[%s0 + $0x12c] sm:$0xff]
  %v55 = vld [vmem:[%s0 + $0x134] sm:$0xff]
  %v56 = vld [vmem:[%s0 + $0x13c] sm:$0xff]
  %v57 = vld [vmem:[%s0 + $0x144] sm:$0xff]
  %v58 = vld [vmem:[%s0 + $0x14c] sm:$0xff]
  %v59 = vld [vmem:[%s0 + $0x154] sm:$0xff]
  %v60 = vld [vmem:[%s0 + $0x15c] sm:$0xff]
  %v61 = vld [vmem:[%s0 + $0x164] sm:$0xff]
  %v62 = vld [vmem:[%s0 + $0x16c] sm:$0xff]
  %v63 = vld [vmem:[%s0 + $0x174] sm:$0xff]
  %v64 = vld [vmem:[%s0 + $0x17c] sm:$0xff]
  %v65 = vld [vmem:[%s0 + $0x184] sm:$0xff]
  %v66 = vld [vmem:[%s0 + $0x18c] sm:$0xf]
  %v67 = vld [vmem:[%s1] sm:$0xf]
  %v68 = vld [vmem:[%s1 + $0x4] sm:$0xf]
  %v69 = vld [vmem:[%s1 + $0x8] sm:$0xf]
  %v70 = vld [vmem:[%s1 + $0xc] sm:$0xf]
  %v71 = vld [vmem:[%s1 + $0x10] sm:$0xf]
  %v72 = vld [vmem:[%s1 + $0x14] sm:$0xf]
  %v73 = vld [vmem:[%s1 + $0x18] sm:$0xf]
  %v74 = vld [vmem:[%s1 + $0x1c] sm:$0xf]
  %v75 = vld [vmem:[%s1 + $0x20] sm:$0xf]
  %v76 = vld [vmem:[%s1 + $0x24] sm:$0xf]
  %v77 = vld [vmem:[%s1 + $0x28] sm:$0xf]
  %v78 = vld [vmem:[%s1 + $0x2c] sm:$0xf]
  %v79 = vld [vmem:[%s1 + $0x30] sm:$0xf]
  %v80 = vld [vmem:[%s1 + $0x34] sm:$0xf]
  %v81 = vld [vmem:[%s1 + $0x38] sm:$0xf]
  %v82 = vld [vmem:[%s1 + $0x3c] sm:$0xf]
  %v83 = vld [vmem:[%s1 + $0x40] sm:$0xf]
  %v84 = vld [vmem:[%s1 + $0x44] sm:$0xf]
  %v85 = vld [vmem:[%s1 + $0x48] sm:$0xf]
  %v86 = vld [vmem:[%s1 + $0x4c] sm:$0xf]
  %v87 = vld [vmem:[%s1 + $0x50] sm:$0xf]
  %v88 = vld [vmem:[%s1 + $0x54] sm:$0xf]
  %v89 = vld [vmem:[%s1 + $0x58] sm:$0xf]
  %v90 = vld [vmem:[%s1 + $0x5c] sm:$0xf]
  %v91 = vld [vmem:[%s1 + $0x60] sm:$0xf]
  %v92 = vld [vmem:[%s1 + $0x64] sm:$0xf]
  %v93 = vld [vmem:[%s1 + $0x68] sm:$0xf]
  %v94 = vld [vmem:[%s1 + $0x6c] sm:$0xf]
  %v95 = vld [vmem:[%s1 + $0x70] sm:$0xf]
  %v96 = vld [vmem:[%s1 + $0x74] sm:$0xf]
  %v97 = vld [vmem:[%s1 + $0x78] sm:$0xf]
  %v98 = vld [vmem:[%s1 + $0x7c] sm:$0xf]
  %v99 = vld [vmem:[%s1 + $0x80] sm:$0xf]
  %v100 = vld [vmem:[%s1 + $0x84] sm:$0xf]
  %v101 = vld [vmem:[%s1 + $0x88] sm:$0xf]
  %v102 = vld [vmem:[%s1 + $0x8c] sm:$0xf]
  %v103 = vld [vmem:[%s1 + $0x90] sm:$0xf]
  %v104 = vld [vmem:[%s1 + $0x94] sm:$0xf]
  %v105 = vld [vmem:[%s1 + $0x98] sm:$0xf]
  %v106 = vld [vmem:[%s1 + $0x9c] sm:$0xf]
  %v107 = vld [vmem:[%s1 + $0xa0] sm:$0xf]
  %v108 = vld [vmem:[%s1 + $0xa4] sm:$0xf]
  %v109 = vld [vmem:[%s1 + $0xa8] sm:$0xf]
  %v110 = vld [vmem:[%s1 + $0xac] sm:$0xf]
  %v111 = vld [vmem:[%s1 + $0xb0] sm:$0xf]
  %v112 = vld [vmem:[%s1 + $0xb4] sm:$0xf]
  %v113 = vld [vmem:[%s1 + $0xb8] sm:$0xf]
  %v114 = vld [vmem:[%s1 + $0xbc] sm:$0xf]
  %v115 = vld [vmem:[%s1 + $0xc0] sm:$0xf]
  %v116 = vld [vmem:[%s1 + $0xc4] sm:$0xf]
  %v117 = vld [vmem:[%s1 + $0xc8] sm:$0xf]
  %v118 = vld [vmem:[%s1 + $0xcc] sm:$0xf]
  %v119 = vld [vmem:[%s1 + $0xd0] sm:$0xf]
  %v120 = vld [vmem:[%s1 + $0xd4] sm:$0xf]
  %v121 = vld [vmem:[%s1 + $0xd8] sm:$0xf]
  %v122 = vld [vmem:[%s1 + $0xdc] sm:$0xf]
  %v123 = vld [vmem:[%s1 + $0xe0] sm:$0xf]
  %v124 = vld [vmem:[%s1 + $0xe4] sm:$0xf]
  %v125 = vld [vmem:[%s1 + $0xe8] sm:$0xf]
  %v126 = vld [vmem:[%s1 + $0xec] sm:$0xf]
  %v127 = vld [vmem:[%s1 + $0xf0] sm:$0xf]
  %v128 = vld [vmem:[%s1 + $0xf4] sm:$0xf]
  %v129 = vld [vmem:[%s1 + $0xf8] sm:$0xf]
  %v130 = vld [vmem:[%s1 + $0xfc] sm:$0xf]
  %v131 = vld [vmem:[%s1 + $0x100] sm:$0xf]
  %v132 = vld [vmem:[%s1 + $0x104] sm:$0xf]
  %v133 = vld [vmem:[%s1 + $0x108] sm:$0xf]
  %v134 = vld [vmem:[%s1 + $0x10c] sm:$0xf]
  %v135 = vld [vmem:[%s1 + $0x110] sm:$0xf]
  %v136 = vld [vmem:[%s1 + $0x114] sm:$0xf]
  %v137 = vld [vmem:[%s1 + $0x118] sm:$0xf]
  %v138 = vld [vmem:[%s1 + $0x11c] sm:$0xf]
  %v139 = vld [vmem:[%s1 + $0x120] sm:$0xf]
  %v140 = vld [vmem:[%s1 + $0x124] sm:$0xf]
  %v141 = vld [vmem:[%s1 + $0x128] sm:$0xf]
  %v142 = vld [vmem:[%s1 + $0x12c] sm:$0xf]
  %v143 = vld [vmem:[%s1 + $0x130] sm:$0xf]
  %v144 = vld [vmem:[%s1 + $0x134] sm:$0xf]
  %v145 = vld [vmem:[%s1 + $0x138] sm:$0xf]
  %v146 = vld [vmem:[%s1 + $0x13c] sm:$0xf]
  %v147 = vld [vmem:[%s1 + $0x140] sm:$0xf]
  %v148 = vld [vmem:[%s1 + $0x144] sm:$0xf]
  %v149 = vld [vmem:[%s1 + $0x148] sm:$0xf]
  %v150 = vld [vmem:[%s1 + $0x14c] sm:$0xf]
  %v151 = vld [vmem:[%s1 + $0x150] sm:$0xf]
  %v152 = vld [vmem:[%s1 + $0x154] sm:$0xf]
  %v153 = vld [vmem:[%s1 + $0x158] sm:$0xf]
  %v154 = vld [vmem:[%s1 + $0x15c] sm:$0xf]
  %v155 = vld [vmem:[%s1 + $0x160] sm:$0xf]
  %v156 = vld [vmem:[%s1 + $0x164] sm:$0xf]
  %v157 = vld [vmem:[%s1 + $0x168] sm:$0xf]
  %v158 = vld [vmem:[%s1 + $0x16c] sm:$0xf]
  %v159 = vld [vmem:[%s1 + $0x170] sm:$0xf]
  %v160 = vld [vmem:[%s1 + $0x174] sm:$0xf]
  %v161 = vld [vmem:[%s1 + $0x178] sm:$0xf]
  %v162 = vld [vmem:[%s1 + $0x17c] sm:$0xf]
  %v163 = vld [vmem:[%s1 + $0x180] sm:$0xf]
  %v164 = vld [vmem:[%s1 + $0x184] sm:$0xf]
  %v165 = vld [vmem:[%s1 + $0x188] sm:$0xf]
  %v166 = vld [vmem:[%s1 + $0x18c] sm:$0xf]
  %v167 = vld [vmem:[%s1 + $0x190] sm:$0xf]
  %v168 = vld [vmem:[%s1 + $0x194] sm:$0xf]
  %v169 = vld [vmem:[%s1 + $0x198] sm:$0xf]
  %v170 = vld [vmem:[%s1 + $0x19c] sm:$0xf]
  %v171 = vld [vmem:[%s1 + $0x1a0] sm:$0xf]
  %v172 = vld [vmem:[%s1 + $0x1a4] sm:$0xf]
  %v173 = vld [vmem:[%s1 + $0x1a8] sm:$0xf]
  %v174 = vld [vmem:[%s1 + $0x1ac] sm:$0xf]
  %v175 = vld [vmem:[%s1 + $0x1b0] sm:$0xf]
  %v176 = vld [vmem:[%s1 + $0x1b4] sm:$0xf]
  %v177 = vld [vmem:[%s1 + $0x1b8] sm:$0xf]
  %v178 = vld [vmem:[%s1 + $0x1bc] sm:$0xf]
  %v179 = vld [vmem:[%s1 + $0x1c0] sm:$0xf]
  %v180 = vld [vmem:[%s1 + $0x1c4] sm:$0xf]
  %v181 = vld [vmem:[%s1 + $0x1c8] sm:$0xf]
  %v182 = vld [vmem:[%s1 + $0x1cc] sm:$0xf]
  %v183 = vld [vmem:[%s1 + $0x1d0] sm:$0xf]
  %v184 = vld [vmem:[%s1 + $0x1d4] sm:$0xf]
  %v185 = vld [vmem:[%s1 + $0x1d8] sm:$0xf]
  %v186 = vld [vmem:[%s1 + $0x1dc] sm:$0xf]
  %v187 = vld [vmem:[%s1 + $0x1e0] sm:$0xf]
  %v188 = vld [vmem:[%s1 + $0x1e4] sm:$0xf]
  %v189 = vld [vmem:[%s1 + $0x1e8] sm:$0xf]
  %v190 = vld [vmem:[%s1 + $0x1ec] sm:$0xf]
  %v191 = vld [vmem:[%s1 + $0x1f0] sm:$0xf]
  %v192 = vld [vmem:[%s1 + $0x1f4] sm:$0xf]
  %v193 = vld [vmem:[%s1 + $0x1f8] sm:$0xf]
  %v194 = vld [vmem:[%s1 + $0x1fc] sm:$0xf]
  %v195 = vld [vmem:[%s1 + $0x200] sm:$0xf]
  %v196 = vld [vmem:[%s1 + $0x204] sm:$0xf]
  %v197 = vld [vmem:[%s1 + $0x208] sm:$0xf]
  %v198 = vld [vmem:[%s1 + $0x20c] sm:$0xf]
  %v199 = vld [vmem:[%s1 + $0x210] sm:$0xf]
  %v200 = vld [vmem:[%s1 + $0x214] sm:$0xf]
  %v201 = vld [vmem:[%s1 + $0x218] sm:$0xf]
  %v202 = vld [vmem:[%s1 + $0x21c] sm:$0xf]
  %v203 = vld [vmem:[%s1 + $0x220] sm:$0xf]
  %v204 = vld [vmem:[%s1 + $0x224] sm:$0xf]
  %v205 = vld [vmem:[%s1 + $0x228] sm:$0xf]
  %v206 = vld [vmem:[%s1 + $0x22c] sm:$0xf]
  %v207 = vld [vmem:[%s1 + $0x230] sm:$0xf]
  %v208 = vld [vmem:[%s1 + $0x234] sm:$0xf]
  %v209 = vld [vmem:[%s1 + $0x238] sm:$0xf]
  %v210 = vld [vmem:[%s1 + $0x23c] sm:$0xf]
  %v211 = vld [vmem:[%s1 + $0x240] sm:$0xf]
  %v212 = vld [vmem:[%s1 + $0x244] sm:$0xf]
  %v213 = vld [vmem:[%s1 + $0x248] sm:$0xf]
  %v214 = vld [vmem:[%s1 + $0x24c] sm:$0xf]
  %v215 = vld [vmem:[%s1 + $0x250] sm:$0xf]
  %v216 = vld [vmem:[%s1 + $0x254] sm:$0xf]
  %v217 = vld [vmem:[%s1 + $0x258] sm:$0xf]
  %v218 = vld [vmem:[%s1 + $0x25c] sm:$0xf]
  %v219 = vld [vmem:[%s1 + $0x260] sm:$0xf]
  %v220 = vld [vmem:[%s1 + $0x264] sm:$0xf]
  %v221 = vld [vmem:[%s1 + $0x268] sm:$0xf]
  %v222 = vld [vmem:[%s1 + $0x26c] sm:$0xf]
  %v223 = vld [vmem:[%s1 + $0x270] sm:$0xf]
  %v224 = vld [vmem:[%s1 + $0x274] sm:$0xf]
  %v225 = vld [vmem:[%s1 + $0x278] sm:$0xf]
  %v226 = vld [vmem:[%s1 + $0x27c] sm:$0xf]
  %v227 = vld [vmem:[%s1 + $0x280] sm:$0xf]
  %v228 = vld [vmem:[%s1 + $0x284] sm:$0xf]
  %v229 = vld [vmem:[%s1 + $0x288] sm:$0xf]
  %v230 = vld [vmem:[%s1 + $0x28c] sm:$0xf]
  %v231 = vld [vmem:[%s1 + $0x290] sm:$0xf]
  %v232 = vld [vmem:[%s1 + $0x294] sm:$0xf]
  %v233 = vld [vmem:[%s1 + $0x298] sm:$0xf]
  %v234 = vld [vmem:[%s1 + $0x29c] sm:$0xf]
  %v235 = vld [vmem:[%s1 + $0x2a0] sm:$0xf]
  %v236 = vld [vmem:[%s1 + $0x2a4] sm:$0xf]
  %v237 = vld [vmem:[%s1 + $0x2a8] sm:$0xf]
  %v238 = vld [vmem:[%s1 + $0x2ac] sm:$0xf]
  %v239 = vld [vmem:[%s1 + $0x2b0] sm:$0xf]
  %v240 = vld [vmem:[%s1 + $0x2b4] sm:$0xf]
  %v241 = vld [vmem:[%s1 + $0x2b8] sm:$0xf]
  %v242 = vld [vmem:[%s1 + $0x2bc] sm:$0xf]
  %v243 = vld [vmem:[%s1 + $0x2c0] sm:$0xf]
  %v244 = vld [vmem:[%s1 + $0x2c4] sm:$0xf]
  %v245 = vld [vmem:[%s1 + $0x2c8] sm:$0xf]
  %v246 = vld [vmem:[%s1 + $0x2cc] sm:$0xf]
  %v247 = vld [vmem:[%s1 + $0x2d0] sm:$0xf]
  %v248 = vld [vmem:[%s1 + $0x2d4] sm:$0xf]
  %v249 = vld [vmem:[%s1 + $0x2d8] sm:$0xf]
  %v250 = vld [vmem:[%s1 + $0x2dc] sm:$0xf]
  %v251 = vld [vmem:[%s1 + $0x2e0] sm:$0xf]
  %v252 = vld [vmem:[%s1 + $0x2e4] sm:$0xf]
  %v253 = vld [vmem:[%s1 + $0x2e8] sm:$0xf]
  %v254 = vld [vmem:[%s1 + $0x2ec] sm:$0xf]
  %v255 = vld [vmem:[%s1 + $0x2f0] sm:$0xf]
  %v256 = vld [vmem:[%s1 + $0x2f4] sm:$0xf]
  %v257 = vld [vmem:[%s1 + $0x2f8] sm:$0xf]
  %v258 = vld [vmem:[%s1 + $0x2fc] sm:$0xf]
  %v259 = vld [vmem:[%s1 + $0x300] sm:$0xf]
  %v260 = vld [vmem:[%s1 + $0x304] sm:$0xf]
  %v261 = vld [vmem:[%s1 + $0x308] sm:$0xf]
  %v262 = vld [vmem:[%s1 + $0x30c] sm:$0xf]
  %v263 = vld [vmem:[%s1 + $0x310] sm:$0xf]
  %v264 = vld [vmem:[%s1 + $0x314] sm:$0xf]
  %v265 = vld [vmem:[%s1 + $0x318] sm:$0xf]
  %v266 = vld [vmem:[%s1 + $0x31c] sm:$0xf]
  %v267 = vld [vmem:[%s1 + $0x320] sm:$0xf]
  %v268 = vld [vmem:[%s1 + $0x324] sm:$0xf]
  %v269 = vld [vmem:[%s1 + $0x328] sm:$0xf]
  %v270 = vld [vmem:[%s1 + $0x32c] sm:$0xf]
  %v271 = vld [vmem:[%s1 + $0x330] sm:$0xf]
  %v272 = vld [vmem:[%s1 + $0x334] sm:$0xf]
  %v273 = vld [vmem:[%s1 + $0x338] sm:$0xf]
  %v274 = vld [vmem:[%s1 + $0x33c] sm:$0xf]
  %v275 = vld [vmem:[%s1 + $0x340] sm:$0xf]
  %v276 = vld [vmem:[%s1 + $0x344] sm:$0xf]
  %v277 = vld [vmem:[%s1 + $0x348] sm:$0xf]
  %v278 = vld [vmem:[%s1 + $0x34c] sm:$0xf]
  %v279 = vld [vmem:[%s1 + $0x350] sm:$0xf]
  %v280 = vld [vmem:[%s1 + $0x354] sm:$0xf]
  %v281 = vld [vmem:[%s1 + $0x358] sm:$0xf]
  %v282 = vld [vmem:[%s1 + $0x35c] sm:$0xf]
  %v283 = vld [vmem:[%s1 + $0x360] sm:$0xf]
  %v284 = vld [vmem:[%s1 + $0x364] sm:$0xf]
  %v285 = vld [vmem:[%s1 + $0x368] sm:$0xf]
  %v286 = vld [vmem:[%s1 + $0x36c] sm:$0xf]
  %v287 = vld [vmem:[%s1 + $0x370] sm:$0xf]
  %v288 = vld [vmem:[%s1 + $0x374] sm:$0xf]
  %v289 = vld [vmem:[%s1 + $0x378] sm:$0xf]
  %v290 = vld [vmem:[%s1 + $0x37c] sm:$0xf]
  %v291 = vld [vmem:[%s1 + $0x380] sm:$0xf]
  %v292 = vld [vmem:[%s1 + $0x384] sm:$0xf]
  %v293 = vld [vmem:[%s1 + $0x388] sm:$0xf]
  %v294 = vld [vmem:[%s1 + $0x38c] sm:$0xf]
  %v295 = vld [vmem:[%s1 + $0x390] sm:$0xf]
  %v296 = vld [vmem:[%s1 + $0x394] sm:$0xf]
  %v297 = vld [vmem:[%s1 + $0x398] sm:$0xf]
  %v298 = vld [vmem:[%s1 + $0x39c] sm:$0xf]
  %v299 = vld [vmem:[%s1 + $0x3a0] sm:$0xf]
  %v300 = vld [vmem:[%s1 + $0x3a4] sm:$0xf]
  %v301 = vld [vmem:[%s1 + $0x3a8] sm:$0xf]
  %v302 = vld [vmem:[%s1 + $0x3ac] sm:$0xf]
  %v303 = vld [vmem:[%s1 + $0x3b0] sm:$0xf]
  %v304 = vld [vmem:[%s1 + $0x3b4] sm:$0xf]
  %v305 = vld [vmem:[%s1 + $0x3b8] sm:$0xf]
  %v306 = vld [vmem:[%s1 + $0x3bc] sm:$0xf]
  %v307 = vld [vmem:[%s1 + $0x3c0] sm:$0xf]
  %v308 = vld [vmem:[%s1 + $0x3c4] sm:$0xf]
  %v309 = vld [vmem:[%s1 + $0x3c8] sm:$0xf]
  %v310 = vld [vmem:[%s1 + $0x3cc] sm:$0xf]
  %v311 = vld [vmem:[%s1 + $0x3d0] sm:$0xf]
  %v312 = vld [vmem:[%s1 + $0x3d4] sm:$0xf]
  %v313 = vld [vmem:[%s1 + $0x3d8] sm:$0xf]
  %v314 = vld [vmem:[%s1 + $0x3dc] sm:$0xf]
  %v315 = vld [vmem:[%s1 + $0x3e0] sm:$0xf]
  %v316 = vld [vmem:[%s1 + $0x3e4] sm:$0xf]
  %v317 = vld [vmem:[%s1 + $0x3e8] sm:$0xf]
  %v318 = vld [vmem:[%s1 + $0x3ec] sm:$0xf]
  %v319 = vld [vmem:[%s1 + $0x3f0] sm:$0xf]
  %v320 = vld [vmem:[%s1 + $0x3f4] sm:$0xf]
  %v321 = vld [vmem:[%s1 + $0x3f8] sm:$0xf]
  %v322 = vld [vmem:[%s1 + $0x3fc] sm:$0xf]
  %v323 = vld [vmem:[%s1 + $0x400] sm:$0xf]
  %v324 = vld [vmem:[%s1 + $0x404] sm:$0xf]
  %v325 = vld [vmem:[%s1 + $0x408] sm:$0xf]
  %v326 = vld [vmem:[%s1 + $0x40c] sm:$0xf]
  %v327 = vld [vmem:[%s1 + $0x410] sm:$0xf]
  %v328 = vld [vmem:[%s1 + $0x414] sm:$0xf]
  %v329 = vld [vmem:[%s1 + $0x418] sm:$0xf]
  %v330 = vld [vmem:[%s1 + $0x41c] sm:$0xf]
  %v331 = vld [vmem:[%s1 + $0x420] sm:$0xf]
  %v332 = vld [vmem:[%s1 + $0x424] sm:$0xf]
  %v333 = vld [vmem:[%s1 + $0x428] sm:$0xf]
  %v334 = vld [vmem:[%s1 + $0x42c] sm:$0xf]
  %v335 = vld [vmem:[%s1 + $0x430] sm:$0xf]
  %v336 = vld [vmem:[%s1 + $0x434] sm:$0xf]
  %v337 = vld [vmem:[%s1 + $0x438] sm:$0xf]
  %v338 = vld [vmem:[%s1 + $0x43c] sm:$0xf]
  %v339 = vld [vmem:[%s1 + $0x440] sm:$0xf]
  %v340 = vld [vmem:[%s1 + $0x444] sm:$0xf]
  %v341 = vld [vmem:[%s1 + $0x448] sm:$0xf]
  %v342 = vld [vmem:[%s1 + $0x44c] sm:$0xf]
  %v343 = vld [vmem:[%s1 + $0x450] sm:$0xf]
  %v344 = vld [vmem:[%s1 + $0x454] sm:$0xf]
  %v345 = vld [vmem:[%s1 + $0x458] sm:$0xf]
  %v346 = vld [vmem:[%s1 + $0x45c] sm:$0xf]
  %v347 = vld [vmem:[%s1 + $0x460] sm:$0xf]
  %v348 = vld [vmem:[%s1 + $0x464] sm:$0xf]
  %v349 = vld [vmem:[%s1 + $0x468] sm:$0xf]
  %v350 = vld [vmem:[%s1 + $0x46c] sm:$0xf]
  %v351 = vld [vmem:[%s1 + $0x470] sm:$0xf]
  %v352 = vld [vmem:[%s1 + $0x474] sm:$0xf]
  %v353 = vld [vmem:[%s1 + $0x478] sm:$0xf]
  %v354 = vld [vmem:[%s1 + $0x47c] sm:$0xf]
  %v355 = vld [vmem:[%s1 + $0x480] sm:$0xf]
  %v356 = vld [vmem:[%s1 + $0x484] sm:$0xf]
  %v357 = vld [vmem:[%s1 + $0x488] sm:$0xf]
  %v358 = vld [vmem:[%s1 + $0x48c] sm:$0xf]
  %v359 = vld [vmem:[%s1 + $0x490] sm:$0xf]
  %v360 = vld [vmem:[%s1 + $0x494] sm:$0xf]
  %v361 = vld [vmem:[%s1 + $0x498] sm:$0xf]
  %v362 = vld [vmem:[%s1 + $0x49c] sm:$0xf]
  %v363 = vld [vmem:[%s1 + $0x4a0] sm:$0xf]
  %v364 = vld [vmem:[%s1 + $0x4a4] sm:$0xf]
  %v365 = vld [vmem:[%s1 + $0x4a8] sm:$0xf]
  %v366 = vld [vmem:[%s1 + $0x4ac] sm:$0xf]
  %v367 = vld [vmem:[%s1 + $0x4b0] sm:$0xf]
  %v368 = vld [vmem:[%s1 + $0x4b4] sm:$0xf]
  %v369 = vld [vmem:[%s1 + $0x4b8] sm:$0xf]
  %v370 = vld [vmem:[%s1 + $0x4bc] sm:$0xf]
  %v371 = vld [vmem:[%s1 + $0x4c0] sm:$0xf]
  %v372 = vld [vmem:[%s1 + $0x4c4] sm:$0xf]
  %v373 = vld [vmem:[%s1 + $0x4c8] sm:$0xf]
  %v374 = vld [vmem:[%s1 + $0x4cc] sm:$0xf]
  %v375 = vld [vmem:[%s1 + $0x4d0] sm:$0xf]
  %v376 = vld [vmem:[%s1 + $0x4d4] sm:$0xf]
  %v377 = vld [vmem:[%s1 + $0x4d8] sm:$0xf]
  %v378 = vld [vmem:[%s1 + $0x4dc] sm:$0xf]
  %v379 = vld [vmem:[%s1 + $0x4e0] sm:$0xf]
  %v380 = vld [vmem:[%s1 + $0x4e4] sm:$0xf]
  %v381 = vld [vmem:[%s1 + $0x4e8] sm:$0xf]
  %v382 = vld [vmem:[%s1 + $0x4ec] sm:$0xf]
  %v383 = vld [vmem:[%s1 + $0x4f0] sm:$0xf]
  %v384 = vld [vmem:[%s1 + $0x4f4] sm:$0xf]
  %v385 = vld [vmem:[%s1 + $0x4f8] sm:$0xf]
  %v386 = vld [vmem:[%s1 + $0x4fc] sm:$0xf]
  %v387 = vld [vmem:[%s1 + $0x500] sm:$0xf]
  %v388 = vld [vmem:[%s1 + $0x504] sm:$0xf]
  %v389 = vld [vmem:[%s1 + $0x508] sm:$0xf]
  %v390 = vld [vmem:[%s1 + $0x50c] sm:$0xf]
  %v391 = vld [vmem:[%s1 + $0x510] sm:$0xf]
  %v392 = vld [vmem:[%s1 + $0x514] sm:$0xf]
  %v393 = vld [vmem:[%s1 + $0x518] sm:$0xf]
  %v394 = vld [vmem:[%s1 + $0x51c] sm:$0xf]
  %v395 = vld [vmem:[%s1 + $0x520] sm:$0xf]
  %v396 = vld [vmem:[%s1 + $0x524] sm:$0xf]
  %v397 = vld [vmem:[%s1 + $0x528] sm:$0xf]
  %v398 = vld [vmem:[%s1 + $0x52c] sm:$0xf]
  %v399 = vld [vmem:[%s1 + $0x530] sm:$0xf]
  %v400 = vld [vmem:[%s1 + $0x534] sm:$0xf]
  %v401 = vld [vmem:[%s1 + $0x538] sm:$0xf]
  %v402 = vld [vmem:[%s1 + $0x53c] sm:$0xf]
  %v403 = vld [vmem:[%s1 + $0x540] sm:$0xf]
  %v404 = vld [vmem:[%s1 + $0x544] sm:$0xf]
  %v405 = vld [vmem:[%s1 + $0x548] sm:$0xf]
  %v406 = vld [vmem:[%s1 + $0x54c] sm:$0xf]
  %v407 = vld [vmem:[%s1 + $0x550] sm:$0xf]
  %v408 = vld [vmem:[%s1 + $0x554] sm:$0xf]
  %v409 = vld [vmem:[%s1 + $0x558] sm:$0xf]
  %v410 = vld [vmem:[%s1 + $0x55c] sm:$0xf]
  %v411 = vld [vmem:[%s1 + $0x560] sm:$0xf]
  %v412 = vld [vmem:[%s1 + $0x564] sm:$0xf]
  %v413 = vld [vmem:[%s1 + $0x568] sm:$0xf]
  %v414 = vld [vmem:[%s1 + $0x56c] sm:$0xf]
  %v415 = vld [vmem:[%s1 + $0x570] sm:$0xf]
  %v416 = vld [vmem:[%s1 + $0x574] sm:$0xf]
  %v417 = vld [vmem:[%s1 + $0x578] sm:$0xf]
  %v418 = vld [vmem:[%s1 + $0x57c] sm:$0xf]
  %v419 = vld [vmem:[%s1 + $0x580] sm:$0xf]
  %v420 = vld [vmem:[%s1 + $0x584] sm:$0xf]
  %v421 = vld [vmem:[%s1 + $0x588] sm:$0xf]
  %v422 = vld [vmem:[%s1 + $0x58c] sm:$0xf]
  %v423 = vld [vmem:[%s1 + $0x590] sm:$0xf]
  %v424 = vld [vmem:[%s1 + $0x594] sm:$0xf]
  %v425 = vld [vmem:[%s1 + $0x598] sm:$0xf]
  %v426 = vld [vmem:[%s1 + $0x59c] sm:$0xf]
  %v427 = vld [vmem:[%s1 + $0x5a0] sm:$0xf]
  %v428 = vld [vmem:[%s1 + $0x5a4] sm:$0xf]
  %v429 = vld [vmem:[%s1 + $0x5a8] sm:$0xf]
  %v430 = vld [vmem:[%s1 + $0x5ac] sm:$0xf]
  %v431 = vld [vmem:[%s1 + $0x5b0] sm:$0xf]
  %v432 = vld [vmem:[%s1 + $0x5b4] sm:$0xf]
  %v433 = vld [vmem:[%s1 + $0x5b8] sm:$0xf]
  %v434 = vld [vmem:[%s1 + $0x5bc] sm:$0xf]
  %v435 = vld [vmem:[%s1 + $0x5c0] sm:$0xf]
  %v436 = vld [vmem:[%s1 + $0x5c4] sm:$0xf]
  %v437 = vld [vmem:[%s1 + $0x5c8] sm:$0xf]
  %v438 = vld [vmem:[%s1 + $0x5cc] sm:$0xf]
  %v439 = vld [vmem:[%s1 + $0x5d0] sm:$0xf]
  %v440 = vld [vmem:[%s1 + $0x5d4] sm:$0xf]
  %v441 = vld [vmem:[%s1 + $0x5d8] sm:$0xf]
  %v442 = vld [vmem:[%s1 + $0x5dc] sm:$0xf]
  %v443 = vld [vmem:[%s1 + $0x5e0] sm:$0xf]
  %v444 = vld [vmem:[%s1 + $0x5e4] sm:$0xf]
  %v445 = vld [vmem:[%s1 + $0x5e8] sm:$0xf]
  %v446 = vld [vmem:[%s1 + $0x5ec] sm:$0xf]
  %v447 = vld [vmem:[%s1 + $0x5f0] sm:$0xf]
  %v448 = vld [vmem:[%s1 + $0x5f4] sm:$0xf]
  %v449 = vld [vmem:[%s1 + $0x5f8] sm:$0xf]
  %v450 = vld [vmem:[%s1 + $0x5fc] sm:$0xf]
  %v451 = vld [vmem:[%s1 + $0x600] sm:$0xf]
  %v452 = vld [vmem:[%s1 + $0x604] sm:$0xf]
  %v453 = vld [vmem:[%s1 + $0x608] sm:$0xf]
  %v454 = vld [vmem:[%s1 + $0x60c] sm:$0xf]
  %v455 = vld [vmem:[%s1 + $0x610] sm:$0xf]
  %v456 = vld [vmem:[%s1 + $0x614] sm:$0xf]
  %v457 = vld [vmem:[%s1 + $0x618] sm:$0xf]
  %v458 = vld [vmem:[%s1 + $0x61c] sm:$0xf]
  %v459 = vld [vmem:[%s1 + $0x620] sm:$0xf]
  %v460 = vld [vmem:[%s1 + $0x624] sm:$0xf]
  %v461 = vld [vmem:[%s1 + $0x628] sm:$0xf]
  %v462 = vld [vmem:[%s1 + $0x62c] sm:$0xf]
  %v463 = vld [vmem:[%s1 + $0x630] sm:$0xf]
  %v464 = vld [vmem:[%s1 + $0x634] sm:$0xf]
  %v465 = vld [vmem:[%s1 + $0x638] sm:$0xf]
  %v466 = vld [vmem:[%s1 + $0x63c] sm:$0xf]
  %v467 = vld [vmem:[%s2] sm:$0x1]
  %v469 = vlaneseq
  %v470 = vshrl.u32 %v469, 7
  %v471 = vsub.s32 0, %v470
  %v472 = vrot.slane %v467, %v471
  %v526 = vunpack.c.l.b16 %v15
  %v527 = vunpack.c.h.b16 %v15
  %v528 = vunpack.c.l.b16 %v16
  %v529 = vunpack.c.h.b16 %v16
  %v530 = vunpack.c.l.b16 %v17
  %v531 = vunpack.c.h.b16 %v17
  %v532 = vunpack.c.l.b16 %v18
  %v533 = vunpack.c.h.b16 %v18
  %v534 = vunpack.c.l.b16 %v19
  %v535 = vunpack.c.h.b16 %v19
  %v536 = vunpack.c.l.b16 %v20
  %v537 = vunpack.c.h.b16 %v20
  %v538 = vunpack.c.l.b16 %v21
  %v539 = vunpack.c.h.b16 %v21
  %v540 = vunpack.c.l.b16 %v22
  %v541 = vunpack.c.h.b16 %v22
  %v542 = vunpack.c.l.b16 %v23
  %v543 = vunpack.c.h.b16 %v23
  %v544 = vunpack.c.l.b16 %v24
  %v545 = vunpack.c.h.b16 %v24
  %v546 = vunpack.c.l.b16 %v25
  %v547 = vunpack.c.h.b16 %v25
  %v548 = vunpack.c.l.b16 %v26
  %v549 = vunpack.c.h.b16 %v26
  %v550 = vunpack.c.l.b16 %v27
  %v551 = vunpack.c.l.b16 %v28
  %v552 = vunpack.c.h.b16 %v28
  %v553 = vunpack.c.l.b16 %v29
  %v554 = vunpack.c.h.b16 %v29
  %v555 = vunpack.c.l.b16 %v30
  %v556 = vunpack.c.h.b16 %v30
  %v557 = vunpack.c.l.b16 %v31
  %v558 = vunpack.c.h.b16 %v31
  %v559 = vunpack.c.l.b16 %v32
  %v560 = vunpack.c.h.b16 %v32
  %v561 = vunpack.c.l.b16 %v33
  %v562 = vunpack.c.h.b16 %v33
  %v563 = vunpack.c.l.b16 %v34
  %v564 = vunpack.c.h.b16 %v34
  %v565 = vunpack.c.l.b16 %v35
  %v566 = vunpack.c.h.b16 %v35
  %v567 = vunpack.c.l.b16 %v36
  %v568 = vunpack.c.h.b16 %v36
  %v569 = vunpack.c.l.b16 %v37
  %v570 = vunpack.c.h.b16 %v37
  %v571 = vunpack.c.l.b16 %v38
  %v572 = vunpack.c.h.b16 %v38
  %v573 = vunpack.c.l.b16 %v39
  %v574 = vunpack.c.h.b16 %v39
  %v575 = vunpack.c.l.b16 %v40
  %v576 = vunpack.c.l.b16 %v41
  %v577 = vunpack.c.h.b16 %v41
  %v578 = vunpack.c.l.b16 %v42
  %v579 = vunpack.c.h.b16 %v42
  %v580 = vunpack.c.l.b16 %v43
  %v581 = vunpack.c.h.b16 %v43
  %v582 = vunpack.c.l.b16 %v44
  %v583 = vunpack.c.h.b16 %v44
  %v584 = vunpack.c.l.b16 %v45
  %v585 = vunpack.c.h.b16 %v45
  %v586 = vunpack.c.l.b16 %v46
  %v587 = vunpack.c.h.b16 %v46
  %v588 = vunpack.c.l.b16 %v47
  %v589 = vunpack.c.h.b16 %v47
  %v590 = vunpack.c.l.b16 %v48
  %v591 = vunpack.c.h.b16 %v48
  %v592 = vunpack.c.l.b16 %v49
  %v593 = vunpack.c.h.b16 %v49
  %v594 = vunpack.c.l.b16 %v50
  %v595 = vunpack.c.h.b16 %v50
  %v596 = vunpack.c.l.b16 %v51
  %v597 = vunpack.c.h.b16 %v51
  %v598 = vunpack.c.l.b16 %v52
  %v599 = vunpack.c.h.b16 %v52
  %v600 = vunpack.c.l.b16 %v53
  %v601 = vunpack.c.l.b16 %v54
  %v602 = vunpack.c.h.b16 %v54
  %v603 = vunpack.c.l.b16 %v55
  %v604 = vunpack.c.h.b16 %v55
  %v605 = vunpack.c.l.b16 %v56
  %v606 = vunpack.c.h.b16 %v56
  %v607 = vunpack.c.l.b16 %v57
  %v608 = vunpack.c.h.b16 %v57
  %v609 = vunpack.c.l.b16 %v58
  %v610 = vunpack.c.h.b16 %v58
  %v611 = vunpack.c.l.b16 %v59
  %v612 = vunpack.c.h.b16 %v59
  %v613 = vunpack.c.l.b16 %v60
  %v614 = vunpack.c.h.b16 %v60
  %v615 = vunpack.c.l.b16 %v61
  %v616 = vunpack.c.h.b16 %v61
  %v617 = vunpack.c.l.b16 %v62
  %v618 = vunpack.c.h.b16 %v62
  %v619 = vunpack.c.l.b16 %v63
  %v620 = vunpack.c.h.b16 %v63
  %v621 = vunpack.c.l.b16 %v64
  %v622 = vunpack.c.h.b16 %v64
  %v623 = vunpack.c.l.b16 %v65
  %v624 = vunpack.c.h.b16 %v65
  %v625 = vunpack.c.l.b16 %v66
  %v626 = vpack.c.b16 %v551, %v526
  %v627 = vpack.c.b16 %v552, %v527
  %v628 = vpack.c.b16 %v553, %v528
  %v629 = vpack.c.b16 %v554, %v529
  %v630 = vpack.c.b16 %v555, %v530
  %v631 = vpack.c.b16 %v556, %v531
  %v632 = vpack.c.b16 %v557, %v532
  %v633 = vpack.c.b16 %v558, %v533
  %v634 = vpack.c.b16 %v559, %v534
  %v635 = vpack.c.b16 %v560, %v535
  %v636 = vpack.c.b16 %v561, %v536
  %v637 = vpack.c.b16 %v562, %v537
  %v638 = vpack.c.b16 %v563, %v538
  %v639 = vpack.c.b16 %v564, %v539
  %v640 = vpack.c.b16 %v565, %v540
  %v641 = vpack.c.b16 %v566, %v541
  %v642 = vpack.c.b16 %v567, %v542
  %v643 = vpack.c.b16 %v568, %v543
  %v644 = vpack.c.b16 %v569, %v544
  %v645 = vpack.c.b16 %v570, %v545
  %v646 = vpack.c.b16 %v571, %v546
  %v647 = vpack.c.b16 %v572, %v547
  %v648 = vpack.c.b16 %v573, %v548
  %v649 = vpack.c.b16 %v574, %v549
  %v650 = vpack.c.b16 %v575, %v550
  %v651 = vpack.c.b16 %v601, %v576
  %v652 = vpack.c.b16 %v602, %v577
  %v653 = vpack.c.b16 %v603, %v578
  %v654 = vpack.c.b16 %v604, %v579
  %v655 = vpack.c.b16 %v605, %v580
  %v656 = vpack.c.b16 %v606, %v581
  %v657 = vpack.c.b16 %v607, %v582
  %v658 = vpack.c.b16 %v608, %v583
  %v659 = vpack.c.b16 %v609, %v584
  %v660 = vpack.c.b16 %v610, %v585
  %v661 = vpack.c.b16 %v611, %v586
  %v662 = vpack.c.b16 %v612, %v587
  %v663 = vpack.c.b16 %v613, %v588
  %v664 = vpack.c.b16 %v614, %v589
  %v665 = vpack.c.b16 %v615, %v590
  %v666 = vpack.c.b16 %v616, %v591
  %v667 = vpack.c.b16 %v617, %v592
  %v668 = vpack.c.b16 %v618, %v593
  %v669 = vpack.c.b16 %v619, %v594
  %v670 = vpack.c.b16 %v620, %v595
  %v671 = vpack.c.b16 %v621, %v596
  %v672 = vpack.c.b16 %v622, %v597
  %v673 = vpack.c.b16 %v623, %v598
  %v674 = vpack.c.b16 %v624, %v599
  %v675 = vpack.c.b16 %v625, %v600
  %v1126 = vunpack.c.l.b16 %v67
  %v1127 = vunpack.c.l.b16 %v68
  %v1128 = vunpack.c.l.b16 %v69
  %v1129 = vunpack.c.l.b16 %v70
  %v1130 = vunpack.c.l.b16 %v71
  %v1131 = vunpack.c.l.b16 %v72
  %v1132 = vunpack.c.l.b16 %v73
  %v1133 = vunpack.c.l.b16 %v74
  %v1134 = vunpack.c.l.b16 %v75
  %v1135 = vunpack.c.l.b16 %v76
  %v1136 = vunpack.c.l.b16 %v77
  %v1137 = vunpack.c.l.b16 %v78
  %v1138 = vunpack.c.l.b16 %v79
  %v1139 = vunpack.c.l.b16 %v80
  %v1140 = vunpack.c.l.b16 %v81
  %v1141 = vunpack.c.l.b16 %v82
  %v1142 = vunpack.c.l.b16 %v83
  %v1143 = vunpack.c.l.b16 %v84
  %v1144 = vunpack.c.l.b16 %v85
  %v1145 = vunpack.c.l.b16 %v86
  %v1146 = vunpack.c.l.b16 %v87
  %v1147 = vunpack.c.l.b16 %v88
  %v1148 = vunpack.c.l.b16 %v89
  %v1149 = vunpack.c.l.b16 %v90
  %v1150 = vunpack.c.l.b16 %v91
  %v1151 = vunpack.c.l.b16 %v92
  %v1152 = vunpack.c.l.b16 %v93
  %v1153 = vunpack.c.l.b16 %v94
  %v1154 = vunpack.c.l.b16 %v95
  %v1155 = vunpack.c.l.b16 %v96
  %v1156 = vunpack.c.l.b16 %v97
  %v1157 = vunpack.c.l.b16 %v98
  %v1158 = vunpack.c.l.b16 %v99
  %v1159 = vunpack.c.l.b16 %v100
  %v1160 = vunpack.c.l.b16 %v101
  %v1161 = vunpack.c.l.b16 %v102
  %v1162 = vunpack.c.l.b16 %v103
  %v1163 = vunpack.c.l.b16 %v104
  %v1164 = vunpack.c.l.b16 %v105
  %v1165 = vunpack.c.l.b16 %v106
  %v1166 = vunpack.c.l.b16 %v107
  %v1167 = vunpack.c.l.b16 %v108
  %v1168 = vunpack.c.l.b16 %v109
  %v1169 = vunpack.c.l.b16 %v110
  %v1170 = vunpack.c.l.b16 %v111
  %v1171 = vunpack.c.l.b16 %v112
  %v1172 = vunpack.c.l.b16 %v113
  %v1173 = vunpack.c.l.b16 %v114
  %v1174 = vunpack.c.l.b16 %v115
  %v1175 = vunpack.c.l.b16 %v116
  %v1176 = vunpack.c.l.b16 %v117
  %v1177 = vunpack.c.l.b16 %v118
  %v1178 = vunpack.c.l.b16 %v119
  %v1179 = vunpack.c.l.b16 %v120
  %v1180 = vunpack.c.l.b16 %v121
  %v1181 = vunpack.c.l.b16 %v122
  %v1182 = vunpack.c.l.b16 %v123
  %v1183 = vunpack.c.l.b16 %v124
  %v1184 = vunpack.c.l.b16 %v125
  %v1185 = vunpack.c.l.b16 %v126
  %v1186 = vunpack.c.l.b16 %v127
  %v1187 = vunpack.c.l.b16 %v128
  %v1188 = vunpack.c.l.b16 %v129
  %v1189 = vunpack.c.l.b16 %v130
  %v1190 = vunpack.c.l.b16 %v131
  %v1191 = vunpack.c.l.b16 %v132
  %v1192 = vunpack.c.l.b16 %v133
  %v1193 = vunpack.c.l.b16 %v134
  %v1194 = vunpack.c.l.b16 %v135
  %v1195 = vunpack.c.l.b16 %v136
  %v1196 = vunpack.c.l.b16 %v137
  %v1197 = vunpack.c.l.b16 %v138
  %v1198 = vunpack.c.l.b16 %v139
  %v1199 = vunpack.c.l.b16 %v140
  %v1200 = vunpack.c.l.b16 %v141
  %v1201 = vunpack.c.l.b16 %v142
  %v1202 = vunpack.c.l.b16 %v143
  %v1203 = vunpack.c.l.b16 %v144
  %v1204 = vunpack.c.l.b16 %v145
  %v1205 = vunpack.c.l.b16 %v146
  %v1206 = vunpack.c.l.b16 %v147
  %v1207 = vunpack.c.l.b16 %v148
  %v1208 = vunpack.c.l.b16 %v149
  %v1209 = vunpack.c.l.b16 %v150
  %v1210 = vunpack.c.l.b16 %v151
  %v1211 = vunpack.c.l.b16 %v152
  %v1212 = vunpack.c.l.b16 %v153
  %v1213 = vunpack.c.l.b16 %v154
  %v1214 = vunpack.c.l.b16 %v155
  %v1215 = vunpack.c.l.b16 %v156
  %v1216 = vunpack.c.l.b16 %v157
  %v1217 = vunpack.c.l.b16 %v158
  %v1218 = vunpack.c.l.b16 %v159
  %v1219 = vunpack.c.l.b16 %v160
  %v1220 = vunpack.c.l.b16 %v161
  %v1221 = vunpack.c.l.b16 %v162
  %v1222 = vunpack.c.l.b16 %v163
  %v1223 = vunpack.c.l.b16 %v164
  %v1224 = vunpack.c.l.b16 %v165
  %v1225 = vunpack.c.l.b16 %v166
  %v1226 = vunpack.c.l.b16 %v167
  %v1227 = vunpack.c.l.b16 %v168
  %v1228 = vunpack.c.l.b16 %v169
  %v1229 = vunpack.c.l.b16 %v170
  %v1230 = vunpack.c.l.b16 %v171
  %v1231 = vunpack.c.l.b16 %v172
  %v1232 = vunpack.c.l.b16 %v173
  %v1233 = vunpack.c.l.b16 %v174
  %v1234 = vunpack.c.l.b16 %v175
  %v1235 = vunpack.c.l.b16 %v176
  %v1236 = vunpack.c.l.b16 %v177
  %v1237 = vunpack.c.l.b16 %v178
  %v1238 = vunpack.c.l.b16 %v179
  %v1239 = vunpack.c.l.b16 %v180
  %v1240 = vunpack.c.l.b16 %v181
  %v1241 = vunpack.c.l.b16 %v182
  %v1242 = vunpack.c.l.b16 %v183
  %v1243 = vunpack.c.l.b16 %v184
  %v1244 = vunpack.c.l.b16 %v185
  %v1245 = vunpack.c.l.b16 %v186
  %v1246 = vunpack.c.l.b16 %v187
  %v1247 = vunpack.c.l.b16 %v188
  %v1248 = vunpack.c.l.b16 %v189
  %v1249 = vunpack.c.l.b16 %v190
  %v1250 = vunpack.c.l.b16 %v191
  %v1251 = vunpack.c.l.b16 %v192
  %v1252 = vunpack.c.l.b16 %v193
  %v1253 = vunpack.c.l.b16 %v194
  %v1254 = vunpack.c.l.b16 %v195
  %v1255 = vunpack.c.l.b16 %v196
  %v1256 = vunpack.c.l.b16 %v197
  %v1257 = vunpack.c.l.b16 %v198
  %v1258 = vunpack.c.l.b16 %v199
  %v1259 = vunpack.c.l.b16 %v200
  %v1260 = vunpack.c.l.b16 %v201
  %v1261 = vunpack.c.l.b16 %v202
  %v1262 = vunpack.c.l.b16 %v203
  %v1263 = vunpack.c.l.b16 %v204
  %v1264 = vunpack.c.l.b16 %v205
  %v1265 = vunpack.c.l.b16 %v206
  %v1266 = vunpack.c.l.b16 %v207
  %v1267 = vunpack.c.l.b16 %v208
  %v1268 = vunpack.c.l.b16 %v209
  %v1269 = vunpack.c.l.b16 %v210
  %v1270 = vunpack.c.l.b16 %v211
  %v1271 = vunpack.c.l.b16 %v212
  %v1272 = vunpack.c.l.b16 %v213
  %v1273 = vunpack.c.l.b16 %v214
  %v1274 = vunpack.c.l.b16 %v215
  %v1275 = vunpack.c.l.b16 %v216
  %v1276 = vunpack.c.l.b16 %v217
  %v1277 = vunpack.c.l.b16 %v218
  %v1278 = vunpack.c.l.b16 %v219
  %v1279 = vunpack.c.l.b16 %v220
  %v1280 = vunpack.c.l.b16 %v221
  %v1281 = vunpack.c.l.b16 %v222
  %v1282 = vunpack.c.l.b16 %v223
  %v1283 = vunpack.c.l.b16 %v224
  %v1284 = vunpack.c.l.b16 %v225
  %v1285 = vunpack.c.l.b16 %v226
  %v1286 = vunpack.c.l.b16 %v227
  %v1287 = vunpack.c.l.b16 %v228
  %v1288 = vunpack.c.l.b16 %v229
  %v1289 = vunpack.c.l.b16 %v230
  %v1290 = vunpack.c.l.b16 %v231
  %v1291 = vunpack.c.l.b16 %v232
  %v1292 = vunpack.c.l.b16 %v233
  %v1293 = vunpack.c.l.b16 %v234
  %v1294 = vunpack.c.l.b16 %v235
  %v1295 = vunpack.c.l.b16 %v236
  %v1296 = vunpack.c.l.b16 %v237
  %v1297 = vunpack.c.l.b16 %v238
  %v1298 = vunpack.c.l.b16 %v239
  %v1299 = vunpack.c.l.b16 %v240
  %v1300 = vunpack.c.l.b16 %v241
  %v1301 = vunpack.c.l.b16 %v242
  %v1302 = vunpack.c.l.b16 %v243
  %v1303 = vunpack.c.l.b16 %v244
  %v1304 = vunpack.c.l.b16 %v245
  %v1305 = vunpack.c.l.b16 %v246
  %v1306 = vunpack.c.l.b16 %v247
  %v1307 = vunpack.c.l.b16 %v248
  %v1308 = vunpack.c.l.b16 %v249
  %v1309 = vunpack.c.l.b16 %v250
  %v1310 = vunpack.c.l.b16 %v251
  %v1311 = vunpack.c.l.b16 %v252
  %v1312 = vunpack.c.l.b16 %v253
  %v1313 = vunpack.c.l.b16 %v254
  %v1314 = vunpack.c.l.b16 %v255
  %v1315 = vunpack.c.l.b16 %v256
  %v1316 = vunpack.c.l.b16 %v257
  %v1317 = vunpack.c.l.b16 %v258
  %v1318 = vunpack.c.l.b16 %v259
  %v1319 = vunpack.c.l.b16 %v260
  %v1320 = vunpack.c.l.b16 %v261
  %v1321 = vunpack.c.l.b16 %v262
  %v1322 = vunpack.c.l.b16 %v263
  %v1323 = vunpack.c.l.b16 %v264
  %v1324 = vunpack.c.l.b16 %v265
  %v1325 = vunpack.c.l.b16 %v266
  %v1326 = vunpack.c.l.b16 %v267
  %v1327 = vunpack.c.l.b16 %v268
  %v1328 = vunpack.c.l.b16 %v269
  %v1329 = vunpack.c.l.b16 %v270
  %v1330 = vunpack.c.l.b16 %v271
  %v1331 = vunpack.c.l.b16 %v272
  %v1332 = vunpack.c.l.b16 %v273
  %v1333 = vunpack.c.l.b16 %v274
  %v1334 = vunpack.c.l.b16 %v275
  %v1335 = vunpack.c.l.b16 %v276
  %v1336 = vunpack.c.l.b16 %v277
  %v1337 = vunpack.c.l.b16 %v278
  %v1338 = vunpack.c.l.b16 %v279
  %v1339 = vunpack.c.l.b16 %v280
  %v1340 = vunpack.c.l.b16 %v281
  %v1341 = vunpack.c.l.b16 %v282
  %v1342 = vunpack.c.l.b16 %v283
  %v1343 = vunpack.c.l.b16 %v284
  %v1344 = vunpack.c.l.b16 %v285
  %v1345 = vunpack.c.l.b16 %v286
  %v1346 = vunpack.c.l.b16 %v287
  %v1347 = vunpack.c.l.b16 %v288
  %v1348 = vunpack.c.l.b16 %v289
  %v1349 = vunpack.c.l.b16 %v290
  %v1350 = vunpack.c.l.b16 %v291
  %v1351 = vunpack.c.l.b16 %v292
  %v1352 = vunpack.c.l.b16 %v293
  %v1353 = vunpack.c.l.b16 %v294
  %v1354 = vunpack.c.l.b16 %v295
  %v1355 = vunpack.c.l.b16 %v296
  %v1356 = vunpack.c.l.b16 %v297
  %v1357 = vunpack.c.l.b16 %v298
  %v1358 = vunpack.c.l.b16 %v299
  %v1359 = vunpack.c.l.b16 %v300
  %v1360 = vunpack.c.l.b16 %v301
  %v1361 = vunpack.c.l.b16 %v302
  %v1362 = vunpack.c.l.b16 %v303
  %v1363 = vunpack.c.l.b16 %v304
  %v1364 = vunpack.c.l.b16 %v305
  %v1365 = vunpack.c.l.b16 %v306
  %v1366 = vunpack.c.l.b16 %v307
  %v1367 = vunpack.c.l.b16 %v308
  %v1368 = vunpack.c.l.b16 %v309
  %v1369 = vunpack.c.l.b16 %v310
  %v1370 = vunpack.c.l.b16 %v311
  %v1371 = vunpack.c.l.b16 %v312
  %v1372 = vunpack.c.l.b16 %v313
  %v1373 = vunpack.c.l.b16 %v314
  %v1374 = vunpack.c.l.b16 %v315
  %v1375 = vunpack.c.l.b16 %v316
  %v1376 = vunpack.c.l.b16 %v317
  %v1377 = vunpack.c.l.b16 %v318
  %v1378 = vunpack.c.l.b16 %v319
  %v1379 = vunpack.c.l.b16 %v320
  %v1380 = vunpack.c.l.b16 %v321
  %v1381 = vunpack.c.l.b16 %v322
  %v1382 = vunpack.c.l.b16 %v323
  %v1383 = vunpack.c.l.b16 %v324
  %v1384 = vunpack.c.l.b16 %v325
  %v1385 = vunpack.c.l.b16 %v326
  %v1386 = vunpack.c.l.b16 %v327
  %v1387 = vunpack.c.l.b16 %v328
  %v1388 = vunpack.c.l.b16 %v329
  %v1389 = vunpack.c.l.b16 %v330
  %v1390 = vunpack.c.l.b16 %v331
  %v1391 = vunpack.c.l.b16 %v332
  %v1392 = vunpack.c.l.b16 %v333
  %v1393 = vunpack.c.l.b16 %v334
  %v1394 = vunpack.c.l.b16 %v335
  %v1395 = vunpack.c.l.b16 %v336
  %v1396 = vunpack.c.l.b16 %v337
  %v1397 = vunpack.c.l.b16 %v338
  %v1398 = vunpack.c.l.b16 %v339
  %v1399 = vunpack.c.l.b16 %v340
  %v1400 = vunpack.c.l.b16 %v341
  %v1401 = vunpack.c.l.b16 %v342
  %v1402 = vunpack.c.l.b16 %v343
  %v1403 = vunpack.c.l.b16 %v344
  %v1404 = vunpack.c.l.b16 %v345
  %v1405 = vunpack.c.l.b16 %v346
  %v1406 = vunpack.c.l.b16 %v347
  %v1407 = vunpack.c.l.b16 %v348
  %v1408 = vunpack.c.l.b16 %v349
  %v1409 = vunpack.c.l.b16 %v350
  %v1410 = vunpack.c.l.b16 %v351
  %v1411 = vunpack.c.l.b16 %v352
  %v1412 = vunpack.c.l.b16 %v353
  %v1413 = vunpack.c.l.b16 %v354
  %v1414 = vunpack.c.l.b16 %v355
  %v1415 = vunpack.c.l.b16 %v356
  %v1416 = vunpack.c.l.b16 %v357
  %v1417 = vunpack.c.l.b16 %v358
  %v1418 = vunpack.c.l.b16 %v359
  %v1419 = vunpack.c.l.b16 %v360
  %v1420 = vunpack.c.l.b16 %v361
  %v1421 = vunpack.c.l.b16 %v362
  %v1422 = vunpack.c.l.b16 %v363
  %v1423 = vunpack.c.l.b16 %v364
  %v1424 = vunpack.c.l.b16 %v365
  %v1425 = vunpack.c.l.b16 %v366
  %v1426 = vunpack.c.l.b16 %v367
  %v1427 = vunpack.c.l.b16 %v368
  %v1428 = vunpack.c.l.b16 %v369
  %v1429 = vunpack.c.l.b16 %v370
  %v1430 = vunpack.c.l.b16 %v371
  %v1431 = vunpack.c.l.b16 %v372
  %v1432 = vunpack.c.l.b16 %v373
  %v1433 = vunpack.c.l.b16 %v374
  %v1434 = vunpack.c.l.b16 %v375
  %v1435 = vunpack.c.l.b16 %v376
  %v1436 = vunpack.c.l.b16 %v377
  %v1437 = vunpack.c.l.b16 %v378
  %v1438 = vunpack.c.l.b16 %v379
  %v1439 = vunpack.c.l.b16 %v380
  %v1440 = vunpack.c.l.b16 %v381
  %v1441 = vunpack.c.l.b16 %v382
  %v1442 = vunpack.c.l.b16 %v383
  %v1443 = vunpack.c.l.b16 %v384
  %v1444 = vunpack.c.l.b16 %v385
  %v1445 = vunpack.c.l.b16 %v386
  %v1446 = vunpack.c.l.b16 %v387
  %v1447 = vunpack.c.l.b16 %v388
  %v1448 = vunpack.c.l.b16 %v389
  %v1449 = vunpack.c.l.b16 %v390
  %v1450 = vunpack.c.l.b16 %v391
  %v1451 = vunpack.c.l.b16 %v392
  %v1452 = vunpack.c.l.b16 %v393
  %v1453 = vunpack.c.l.b16 %v394
  %v1454 = vunpack.c.l.b16 %v395
  %v1455 = vunpack.c.l.b16 %v396
  %v1456 = vunpack.c.l.b16 %v397
  %v1457 = vunpack.c.l.b16 %v398
  %v1458 = vunpack.c.l.b16 %v399
  %v1459 = vunpack.c.l.b16 %v400
  %v1460 = vunpack.c.l.b16 %v401
  %v1461 = vunpack.c.l.b16 %v402
  %v1462 = vunpack.c.l.b16 %v403
  %v1463 = vunpack.c.l.b16 %v404
  %v1464 = vunpack.c.l.b16 %v405
  %v1465 = vunpack.c.l.b16 %v406
  %v1466 = vunpack.c.l.b16 %v407
  %v1467 = vunpack.c.l.b16 %v408
  %v1468 = vunpack.c.l.b16 %v409
  %v1469 = vunpack.c.l.b16 %v410
  %v1470 = vunpack.c.l.b16 %v411
  %v1471 = vunpack.c.l.b16 %v412
  %v1472 = vunpack.c.l.b16 %v413
  %v1473 = vunpack.c.l.b16 %v414
  %v1474 = vunpack.c.l.b16 %v415
  %v1475 = vunpack.c.l.b16 %v416
  %v1476 = vunpack.c.l.b16 %v417
  %v1477 = vunpack.c.l.b16 %v418
  %v1478 = vunpack.c.l.b16 %v419
  %v1479 = vunpack.c.l.b16 %v420
  %v1480 = vunpack.c.l.b16 %v421
  %v1481 = vunpack.c.l.b16 %v422
  %v1482 = vunpack.c.l.b16 %v423
  %v1483 = vunpack.c.l.b16 %v424
  %v1484 = vunpack.c.l.b16 %v425
  %v1485 = vunpack.c.l.b16 %v426
  %v1486 = vunpack.c.l.b16 %v427
  %v1487 = vunpack.c.l.b16 %v428
  %v1488 = vunpack.c.l.b16 %v429
  %v1489 = vunpack.c.l.b16 %v430
  %v1490 = vunpack.c.l.b16 %v431
  %v1491 = vunpack.c.l.b16 %v432
  %v1492 = vunpack.c.l.b16 %v433
  %v1493 = vunpack.c.l.b16 %v434
  %v1494 = vunpack.c.l.b16 %v435
  %v1495 = vunpack.c.l.b16 %v436
  %v1496 = vunpack.c.l.b16 %v437
  %v1497 = vunpack.c.l.b16 %v438
  %v1498 = vunpack.c.l.b16 %v439
  %v1499 = vunpack.c.l.b16 %v440
  %v1500 = vunpack.c.l.b16 %v441
  %v1501 = vunpack.c.l.b16 %v442
  %v1502 = vunpack.c.l.b16 %v443
  %v1503 = vunpack.c.l.b16 %v444
  %v1504 = vunpack.c.l.b16 %v445
  %v1505 = vunpack.c.l.b16 %v446
  %v1506 = vunpack.c.l.b16 %v447
  %v1507 = vunpack.c.l.b16 %v448
  %v1508 = vunpack.c.l.b16 %v449
  %v1509 = vunpack.c.l.b16 %v450
  %v1510 = vunpack.c.l.b16 %v451
  %v1511 = vunpack.c.l.b16 %v452
  %v1512 = vunpack.c.l.b16 %v453
  %v1513 = vunpack.c.l.b16 %v454
  %v1514 = vunpack.c.l.b16 %v455
  %v1515 = vunpack.c.l.b16 %v456
  %v1516 = vunpack.c.l.b16 %v457
  %v1517 = vunpack.c.l.b16 %v458
  %v1518 = vunpack.c.l.b16 %v459
  %v1519 = vunpack.c.l.b16 %v460
  %v1520 = vunpack.c.l.b16 %v461
  %v1521 = vunpack.c.l.b16 %v462
  %v1522 = vunpack.c.l.b16 %v463
  %v1523 = vunpack.c.l.b16 %v464
  %v1524 = vunpack.c.l.b16 %v465
  %v1525 = vunpack.c.l.b16 %v466
  %v1526 = vpack.c.b16 %v1127, %v1126
  %v1527 = vpack.c.b16 %v1129, %v1128
  %v1528 = vpack.c.b16 %v1131, %v1130
  %v1529 = vpack.c.b16 %v1133, %v1132
  %v1530 = vpack.c.b16 %v1135, %v1134
  %v1531 = vpack.c.b16 %v1137, %v1136
  %v1532 = vpack.c.b16 %v1139, %v1138
  %v1533 = vpack.c.b16 %v1141, %v1140
  %v1534 = vpack.c.b16 %v1143, %v1142
  %v1535 = vpack.c.b16 %v1145, %v1144
  %v1536 = vpack.c.b16 %v1147, %v1146
  %v1537 = vpack.c.b16 %v1149, %v1148
  %v1538 = vpack.c.b16 %v1151, %v1150
  %v1539 = vpack.c.b16 %v1153, %v1152
  %v1540 = vpack.c.b16 %v1155, %v1154
  %v1541 = vpack.c.b16 %v1157, %v1156
  %v1542 = vpack.c.b16 %v1159, %v1158
  %v1543 = vpack.c.b16 %v1161, %v1160
  %v1544 = vpack.c.b16 %v1163, %v1162
  %v1545 = vpack.c.b16 %v1165, %v1164
  %v1546 = vpack.c.b16 %v1167, %v1166
  %v1547 = vpack.c.b16 %v1169, %v1168
  %v1548 = vpack.c.b16 %v1171, %v1170
  %v1549 = vpack.c.b16 %v1173, %v1172
  %v1550 = vpack.c.b16 %v1175, %v1174
  %v1551 = vpack.c.b16 %v1177, %v1176
  %v1552 = vpack.c.b16 %v1179, %v1178
  %v1553 = vpack.c.b16 %v1181, %v1180
  %v1554 = vpack.c.b16 %v1183, %v1182
  %v1555 = vpack.c.b16 %v1185, %v1184
  %v1556 = vpack.c.b16 %v1187, %v1186
  %v1557 = vpack.c.b16 %v1189, %v1188
  %v1558 = vpack.c.b16 %v1191, %v1190
  %v1559 = vpack.c.b16 %v1193, %v1192
  %v1560 = vpack.c.b16 %v1195, %v1194
  %v1561 = vpack.c.b16 %v1197, %v1196
  %v1562 = vpack.c.b16 %v1199, %v1198
  %v1563 = vpack.c.b16 %v1201, %v1200
  %v1564 = vpack.c.b16 %v1203, %v1202
  %v1565 = vpack.c.b16 %v1205, %v1204
  %v1566 = vpack.c.b16 %v1207, %v1206
  %v1567 = vpack.c.b16 %v1209, %v1208
  %v1568 = vpack.c.b16 %v1211, %v1210
  %v1569 = vpack.c.b16 %v1213, %v1212
  %v1570 = vpack.c.b16 %v1215, %v1214
  %v1571 = vpack.c.b16 %v1217, %v1216
  %v1572 = vpack.c.b16 %v1219, %v1218
  %v1573 = vpack.c.b16 %v1221, %v1220
  %v1574 = vpack.c.b16 %v1223, %v1222
  %v1575 = vpack.c.b16 %v1225, %v1224
  %v1576 = vpack.c.b16 %v1227, %v1226
  %v1577 = vpack.c.b16 %v1229, %v1228
  %v1578 = vpack.c.b16 %v1231, %v1230
  %v1579 = vpack.c.b16 %v1233, %v1232
  %v1580 = vpack.c.b16 %v1235, %v1234
  %v1581 = vpack.c.b16 %v1237, %v1236
  %v1582 = vpack.c.b16 %v1239, %v1238
  %v1583 = vpack.c.b16 %v1241, %v1240
  %v1584 = vpack.c.b16 %v1243, %v1242
  %v1585 = vpack.c.b16 %v1245, %v1244
  %v1586 = vpack.c.b16 %v1247, %v1246
  %v1587 = vpack.c.b16 %v1249, %v1248
  %v1588 = vpack.c.b16 %v1251, %v1250
  %v1589 = vpack.c.b16 %v1253, %v1252
  %v1590 = vpack.c.b16 %v1255, %v1254
  %v1591 = vpack.c.b16 %v1257, %v1256
  %v1592 = vpack.c.b16 %v1259, %v1258
  %v1593 = vpack.c.b16 %v1261, %v1260
  %v1594 = vpack.c.b16 %v1263, %v1262
  %v1595 = vpack.c.b16 %v1265, %v1264
  %v1596 = vpack.c.b16 %v1267, %v1266
  %v1597 = vpack.c.b16 %v1269, %v1268
  %v1598 = vpack.c.b16 %v1271, %v1270
  %v1599 = vpack.c.b16 %v1273, %v1272
  %v1600 = vpack.c.b16 %v1275, %v1274
  %v1601 = vpack.c.b16 %v1277, %v1276
  %v1602 = vpack.c.b16 %v1279, %v1278
  %v1603 = vpack.c.b16 %v1281, %v1280
  %v1604 = vpack.c.b16 %v1283, %v1282
  %v1605 = vpack.c.b16 %v1285, %v1284
  %v1606 = vpack.c.b16 %v1287, %v1286
  %v1607 = vpack.c.b16 %v1289, %v1288
  %v1608 = vpack.c.b16 %v1291, %v1290
  %v1609 = vpack.c.b16 %v1293, %v1292
  %v1610 = vpack.c.b16 %v1295, %v1294
  %v1611 = vpack.c.b16 %v1297, %v1296
  %v1612 = vpack.c.b16 %v1299, %v1298
  %v1613 = vpack.c.b16 %v1301, %v1300
  %v1614 = vpack.c.b16 %v1303, %v1302
  %v1615 = vpack.c.b16 %v1305, %v1304
  %v1616 = vpack.c.b16 %v1307, %v1306
  %v1617 = vpack.c.b16 %v1309, %v1308
  %v1618 = vpack.c.b16 %v1311, %v1310
  %v1619 = vpack.c.b16 %v1313, %v1312
  %v1620 = vpack.c.b16 %v1315, %v1314
  %v1621 = vpack.c.b16 %v1317, %v1316
  %v1622 = vpack.c.b16 %v1319, %v1318
  %v1623 = vpack.c.b16 %v1321, %v1320
  %v1624 = vpack.c.b16 %v1323, %v1322
  %v1625 = vpack.c.b16 %v1325, %v1324
  %v1626 = vpack.c.b16 %v1327, %v1326
  %v1627 = vpack.c.b16 %v1329, %v1328
  %v1628 = vpack.c.b16 %v1331, %v1330
  %v1629 = vpack.c.b16 %v1333, %v1332
  %v1630 = vpack.c.b16 %v1335, %v1334
  %v1631 = vpack.c.b16 %v1337, %v1336
  %v1632 = vpack.c.b16 %v1339, %v1338
  %v1633 = vpack.c.b16 %v1341, %v1340
  %v1634 = vpack.c.b16 %v1343, %v1342
  %v1635 = vpack.c.b16 %v1345, %v1344
  %v1636 = vpack.c.b16 %v1347, %v1346
  %v1637 = vpack.c.b16 %v1349, %v1348
  %v1638 = vpack.c.b16 %v1351, %v1350
  %v1639 = vpack.c.b16 %v1353, %v1352
  %v1640 = vpack.c.b16 %v1355, %v1354
  %v1641 = vpack.c.b16 %v1357, %v1356
  %v1642 = vpack.c.b16 %v1359, %v1358
  %v1643 = vpack.c.b16 %v1361, %v1360
  %v1644 = vpack.c.b16 %v1363, %v1362
  %v1645 = vpack.c.b16 %v1365, %v1364
  %v1646 = vpack.c.b16 %v1367, %v1366
  %v1647 = vpack.c.b16 %v1369, %v1368
  %v1648 = vpack.c.b16 %v1371, %v1370
  %v1649 = vpack.c.b16 %v1373, %v1372
  %v1650 = vpack.c.b16 %v1375, %v1374
  %v1651 = vpack.c.b16 %v1377, %v1376
  %v1652 = vpack.c.b16 %v1379, %v1378
  %v1653 = vpack.c.b16 %v1381, %v1380
  %v1654 = vpack.c.b16 %v1383, %v1382
  %v1655 = vpack.c.b16 %v1385, %v1384
  %v1656 = vpack.c.b16 %v1387, %v1386
  %v1657 = vpack.c.b16 %v1389, %v1388
  %v1658 = vpack.c.b16 %v1391, %v1390
  %v1659 = vpack.c.b16 %v1393, %v1392
  %v1660 = vpack.c.b16 %v1395, %v1394
  %v1661 = vpack.c.b16 %v1397, %v1396
  %v1662 = vpack.c.b16 %v1399, %v1398
  %v1663 = vpack.c.b16 %v1401, %v1400
  %v1664 = vpack.c.b16 %v1403, %v1402
  %v1665 = vpack.c.b16 %v1405, %v1404
  %v1666 = vpack.c.b16 %v1407, %v1406
  %v1667 = vpack.c.b16 %v1409, %v1408
  %v1668 = vpack.c.b16 %v1411, %v1410
  %v1669 = vpack.c.b16 %v1413, %v1412
  %v1670 = vpack.c.b16 %v1415, %v1414
  %v1671 = vpack.c.b16 %v1417, %v1416
  %v1672 = vpack.c.b16 %v1419, %v1418
  %v1673 = vpack.c.b16 %v1421, %v1420
  %v1674 = vpack.c.b16 %v1423, %v1422
  %v1675 = vpack.c.b16 %v1425, %v1424
  %v1676 = vpack.c.b16 %v1427, %v1426
  %v1677 = vpack.c.b16 %v1429, %v1428
  %v1678 = vpack.c.b16 %v1431, %v1430
  %v1679 = vpack.c.b16 %v1433, %v1432
  %v1680 = vpack.c.b16 %v1435, %v1434
  %v1681 = vpack.c.b16 %v1437, %v1436
  %v1682 = vpack.c.b16 %v1439, %v1438
  %v1683 = vpack.c.b16 %v1441, %v1440
  %v1684 = vpack.c.b16 %v1443, %v1442
  %v1685 = vpack.c.b16 %v1445, %v1444
  %v1686 = vpack.c.b16 %v1447, %v1446
  %v1687 = vpack.c.b16 %v1449, %v1448
  %v1688 = vpack.c.b16 %v1451, %v1450
  %v1689 = vpack.c.b16 %v1453, %v1452
  %v1690 = vpack.c.b16 %v1455, %v1454
  %v1691 = vpack.c.b16 %v1457, %v1456
  %v1692 = vpack.c.b16 %v1459, %v1458
  %v1693 = vpack.c.b16 %v1461, %v1460
  %v1694 = vpack.c.b16 %v1463, %v1462
  %v1695 = vpack.c.b16 %v1465, %v1464
  %v1696 = vpack.c.b16 %v1467, %v1466
  %v1697 = vpack.c.b16 %v1469, %v1468
  %v1698 = vpack.c.b16 %v1471, %v1470
  %v1699 = vpack.c.b16 %v1473, %v1472
  %v1700 = vpack.c.b16 %v1475, %v1474
  %v1701 = vpack.c.b16 %v1477, %v1476
  %v1702 = vpack.c.b16 %v1479, %v1478
  %v1703 = vpack.c.b16 %v1481, %v1480
  %v1704 = vpack.c.b16 %v1483, %v1482
  %v1705 = vpack.c.b16 %v1485, %v1484
  %v1706 = vpack.c.b16 %v1487, %v1486
  %v1707 = vpack.c.b16 %v1489, %v1488
  %v1708 = vpack.c.b16 %v1491, %v1490
  %v1709 = vpack.c.b16 %v1493, %v1492
  %v1710 = vpack.c.b16 %v1495, %v1494
  %v1711 = vpack.c.b16 %v1497, %v1496
  %v1712 = vpack.c.b16 %v1499, %v1498
  %v1713 = vpack.c.b16 %v1501, %v1500
  %v1714 = vpack.c.b16 %v1503, %v1502
  %v1715 = vpack.c.b16 %v1505, %v1504
  %v1716 = vpack.c.b16 %v1507, %v1506
  %v1717 = vpack.c.b16 %v1509, %v1508
  %v1718 = vpack.c.b16 %v1511, %v1510
  %v1719 = vpack.c.b16 %v1513, %v1512
  %v1720 = vpack.c.b16 %v1515, %v1514
  %v1721 = vpack.c.b16 %v1517, %v1516
  %v1722 = vpack.c.b16 %v1519, %v1518
  %v1723 = vpack.c.b16 %v1521, %v1520
  %v1724 = vpack.c.b16 %v1523, %v1522
  %v1725 = vpack.c.b16 %v1525, %v1524
  %1926 = vmatprep.subr.bf16.mxu0 0
  %1927 = vmatpush1.bf16.msra.mxu0 %v1533
  %1928 = vmatprep.subr.bf16.mxu0 0
  %1929 = vmatpush1.bf16.msra.mxu0 %v1532
  %1930 = vmatprep.subr.bf16.mxu0 0
  %1931 = vmatpush1.bf16.msra.mxu0 %v1531
  %1932 = vmatprep.subr.bf16.mxu0 0
  %1933 = vmatpush1.bf16.msra.mxu0 %v1530
  %1934 = vmatprep.subr.bf16.mxu0 0
  %1935 = vmatpush1.bf16.msra.mxu0 %v1529
  %1936 = vmatprep.subr.bf16.mxu0 0
  %1937 = vmatpush1.bf16.msra.mxu0 %v1528
  %1938 = vmatprep.subr.bf16.mxu0 0
  %1939 = vmatpush1.bf16.msra.mxu0 %v1527
  %1940 = vmatprep.subr.bf16.mxu0 0
  %1941 = vmatpush1.bf16.msra.mxu0 %v1526
  %1942 = vmatprep.subr.bf16.mxu0 0
  %1943 = vmatpush2.bf16.msra.mxu0 %v1541
  %1944 = vmatprep.subr.bf16.mxu0 0
  %1945 = vmatpush2.bf16.msra.mxu0 %v1540
  %1946 = vmatprep.subr.bf16.mxu0 0
  %1947 = vmatpush2.bf16.msra.mxu0 %v1539
  %1948 = vmatprep.subr.bf16.mxu0 0
  %1949 = vmatpush2.bf16.msra.mxu0 %v1538
  %1950 = vmatprep.subr.bf16.mxu0 0
  %1951 = vmatpush2.bf16.msra.mxu0 %v1537
  %1952 = vmatprep.subr.bf16.mxu0 0
  %1953 = vmatpush2.bf16.msra.mxu0 %v1536
  %1954 = vmatprep.subr.bf16.mxu0 0
  %1955 = vmatpush2.bf16.msra.mxu0 %v1535
  %1956 = vmatprep.subr.bf16.mxu0 0
  %1957 = vmatpush2.bf16.msra.mxu0 %v1534
  %1958 = vmatprep.mubr.bf16.mxu0 %v627
  %1959 = vmatmul.mubr.bf16.gmra.mxu0 %v626
  %v1960 = vpop.f32.mrf.mxu0
  %v1961 = vadd.f32 %v472, %v1960
  %v1962 = vpop.f32.mrf.mxu0
  %v1963 = vpop.f32.mrf.mxu0
  %v1964 = vadd.f32 %v472, %v1963
  %v1965 = vpop.f32.mrf.mxu0
  %1966 = vmatprep.mubr.bf16.mxu0 %v652
  %1967 = vmatmul.mubr.bf16.gmra.mxu0 %v651
  %v1968 = vpop.f32.mrf.mxu0
  %v1969 = vadd.f32 %v472, %v1968
  %v1970 = vpop.f32.mrf.mxu0
  %v1971 = vpop.f32.mrf.mxu0
  %v1972 = vadd.f32 %v472, %v1971
  %v1973 = vpop.f32.mrf.mxu0
  %1974 = vdwg.mxu0
  %1975 = vmatprep.subr.bf16.mxu0 0
  %1976 = vmatpush1.bf16.msra.mxu0 %v1549
  %1977 = vmatprep.subr.bf16.mxu0 0
  %1978 = vmatpush1.bf16.msra.mxu0 %v1548
  %1979 = vmatprep.subr.bf16.mxu0 0
  %1980 = vmatpush1.bf16.msra.mxu0 %v1547
  %1981 = vmatprep.subr.bf16.mxu0 0
  %1982 = vmatpush1.bf16.msra.mxu0 %v1546
  %1983 = vmatprep.subr.bf16.mxu0 0
  %1984 = vmatpush1.bf16.msra.mxu0 %v1545
  %1985 = vmatprep.subr.bf16.mxu0 0
  %1986 = vmatpush1.bf16.msra.mxu0 %v1544
  %1987 = vmatprep.subr.bf16.mxu0 0
  %1988 = vmatpush1.bf16.msra.mxu0 %v1543
  %1989 = vmatprep.subr.bf16.mxu0 0
  %1990 = vmatpush1.bf16.msra.mxu0 %v1542
  %1991 = vmatprep.subr.bf16.mxu0 0
  %1992 = vmatpush2.bf16.msra.mxu0 %v1557
  %1993 = vmatprep.subr.bf16.mxu0 0
  %1994 = vmatpush2.bf16.msra.mxu0 %v1556
  %1995 = vmatprep.subr.bf16.mxu0 0
  %1996 = vmatpush2.bf16.msra.mxu0 %v1555
  %1997 = vmatprep.subr.bf16.mxu0 0
  %1998 = vmatpush2.bf16.msra.mxu0 %v1554
  %1999 = vmatprep.subr.bf16.mxu0 0
  %2000 = vmatpush2.bf16.msra.mxu0 %v1553
  %2001 = vmatprep.subr.bf16.mxu0 0
  %2002 = vmatpush2.bf16.msra.mxu0 %v1552
  %2003 = vmatprep.subr.bf16.mxu0 0
  %2004 = vmatpush2.bf16.msra.mxu0 %v1551
  %2005 = vmatprep.subr.bf16.mxu0 0
  %2006 = vmatpush2.bf16.msra.mxu0 %v1550
  %2007 = vmatprep.mubr.bf16.mxu0 %v629
  %2008 = vmatmul.mubr.bf16.gmra.mxu0 %v628
  %v2009 = vpop.f32.mrf.mxu0
  %v2010 = vadd.f32 %v1961, %v2009
  %v2011 = vpop.f32.mrf.mxu0
  %v2012 = vpop.f32.mrf.mxu0
  %v2013 = vadd.f32 %v1964, %v2012
  %v2014 = vpop.f32.mrf.mxu0
  %2015 = vmatprep.mubr.bf16.mxu0 %v654
  %2016 = vmatmul.mubr.bf16.gmra.mxu0 %v653
  %v2017 = vpop.f32.mrf.mxu0
  %v2018 = vadd.f32 %v1969, %v2017
  %v2019 = vpop.f32.mrf.mxu0
  %v2020 = vpop.f32.mrf.mxu0
  %v2021 = vadd.f32 %v1972, %v2020
  %v2022 = vpop.f32.mrf.mxu0
  %2023 = vdwg.mxu0
  %2024 = vmatprep.subr.bf16.mxu0 0
  %2025 = vmatpush1.bf16.msra.mxu0 %v1565
  %2026 = vmatprep.subr.bf16.mxu0 0
  %2027 = vmatpush1.bf16.msra.mxu0 %v1564
  %2028 = vmatprep.subr.bf16.mxu0 0
  %2029 = vmatpush1.bf16.msra.mxu0 %v1563
  %2030 = vmatprep.subr.bf16.mxu0 0
  %2031 = vmatpush1.bf16.msra.mxu0 %v1562
  %2032 = vmatprep.subr.bf16.mxu0 0
  %2033 = vmatpush1.bf16.msra.mxu0 %v1561
  %2034 = vmatprep.subr.bf16.mxu0 0
  %2035 = vmatpush1.bf16.msra.mxu0 %v1560
  %2036 = vmatprep.subr.bf16.mxu0 0
  %2037 = vmatpush1.bf16.msra.mxu0 %v1559
  %2038 = vmatprep.subr.bf16.mxu0 0
  %2039 = vmatpush1.bf16.msra.mxu0 %v1558
  %2040 = vmatprep.subr.bf16.mxu0 0
  %2041 = vmatpush2.bf16.msra.mxu0 %v1573
  %2042 = vmatprep.subr.bf16.mxu0 0
  %2043 = vmatpush2.bf16.msra.mxu0 %v1572
  %2044 = vmatprep.subr.bf16.mxu0 0
  %2045 = vmatpush2.bf16.msra.mxu0 %v1571
  %2046 = vmatprep.subr.bf16.mxu0 0
  %2047 = vmatpush2.bf16.msra.mxu0 %v1570
  %2048 = vmatprep.subr.bf16.mxu0 0
  %2049 = vmatpush2.bf16.msra.mxu0 %v1569
  %2050 = vmatprep.subr.bf16.mxu0 0
  %2051 = vmatpush2.bf16.msra.mxu0 %v1568
  %2052 = vmatprep.subr.bf16.mxu0 0
  %2053 = vmatpush2.bf16.msra.mxu0 %v1567
  %2054 = vmatprep.subr.bf16.mxu0 0
  %2055 = vmatpush2.bf16.msra.mxu0 %v1566
  %2056 = vmatprep.mubr.bf16.mxu0 %v631
  %2057 = vmatmul.mubr.bf16.gmra.mxu0 %v630
  %v2058 = vpop.f32.mrf.mxu0
  %v2059 = vadd.f32 %v2010, %v2058
  %v2060 = vpop.f32.mrf.mxu0
  %v2061 = vpop.f32.mrf.mxu0
  %v2062 = vadd.f32 %v2013, %v2061
  %v2063 = vpop.f32.mrf.mxu0
  %2064 = vmatprep.mubr.bf16.mxu0 %v656
  %2065 = vmatmul.mubr.bf16.gmra.mxu0 %v655
  %v2066 = vpop.f32.mrf.mxu0
  %v2067 = vadd.f32 %v2018, %v2066
  %v2068 = vpop.f32.mrf.mxu0
  %v2069 = vpop.f32.mrf.mxu0
  %v2070 = vadd.f32 %v2021, %v2069
  %v2071 = vpop.f32.mrf.mxu0
  %2072 = vdwg.mxu0
  %2073 = vmatprep.subr.bf16.mxu0 0
  %2074 = vmatpush1.bf16.msra.mxu0 %v1581
  %2075 = vmatprep.subr.bf16.mxu0 0
  %2076 = vmatpush1.bf16.msra.mxu0 %v1580
  %2077 = vmatprep.subr.bf16.mxu0 0
  %2078 = vmatpush1.bf16.msra.mxu0 %v1579
  %2079 = vmatprep.subr.bf16.mxu0 0
  %2080 = vmatpush1.bf16.msra.mxu0 %v1578
  %2081 = vmatprep.subr.bf16.mxu0 0
  %2082 = vmatpush1.bf16.msra.mxu0 %v1577
  %2083 = vmatprep.subr.bf16.mxu0 0
  %2084 = vmatpush1.bf16.msra.mxu0 %v1576
  %2085 = vmatprep.subr.bf16.mxu0 0
  %2086 = vmatpush1.bf16.msra.mxu0 %v1575
  %2087 = vmatprep.subr.bf16.mxu0 0
  %2088 = vmatpush1.bf16.msra.mxu0 %v1574
  %2089 = vmatprep.subr.bf16.mxu0 0
  %2090 = vmatpush2.bf16.msra.mxu0 %v1589
  %2091 = vmatprep.subr.bf16.mxu0 0
  %2092 = vmatpush2.bf16.msra.mxu0 %v1588
  %2093 = vmatprep.subr.bf16.mxu0 0
  %2094 = vmatpush2.bf16.msra.mxu0 %v1587
  %2095 = vmatprep.subr.bf16.mxu0 0
  %2096 = vmatpush2.bf16.msra.mxu0 %v1586
  %2097 = vmatprep.subr.bf16.mxu0 0
  %2098 = vmatpush2.bf16.msra.mxu0 %v1585
  %2099 = vmatprep.subr.bf16.mxu0 0
  %2100 = vmatpush2.bf16.msra.mxu0 %v1584
  %2101 = vmatprep.subr.bf16.mxu0 0
  %2102 = vmatpush2.bf16.msra.mxu0 %v1583
  %2103 = vmatprep.subr.bf16.mxu0 0
  %2104 = vmatpush2.bf16.msra.mxu0 %v1582
  %2105 = vmatprep.mubr.bf16.mxu0 %v633
  %2106 = vmatmul.mubr.bf16.gmra.mxu0 %v632
  %v2107 = vpop.f32.mrf.mxu0
  %v2108 = vadd.f32 %v2059, %v2107
  %v2109 = vpop.f32.mrf.mxu0
  %v2110 = vpop.f32.mrf.mxu0
  %v2111 = vadd.f32 %v2062, %v2110
  %v2112 = vpop.f32.mrf.mxu0
  %2113 = vmatprep.mubr.bf16.mxu0 %v658
  %2114 = vmatmul.mubr.bf16.gmra.mxu0 %v657
  %v2115 = vpop.f32.mrf.mxu0
  %v2116 = vadd.f32 %v2067, %v2115
  %v2117 = vpop.f32.mrf.mxu0
  %v2118 = vpop.f32.mrf.mxu0
  %v2119 = vadd.f32 %v2070, %v2118
  %v2120 = vpop.f32.mrf.mxu0
  %2121 = vdwg.mxu0
  %2122 = vmatprep.subr.bf16.mxu0 0
  %2123 = vmatpush1.bf16.msra.mxu0 %v1597
  %2124 = vmatprep.subr.bf16.mxu0 0
  %2125 = vmatpush1.bf16.msra.mxu0 %v1596
  %2126 = vmatprep.subr.bf16.mxu0 0
  %2127 = vmatpush1.bf16.msra.mxu0 %v1595
  %2128 = vmatprep.subr.bf16.mxu0 0
  %2129 = vmatpush1.bf16.msra.mxu0 %v1594
  %2130 = vmatprep.subr.bf16.mxu0 0
  %2131 = vmatpush1.bf16.msra.mxu0 %v1593
  %2132 = vmatprep.subr.bf16.mxu0 0
  %2133 = vmatpush1.bf16.msra.mxu0 %v1592
  %2134 = vmatprep.subr.bf16.mxu0 0
  %2135 = vmatpush1.bf16.msra.mxu0 %v1591
  %2136 = vmatprep.subr.bf16.mxu0 0
  %2137 = vmatpush1.bf16.msra.mxu0 %v1590
  %2138 = vmatprep.subr.bf16.mxu0 0
  %2139 = vmatpush2.bf16.msra.mxu0 %v1605
  %2140 = vmatprep.subr.bf16.mxu0 0
  %2141 = vmatpush2.bf16.msra.mxu0 %v1604
  %2142 = vmatprep.subr.bf16.mxu0 0
  %2143 = vmatpush2.bf16.msra.mxu0 %v1603
  %2144 = vmatprep.subr.bf16.mxu0 0
  %2145 = vmatpush2.bf16.msra.mxu0 %v1602
  %2146 = vmatprep.subr.bf16.mxu0 0
  %2147 = vmatpush2.bf16.msra.mxu0 %v1601
  %2148 = vmatprep.subr.bf16.mxu0 0
  %2149 = vmatpush2.bf16.msra.mxu0 %v1600
  %2150 = vmatprep.subr.bf16.mxu0 0
  %2151 = vmatpush2.bf16.msra.mxu0 %v1599
  %2152 = vmatprep.subr.bf16.mxu0 0
  %2153 = vmatpush2.bf16.msra.mxu0 %v1598
  %2154 = vmatprep.mubr.bf16.mxu0 %v635
  %2155 = vmatmul.mubr.bf16.gmra.mxu0 %v634
  %v2156 = vpop.f32.mrf.mxu0
  %v2157 = vadd.f32 %v2108, %v2156
  %v2158 = vpop.f32.mrf.mxu0
  %v2159 = vpop.f32.mrf.mxu0
  %v2160 = vadd.f32 %v2111, %v2159
  %v2161 = vpop.f32.mrf.mxu0
  %2162 = vmatprep.mubr.bf16.mxu0 %v660
  %2163 = vmatmul.mubr.bf16.gmra.mxu0 %v659
  %v2164 = vpop.f32.mrf.mxu0
  %v2165 = vadd.f32 %v2116, %v2164
  %v2166 = vpop.f32.mrf.mxu0
  %v2167 = vpop.f32.mrf.mxu0
  %v2168 = vadd.f32 %v2119, %v2167
  %v2169 = vpop.f32.mrf.mxu0
  %2170 = vdwg.mxu0
  %2171 = vmatprep.subr.bf16.mxu0 0
  %2172 = vmatpush1.bf16.msra.mxu0 %v1613
  %2173 = vmatprep.subr.bf16.mxu0 0
  %2174 = vmatpush1.bf16.msra.mxu0 %v1612
  %2175 = vmatprep.subr.bf16.mxu0 0
  %2176 = vmatpush1.bf16.msra.mxu0 %v1611
  %2177 = vmatprep.subr.bf16.mxu0 0
  %2178 = vmatpush1.bf16.msra.mxu0 %v1610
  %2179 = vmatprep.subr.bf16.mxu0 0
  %2180 = vmatpush1.bf16.msra.mxu0 %v1609
  %2181 = vmatprep.subr.bf16.mxu0 0
  %2182 = vmatpush1.bf16.msra.mxu0 %v1608
  %2183 = vmatprep.subr.bf16.mxu0 0
  %2184 = vmatpush1.bf16.msra.mxu0 %v1607
  %2185 = vmatprep.subr.bf16.mxu0 0
  %2186 = vmatpush1.bf16.msra.mxu0 %v1606
  %2187 = vmatprep.subr.bf16.mxu0 0
  %2188 = vmatpush2.bf16.msra.mxu0 %v1621
  %2189 = vmatprep.subr.bf16.mxu0 0
  %2190 = vmatpush2.bf16.msra.mxu0 %v1620
  %2191 = vmatprep.subr.bf16.mxu0 0
  %2192 = vmatpush2.bf16.msra.mxu0 %v1619
  %2193 = vmatprep.subr.bf16.mxu0 0
  %2194 = vmatpush2.bf16.msra.mxu0 %v1618
  %2195 = vmatprep.subr.bf16.mxu0 0
  %2196 = vmatpush2.bf16.msra.mxu0 %v1617
  %2197 = vmatprep.subr.bf16.mxu0 0
  %2198 = vmatpush2.bf16.msra.mxu0 %v1616
  %2199 = vmatprep.subr.bf16.mxu0 0
  %2200 = vmatpush2.bf16.msra.mxu0 %v1615
  %2201 = vmatprep.subr.bf16.mxu0 0
  %2202 = vmatpush2.bf16.msra.mxu0 %v1614
  %2203 = vmatprep.mubr.bf16.mxu0 %v637
  %2204 = vmatmul.mubr.bf16.gmra.mxu0 %v636
  %v2205 = vpop.f32.mrf.mxu0
  %v2206 = vadd.f32 %v2157, %v2205
  %v2207 = vpop.f32.mrf.mxu0
  %v2208 = vpop.f32.mrf.mxu0
  %v2209 = vadd.f32 %v2160, %v2208
  %v2210 = vpop.f32.mrf.mxu0
  %2211 = vmatprep.mubr.bf16.mxu0 %v662
  %2212 = vmatmul.mubr.bf16.gmra.mxu0 %v661
  %v2213 = vpop.f32.mrf.mxu0
  %v2214 = vadd.f32 %v2165, %v2213
  %v2215 = vpop.f32.mrf.mxu0
  %v2216 = vpop.f32.mrf.mxu0
  %v2217 = vadd.f32 %v2168, %v2216
  %v2218 = vpop.f32.mrf.mxu0
  %2219 = vdwg.mxu0
  %2220 = vmatprep.subr.bf16.mxu0 0
  %2221 = vmatpush1.bf16.msra.mxu0 %v1629
  %2222 = vmatprep.subr.bf16.mxu0 0
  %2223 = vmatpush1.bf16.msra.mxu0 %v1628
  %2224 = vmatprep.subr.bf16.mxu0 0
  %2225 = vmatpush1.bf16.msra.mxu0 %v1627
  %2226 = vmatprep.subr.bf16.mxu0 0
  %2227 = vmatpush1.bf16.msra.mxu0 %v1626
  %2228 = vmatprep.subr.bf16.mxu0 0
  %2229 = vmatpush1.bf16.msra.mxu0 %v1625
  %2230 = vmatprep.subr.bf16.mxu0 0
  %2231 = vmatpush1.bf16.msra.mxu0 %v1624
  %2232 = vmatprep.subr.bf16.mxu0 0
  %2233 = vmatpush1.bf16.msra.mxu0 %v1623
  %2234 = vmatprep.subr.bf16.mxu0 0
  %2235 = vmatpush1.bf16.msra.mxu0 %v1622
  %2236 = vmatprep.subr.bf16.mxu0 0
  %2237 = vmatpush2.bf16.msra.mxu0 %v1637
  %2238 = vmatprep.subr.bf16.mxu0 0
  %2239 = vmatpush2.bf16.msra.mxu0 %v1636
  %2240 = vmatprep.subr.bf16.mxu0 0
  %2241 = vmatpush2.bf16.msra.mxu0 %v1635
  %2242 = vmatprep.subr.bf16.mxu0 0
  %2243 = vmatpush2.bf16.msra.mxu0 %v1634
  %2244 = vmatprep.subr.bf16.mxu0 0
  %2245 = vmatpush2.bf16.msra.mxu0 %v1633
  %2246 = vmatprep.subr.bf16.mxu0 0
  %2247 = vmatpush2.bf16.msra.mxu0 %v1632
  %2248 = vmatprep.subr.bf16.mxu0 0
  %2249 = vmatpush2.bf16.msra.mxu0 %v1631
  %2250 = vmatprep.subr.bf16.mxu0 0
  %2251 = vmatpush2.bf16.msra.mxu0 %v1630
  %2252 = vmatprep.mubr.bf16.mxu0 %v639
  %2253 = vmatmul.mubr.bf16.gmra.mxu0 %v638
  %v2254 = vpop.f32.mrf.mxu0
  %v2255 = vadd.f32 %v2206, %v2254
  %v2256 = vpop.f32.mrf.mxu0
  %v2257 = vpop.f32.mrf.mxu0
  %v2258 = vadd.f32 %v2209, %v2257
  %v2259 = vpop.f32.mrf.mxu0
  %2260 = vmatprep.mubr.bf16.mxu0 %v664
  %2261 = vmatmul.mubr.bf16.gmra.mxu0 %v663
  %v2262 = vpop.f32.mrf.mxu0
  %v2263 = vadd.f32 %v2214, %v2262
  %v2264 = vpop.f32.mrf.mxu0
  %v2265 = vpop.f32.mrf.mxu0
  %v2266 = vadd.f32 %v2217, %v2265
  %v2267 = vpop.f32.mrf.mxu0
  %2268 = vdwg.mxu0
  %2269 = vmatprep.subr.bf16.mxu0 0
  %2270 = vmatpush1.bf16.msra.mxu0 %v1645
  %2271 = vmatprep.subr.bf16.mxu0 0
  %2272 = vmatpush1.bf16.msra.mxu0 %v1644
  %2273 = vmatprep.subr.bf16.mxu0 0
  %2274 = vmatpush1.bf16.msra.mxu0 %v1643
  %2275 = vmatprep.subr.bf16.mxu0 0
  %2276 = vmatpush1.bf16.msra.mxu0 %v1642
  %2277 = vmatprep.subr.bf16.mxu0 0
  %2278 = vmatpush1.bf16.msra.mxu0 %v1641
  %2279 = vmatprep.subr.bf16.mxu0 0
  %2280 = vmatpush1.bf16.msra.mxu0 %v1640
  %2281 = vmatprep.subr.bf16.mxu0 0
  %2282 = vmatpush1.bf16.msra.mxu0 %v1639
  %2283 = vmatprep.subr.bf16.mxu0 0
  %2284 = vmatpush1.bf16.msra.mxu0 %v1638
  %2285 = vmatprep.subr.bf16.mxu0 0
  %2286 = vmatpush2.bf16.msra.mxu0 %v1653
  %2287 = vmatprep.subr.bf16.mxu0 0
  %2288 = vmatpush2.bf16.msra.mxu0 %v1652
  %2289 = vmatprep.subr.bf16.mxu0 0
  %2290 = vmatpush2.bf16.msra.mxu0 %v1651
  %2291 = vmatprep.subr.bf16.mxu0 0
  %2292 = vmatpush2.bf16.msra.mxu0 %v1650
  %2293 = vmatprep.subr.bf16.mxu0 0
  %2294 = vmatpush2.bf16.msra.mxu0 %v1649
  %2295 = vmatprep.subr.bf16.mxu0 0
  %2296 = vmatpush2.bf16.msra.mxu0 %v1648
  %2297 = vmatprep.subr.bf16.mxu0 0
  %2298 = vmatpush2.bf16.msra.mxu0 %v1647
  %2299 = vmatprep.subr.bf16.mxu0 0
  %2300 = vmatpush2.bf16.msra.mxu0 %v1646
  %2301 = vmatprep.mubr.bf16.mxu0 %v641
  %2302 = vmatmul.mubr.bf16.gmra.mxu0 %v640
  %v2303 = vpop.f32.mrf.mxu0
  %v2304 = vadd.f32 %v2255, %v2303
  %v2305 = vpop.f32.mrf.mxu0
  %v2306 = vpop.f32.mrf.mxu0
  %v2307 = vadd.f32 %v2258, %v2306
  %v2308 = vpop.f32.mrf.mxu0
  %2309 = vmatprep.mubr.bf16.mxu0 %v666
  %2310 = vmatmul.mubr.bf16.gmra.mxu0 %v665
  %v2311 = vpop.f32.mrf.mxu0
  %v2312 = vadd.f32 %v2263, %v2311
  %v2313 = vpop.f32.mrf.mxu0
  %v2314 = vpop.f32.mrf.mxu0
  %v2315 = vadd.f32 %v2266, %v2314
  %v2316 = vpop.f32.mrf.mxu0
  %2317 = vdwg.mxu0
  %2318 = vmatprep.subr.bf16.mxu0 0
  %2319 = vmatpush1.bf16.msra.mxu0 %v1661
  %2320 = vmatprep.subr.bf16.mxu0 0
  %2321 = vmatpush1.bf16.msra.mxu0 %v1660
  %2322 = vmatprep.subr.bf16.mxu0 0
  %2323 = vmatpush1.bf16.msra.mxu0 %v1659
  %2324 = vmatprep.subr.bf16.mxu0 0
  %2325 = vmatpush1.bf16.msra.mxu0 %v1658
  %2326 = vmatprep.subr.bf16.mxu0 0
  %2327 = vmatpush1.bf16.msra.mxu0 %v1657
  %2328 = vmatprep.subr.bf16.mxu0 0
  %2329 = vmatpush1.bf16.msra.mxu0 %v1656
  %2330 = vmatprep.subr.bf16.mxu0 0
  %2331 = vmatpush1.bf16.msra.mxu0 %v1655
  %2332 = vmatprep.subr.bf16.mxu0 0
  %2333 = vmatpush1.bf16.msra.mxu0 %v1654
  %2334 = vmatprep.subr.bf16.mxu0 0
  %2335 = vmatpush2.bf16.msra.mxu0 %v1669
  %2336 = vmatprep.subr.bf16.mxu0 0
  %2337 = vmatpush2.bf16.msra.mxu0 %v1668
  %2338 = vmatprep.subr.bf16.mxu0 0
  %2339 = vmatpush2.bf16.msra.mxu0 %v1667
  %2340 = vmatprep.subr.bf16.mxu0 0
  %2341 = vmatpush2.bf16.msra.mxu0 %v1666
  %2342 = vmatprep.subr.bf16.mxu0 0
  %2343 = vmatpush2.bf16.msra.mxu0 %v1665
  %2344 = vmatprep.subr.bf16.mxu0 0
  %2345 = vmatpush2.bf16.msra.mxu0 %v1664
  %2346 = vmatprep.subr.bf16.mxu0 0
  %2347 = vmatpush2.bf16.msra.mxu0 %v1663
  %2348 = vmatprep.subr.bf16.mxu0 0
  %2349 = vmatpush2.bf16.msra.mxu0 %v1662
  %2350 = vmatprep.mubr.bf16.mxu0 %v643
  %2351 = vmatmul.mubr.bf16.gmra.mxu0 %v642
  %v2352 = vpop.f32.mrf.mxu0
  %v2353 = vadd.f32 %v2304, %v2352
  %v2354 = vpop.f32.mrf.mxu0
  %v2355 = vpop.f32.mrf.mxu0
  %v2356 = vadd.f32 %v2307, %v2355
  %v2357 = vpop.f32.mrf.mxu0
  %2358 = vmatprep.mubr.bf16.mxu0 %v668
  %2359 = vmatmul.mubr.bf16.gmra.mxu0 %v667
  %v2360 = vpop.f32.mrf.mxu0
  %v2361 = vadd.f32 %v2312, %v2360
  %v2362 = vpop.f32.mrf.mxu0
  %v2363 = vpop.f32.mrf.mxu0
  %v2364 = vadd.f32 %v2315, %v2363
  %v2365 = vpop.f32.mrf.mxu0
  %2366 = vdwg.mxu0
  %2367 = vmatprep.subr.bf16.mxu0 0
  %2368 = vmatpush1.bf16.msra.mxu0 %v1677
  %2369 = vmatprep.subr.bf16.mxu0 0
  %2370 = vmatpush1.bf16.msra.mxu0 %v1676
  %2371 = vmatprep.subr.bf16.mxu0 0
  %2372 = vmatpush1.bf16.msra.mxu0 %v1675
  %2373 = vmatprep.subr.bf16.mxu0 0
  %2374 = vmatpush1.bf16.msra.mxu0 %v1674
  %2375 = vmatprep.subr.bf16.mxu0 0
  %2376 = vmatpush1.bf16.msra.mxu0 %v1673
  %2377 = vmatprep.subr.bf16.mxu0 0
  %2378 = vmatpush1.bf16.msra.mxu0 %v1672
  %2379 = vmatprep.subr.bf16.mxu0 0
  %2380 = vmatpush1.bf16.msra.mxu0 %v1671
  %2381 = vmatprep.subr.bf16.mxu0 0
  %2382 = vmatpush1.bf16.msra.mxu0 %v1670
  %2383 = vmatprep.subr.bf16.mxu0 0
  %2384 = vmatpush2.bf16.msra.mxu0 %v1685
  %2385 = vmatprep.subr.bf16.mxu0 0
  %2386 = vmatpush2.bf16.msra.mxu0 %v1684
  %2387 = vmatprep.subr.bf16.mxu0 0
  %2388 = vmatpush2.bf16.msra.mxu0 %v1683
  %2389 = vmatprep.subr.bf16.mxu0 0
  %2390 = vmatpush2.bf16.msra.mxu0 %v1682
  %2391 = vmatprep.subr.bf16.mxu0 0
  %2392 = vmatpush2.bf16.msra.mxu0 %v1681
  %2393 = vmatprep.subr.bf16.mxu0 0
  %2394 = vmatpush2.bf16.msra.mxu0 %v1680
  %2395 = vmatprep.subr.bf16.mxu0 0
  %2396 = vmatpush2.bf16.msra.mxu0 %v1679
  %2397 = vmatprep.subr.bf16.mxu0 0
  %2398 = vmatpush2.bf16.msra.mxu0 %v1678
  %2399 = vmatprep.mubr.bf16.mxu0 %v645
  %2400 = vmatmul.mubr.bf16.gmra.mxu0 %v644
  %v2401 = vpop.f32.mrf.mxu0
  %v2402 = vadd.f32 %v2353, %v2401
  %v2403 = vpop.f32.mrf.mxu0
  %v2404 = vpop.f32.mrf.mxu0
  %v2405 = vadd.f32 %v2356, %v2404
  %v2406 = vpop.f32.mrf.mxu0
  %2407 = vmatprep.mubr.bf16.mxu0 %v670
  %2408 = vmatmul.mubr.bf16.gmra.mxu0 %v669
  %v2409 = vpop.f32.mrf.mxu0
  %v2410 = vadd.f32 %v2361, %v2409
  %v2411 = vpop.f32.mrf.mxu0
  %v2412 = vpop.f32.mrf.mxu0
  %v2413 = vadd.f32 %v2364, %v2412
  %v2414 = vpop.f32.mrf.mxu0
  %2415 = vdwg.mxu0
  %2416 = vmatprep.subr.bf16.mxu0 0
  %2417 = vmatpush1.bf16.msra.mxu0 %v1693
  %2418 = vmatprep.subr.bf16.mxu0 0
  %2419 = vmatpush1.bf16.msra.mxu0 %v1692
  %2420 = vmatprep.subr.bf16.mxu0 0
  %2421 = vmatpush1.bf16.msra.mxu0 %v1691
  %2422 = vmatprep.subr.bf16.mxu0 0
  %2423 = vmatpush1.bf16.msra.mxu0 %v1690
  %2424 = vmatprep.subr.bf16.mxu0 0
  %2425 = vmatpush1.bf16.msra.mxu0 %v1689
  %2426 = vmatprep.subr.bf16.mxu0 0
  %2427 = vmatpush1.bf16.msra.mxu0 %v1688
  %2428 = vmatprep.subr.bf16.mxu0 0
  %2429 = vmatpush1.bf16.msra.mxu0 %v1687
  %2430 = vmatprep.subr.bf16.mxu0 0
  %2431 = vmatpush1.bf16.msra.mxu0 %v1686
  %2432 = vmatprep.subr.bf16.mxu0 0
  %2433 = vmatpush2.bf16.msra.mxu0 %v1701
  %2434 = vmatprep.subr.bf16.mxu0 0
  %2435 = vmatpush2.bf16.msra.mxu0 %v1700
  %2436 = vmatprep.subr.bf16.mxu0 0
  %2437 = vmatpush2.bf16.msra.mxu0 %v1699
  %2438 = vmatprep.subr.bf16.mxu0 0
  %2439 = vmatpush2.bf16.msra.mxu0 %v1698
  %2440 = vmatprep.subr.bf16.mxu0 0
  %2441 = vmatpush2.bf16.msra.mxu0 %v1697
  %2442 = vmatprep.subr.bf16.mxu0 0
  %2443 = vmatpush2.bf16.msra.mxu0 %v1696
  %2444 = vmatprep.subr.bf16.mxu0 0
  %2445 = vmatpush2.bf16.msra.mxu0 %v1695
  %2446 = vmatprep.subr.bf16.mxu0 0
  %2447 = vmatpush2.bf16.msra.mxu0 %v1694
  %2448 = vmatprep.mubr.bf16.mxu0 %v647
  %2449 = vmatmul.mubr.bf16.gmra.mxu0 %v646
  %v2450 = vpop.f32.mrf.mxu0
  %v2451 = vadd.f32 %v2402, %v2450
  %v2452 = vpop.f32.mrf.mxu0
  %v2453 = vpop.f32.mrf.mxu0
  %v2454 = vadd.f32 %v2405, %v2453
  %v2455 = vpop.f32.mrf.mxu0
  %2456 = vmatprep.mubr.bf16.mxu0 %v672
  %2457 = vmatmul.mubr.bf16.gmra.mxu0 %v671
  %v2458 = vpop.f32.mrf.mxu0
  %v2459 = vadd.f32 %v2410, %v2458
  %v2460 = vpop.f32.mrf.mxu0
  %v2461 = vpop.f32.mrf.mxu0
  %v2462 = vadd.f32 %v2413, %v2461
  %v2463 = vpop.f32.mrf.mxu0
  %2464 = vdwg.mxu0
  %2465 = vmatprep.subr.bf16.mxu0 0
  %2466 = vmatpush1.bf16.msra.mxu0 %v1709
  %2467 = vmatprep.subr.bf16.mxu0 0
  %2468 = vmatpush1.bf16.msra.mxu0 %v1708
  %2469 = vmatprep.subr.bf16.mxu0 0
  %2470 = vmatpush1.bf16.msra.mxu0 %v1707
  %2471 = vmatprep.subr.bf16.mxu0 0
  %2472 = vmatpush1.bf16.msra.mxu0 %v1706
  %2473 = vmatprep.subr.bf16.mxu0 0
  %2474 = vmatpush1.bf16.msra.mxu0 %v1705
  %2475 = vmatprep.subr.bf16.mxu0 0
  %2476 = vmatpush1.bf16.msra.mxu0 %v1704
  %2477 = vmatprep.subr.bf16.mxu0 0
  %2478 = vmatpush1.bf16.msra.mxu0 %v1703
  %2479 = vmatprep.subr.bf16.mxu0 0
  %2480 = vmatpush1.bf16.msra.mxu0 %v1702
  %2481 = vmatprep.subr.bf16.mxu0 0
  %2482 = vmatpush2.bf16.msra.mxu0 %v1717
  %2483 = vmatprep.subr.bf16.mxu0 0
  %2484 = vmatpush2.bf16.msra.mxu0 %v1716
  %2485 = vmatprep.subr.bf16.mxu0 0
  %2486 = vmatpush2.bf16.msra.mxu0 %v1715
  %2487 = vmatprep.subr.bf16.mxu0 0
  %2488 = vmatpush2.bf16.msra.mxu0 %v1714
  %2489 = vmatprep.subr.bf16.mxu0 0
  %2490 = vmatpush2.bf16.msra.mxu0 %v1713
  %2491 = vmatprep.subr.bf16.mxu0 0
  %2492 = vmatpush2.bf16.msra.mxu0 %v1712
  %2493 = vmatprep.subr.bf16.mxu0 0
  %2494 = vmatpush2.bf16.msra.mxu0 %v1711
  %2495 = vmatprep.subr.bf16.mxu0 0
  %2496 = vmatpush2.bf16.msra.mxu0 %v1710
  %2497 = vmatprep.mubr.bf16.mxu0 %v649
  %2498 = vmatmul.mubr.bf16.gmra.mxu0 %v648
  %v2499 = vpop.f32.mrf.mxu0
  %v2500 = vadd.f32 %v2451, %v2499
  %v2501 = vpop.f32.mrf.mxu0
  %v2502 = vpop.f32.mrf.mxu0
  %v2503 = vadd.f32 %v2454, %v2502
  %v2504 = vpop.f32.mrf.mxu0
  %2505 = vmatprep.mubr.bf16.mxu0 %v674
  %2506 = vmatmul.mubr.bf16.gmra.mxu0 %v673
  %v2507 = vpop.f32.mrf.mxu0
  %v2508 = vadd.f32 %v2459, %v2507
  %v2509 = vpop.f32.mrf.mxu0
  %v2510 = vpop.f32.mrf.mxu0
  %v2511 = vadd.f32 %v2462, %v2510
  %v2512 = vpop.f32.mrf.mxu0
  %2513 = vdwg.mxu0
  %2514 = vmatprep.subr.bf16.mxu0 0
  %2515 = vmatpush1.bf16.msra.mxu0 %v1725
  %2516 = vmatprep.subr.bf16.mxu0 0
  %2517 = vmatpush1.bf16.msra.mxu0 %v1724
  %2518 = vmatprep.subr.bf16.mxu0 0
  %2519 = vmatpush1.bf16.msra.mxu0 %v1723
  %2520 = vmatprep.subr.bf16.mxu0 0
  %2521 = vmatpush1.bf16.msra.mxu0 %v1722
  %2522 = vmatprep.subr.bf16.mxu0 0
  %2523 = vmatpush1.bf16.msra.mxu0 %v1721
  %2524 = vmatprep.subr.bf16.mxu0 0
  %2525 = vmatpush1.bf16.msra.mxu0 %v1720
  %2526 = vmatprep.subr.bf16.mxu0 0
  %2527 = vmatpush1.bf16.msra.mxu0 %v1719
  %2528 = vmatprep.subr.bf16.mxu0 0
  %2529 = vmatpush1.bf16.msra.mxu0 %v1718
  %2530 = vmatprep.subr.bf16.mxu0 0
  %2531 = vmatpush2.bf16.msra.mxu0 0
  %2532 = vmatprep.subr.bf16.mxu0 0
  %2533 = vmatpush2.bf16.msra.mxu0 0
  %2534 = vmatprep.subr.bf16.mxu0 0
  %2535 = vmatpush2.bf16.msra.mxu0 0
  %2536 = vmatprep.subr.bf16.mxu0 0
  %2537 = vmatpush2.bf16.msra.mxu0 0
  %2538 = vmatprep.subr.bf16.mxu0 0
  %2539 = vmatpush2.bf16.msra.mxu0 0
  %2540 = vmatprep.subr.bf16.mxu0 0
  %2541 = vmatpush2.bf16.msra.mxu0 0
  %2542 = vmatprep.subr.bf16.mxu0 0
  %2543 = vmatpush2.bf16.msra.mxu0 0
  %2544 = vmatprep.subr.bf16.mxu0 0
  %2545 = vmatpush2.bf16.msra.mxu0 0
  %2546 = vmatprep.mubr.bf16.mxu0 0
  %2547 = vmatmul.mubr.bf16.gmra.mxu0 %v650
  %v2548 = vpop.f32.mrf.mxu0
  %v2549 = vadd.f32 %v2500, %v2548
  %v2550 = vpop.f32.mrf.mxu0
  %v2551 = vpop.f32.mrf.mxu0
  %v2552 = vadd.f32 %v2503, %v2551
  %v2553 = vpop.f32.mrf.mxu0
  %2554 = vmatprep.mubr.bf16.mxu0 0
  %2555 = vmatmul.mubr.bf16.gmra.mxu0 %v675
  %v2556 = vpop.f32.mrf.mxu0
  %v2557 = vadd.f32 %v2508, %v2556
  %v2558 = vpop.f32.mrf.mxu0
  %v2559 = vpop.f32.mrf.mxu0
  %v2560 = vadd.f32 %v2511, %v2559
  %v2561 = vpop.f32.mrf.mxu0
  %2562 = vdwg.mxu0
  %v2563 = vmax.f32 %v2549, 0.0
  %v2564 = vmax.f32 %v2552, 0.0
  %v2565 = vmax.f32 %v2557, 0.0
  %v2566 = vmax.f32 %v2560, 0.0
  %2567 = vst [vmem:[%s3] sm:$0xff] %v2563
  %2568 = vst [vmem:[%s3 + $0x8] sm:$0xff] %v2564
  %2569 = vst [vmem:[%s3 + $0x10] sm:$0xff] %v2565
  %2570 = vst [vmem:[%s3 + $0x18] sm:$0xff] %v2566
  // Predicated region
  $region14: #{basic_model_forward.6} parent=0 // pred_check
    _
  $region15: #{basic_model_forward.6} parent=0 // pred_check_branch
    %2572 = sbr.rel (0) target = $region17
  $region16: #{basic_model_forward.6} parent=0 // pred_region
    _
  $region17: #{basic_model_forward.6} parent=0 // pred_fallthru
    _
  // Predicated region
  $region18: #{basic_model_forward.6} parent=0 // pred_check
    _
  $region19: #{basic_model_forward.6} parent=0 // pred_check_branch
    %2574 = sbr.rel (0) target = $region21
  $region20: #{basic_model_forward.6} parent=0 // pred_region
    _
  $region21: #{basic_model_forward.6} parent=0 // pred_fallthru
    _

// kernel: basic_model_forward.7
$region0: #{basic_model_forward.7}
  #allocation0 [shape = 'u32[]', space=smem, size = 0x4, offset = 0x4, fixed_abs, tag = 'smem constant byte address 0x4 - core index']
  #allocation1 [shape = 'u32[144,128]{1,0:T(1,128)}', space=vmem, size = 0x12000, scoped, tag = 'internal scratch']
  %s0 = inlined_call_operand.vmem [shape: bf16[2,2048], index: 0, kind: input, shape index: {}]
  %s1 = inlined_call_operand.vmem [shape: bf16[2048,128], index: 1, kind: input, shape index: {}]
  %s2 = inlined_call_operand.vmem [shape: f32[1,128], index: 2, kind: input, shape index: {}]
  %s3 = inlined_call_operand.hbm [shape: f32[2,128], index: 3, kind: output, shape index: {}]
  %s4 = sld [smem:[#allocation0]]
  $region22: #{basic_model_forward.7} parent=0
    _
  %s6 = ssub.s32 1, %s4
  %s7 = scalar_select 0, %s6, %s4
  $region1: #{basic_model_forward.7} parent=0
    #allocation2 [shape = 'u8[4096]{0}', space=vmem, size = 0x1000, scoped, tag = 'output window, operand 0, single buffered']
    #allocation3 [shape = 's32[1]{0}', space=sflag, size = 0x4, scoped, tag = 'scoped memory for basic_model_forward.7']
    %8 = vsyncpa [#allocation3], 0
    // Predicated region
    $region2: #{basic_model_forward.7} parent=1 // pred_check
      _
    $region3: #{basic_model_forward.7} parent=1 // pred_check_branch
      %10 = sbr.rel (0) target = $region5
    $region4: #{basic_model_forward.7} parent=1 // pred_region
      _
    $region5: #{basic_model_forward.7} parent=1 // pred_fallthru
      _
    // Predicated region
    $region6: #{basic_model_forward.7} parent=1 // pred_check
      _
    $region7: #{basic_model_forward.7} parent=1 // pred_check_branch
      %12 = sbr.rel (0) target = $region9
    $region8: #{basic_model_forward.7} parent=1 // pred_region
      _
    $region9: #{basic_model_forward.7} parent=1 // pred_fallthru
      _
    // Predicated region
    $region10: #{basic_model_forward.7} parent=1 // pred_check
      _
    $region11: #{basic_model_forward.7} parent=1 // pred_check_branch
      %14 = sbr.rel (0) target = $region13
    $region12: #{basic_model_forward.7} parent=1 // pred_region
      _
    $region13: #{basic_model_forward.7} parent=1 // pred_fallthru
      _
    %v16 = vld [vmem:[%s0] sm:$0xff]
    %v17 = vld [vmem:[%s0 + $0x8] sm:$0xff]
    %v18 = vld [vmem:[%s0 + $0x10] sm:$0xff]
    %v19 = vld [vmem:[%s0 + $0x18] sm:$0xff]
    %v20 = vld [vmem:[%s0 + $0x20] sm:$0xff]
    %v21 = vld [vmem:[%s0 + $0x28] sm:$0xff]
    %v22 = vld [vmem:[%s0 + $0x30] sm:$0xff]
    %v23 = vld [vmem:[%s0 + $0x38] sm:$0xff]
    %v24 = vld [vmem:[%s1] sm:$0xf]
    %v25 = vld [vmem:[%s1 + $0x4] sm:$0xf]
    %v26 = vld [vmem:[%s1 + $0x8] sm:$0xf]
    %v27 = vld [vmem:[%s1 + $0xc] sm:$0xf]
    %v28 = vld [vmem:[%s1 + $0x10] sm:$0xf]
    %v29 = vld [vmem:[%s1 + $0x14] sm:$0xf]
    %v30 = vld [vmem:[%s1 + $0x18] sm:$0xf]
    %v31 = vld [vmem:[%s1 + $0x1c] sm:$0xf]
    %v32 = vld [vmem:[%s1 + $0x20] sm:$0xf]
    %v33 = vld [vmem:[%s1 + $0x24] sm:$0xf]
    %v34 = vld [vmem:[%s1 + $0x28] sm:$0xf]
    %v35 = vld [vmem:[%s1 + $0x2c] sm:$0xf]
    %v36 = vld [vmem:[%s1 + $0x30] sm:$0xf]
    %v37 = vld [vmem:[%s1 + $0x34] sm:$0xf]
    %v38 = vld [vmem:[%s1 + $0x38] sm:$0xf]
    %v39 = vld [vmem:[%s1 + $0x3c] sm:$0xf]
    %v40 = vld [vmem:[%s1 + $0x40] sm:$0xf]
    %v41 = vld [vmem:[%s1 + $0x44] sm:$0xf]
    %v42 = vld [vmem:[%s1 + $0x48] sm:$0xf]
    %v43 = vld [vmem:[%s1 + $0x4c] sm:$0xf]
    %v44 = vld [vmem:[%s1 + $0x50] sm:$0xf]
    %v45 = vld [vmem:[%s1 + $0x54] sm:$0xf]
    %v46 = vld [vmem:[%s1 + $0x58] sm:$0xf]
    %v47 = vld [vmem:[%s1 + $0x5c] sm:$0xf]
    %v48 = vld [vmem:[%s1 + $0x60] sm:$0xf]
    %v49 = vld [vmem:[%s1 + $0x64] sm:$0xf]
    %v50 = vld [vmem:[%s1 + $0x68] sm:$0xf]
    %v51 = vld [vmem:[%s1 + $0x6c] sm:$0xf]
    %v52 = vld [vmem:[%s1 + $0x70] sm:$0xf]
    %v53 = vld [vmem:[%s1 + $0x74] sm:$0xf]
    %v54 = vld [vmem:[%s1 + $0x78] sm:$0xf]
    %v55 = vld [vmem:[%s1 + $0x7c] sm:$0xf]
    %v56 = vld [vmem:[%s1 + $0x80] sm:$0xf]
    %v57 = vld [vmem:[%s1 + $0x84] sm:$0xf]
    %v58 = vld [vmem:[%s1 + $0x88] sm:$0xf]
    %v59 = vld [vmem:[%s1 + $0x8c] sm:$0xf]
    %v60 = vld [vmem:[%s1 + $0x90] sm:$0xf]
    %v61 = vld [vmem:[%s1 + $0x94] sm:$0xf]
    %v62 = vld [vmem:[%s1 + $0x98] sm:$0xf]
    %v63 = vld [vmem:[%s1 + $0x9c] sm:$0xf]
    %v64 = vld [vmem:[%s1 + $0xa0] sm:$0xf]
    %v65 = vld [vmem:[%s1 + $0xa4] sm:$0xf]
    %v66 = vld [vmem:[%s1 + $0xa8] sm:$0xf]
    %v67 = vld [vmem:[%s1 + $0xac] sm:$0xf]
    %v68 = vld [vmem:[%s1 + $0xb0] sm:$0xf]
    %v69 = vld [vmem:[%s1 + $0xb4] sm:$0xf]
    %v70 = vld [vmem:[%s1 + $0xb8] sm:$0xf]
    %v71 = vld [vmem:[%s1 + $0xbc] sm:$0xf]
    %v72 = vld [vmem:[%s1 + $0xc0] sm:$0xf]
    %v73 = vld [vmem:[%s1 + $0xc4] sm:$0xf]
    %v74 = vld [vmem:[%s1 + $0xc8] sm:$0xf]
    %v75 = vld [vmem:[%s1 + $0xcc] sm:$0xf]
    %v76 = vld [vmem:[%s1 + $0xd0] sm:$0xf]
    %v77 = vld [vmem:[%s1 + $0xd4] sm:$0xf]
    %v78 = vld [vmem:[%s1 + $0xd8] sm:$0xf]
    %v79 = vld [vmem:[%s1 + $0xdc] sm:$0xf]
    %v80 = vld [vmem:[%s1 + $0xe0] sm:$0xf]
    %v81 = vld [vmem:[%s1 + $0xe4] sm:$0xf]
    %v82 = vld [vmem:[%s1 + $0xe8] sm:$0xf]
    %v83 = vld [vmem:[%s1 + $0xec] sm:$0xf]
    %v84 = vld [vmem:[%s1 + $0xf0] sm:$0xf]
    %v85 = vld [vmem:[%s1 + $0xf4] sm:$0xf]
    %v86 = vld [vmem:[%s1 + $0xf8] sm:$0xf]
    %v87 = vld [vmem:[%s1 + $0xfc] sm:$0xf]
    %v88 = vld [vmem:[%s1 + $0x100] sm:$0xf]
    %v89 = vld [vmem:[%s1 + $0x104] sm:$0xf]
    %v90 = vld [vmem:[%s1 + $0x108] sm:$0xf]
    %v91 = vld [vmem:[%s1 + $0x10c] sm:$0xf]
    %v92 = vld [vmem:[%s1 + $0x110] sm:$0xf]
    %v93 = vld [vmem:[%s1 + $0x114] sm:$0xf]
    %v94 = vld [vmem:[%s1 + $0x118] sm:$0xf]
    %v95 = vld [vmem:[%s1 + $0x11c] sm:$0xf]
    %v96 = vld [vmem:[%s1 + $0x120] sm:$0xf]
    %v97 = vld [vmem:[%s1 + $0x124] sm:$0xf]
    %v98 = vld [vmem:[%s1 + $0x128] sm:$0xf]
    %v99 = vld [vmem:[%s1 + $0x12c] sm:$0xf]
    %v100 = vld [vmem:[%s1 + $0x130] sm:$0xf]
    %v101 = vld [vmem:[%s1 + $0x134] sm:$0xf]
    %v102 = vld [vmem:[%s1 + $0x138] sm:$0xf]
    %v103 = vld [vmem:[%s1 + $0x13c] sm:$0xf]
    %v104 = vld [vmem:[%s1 + $0x140] sm:$0xf]
    %v105 = vld [vmem:[%s1 + $0x144] sm:$0xf]
    %v106 = vld [vmem:[%s1 + $0x148] sm:$0xf]
    %v107 = vld [vmem:[%s1 + $0x14c] sm:$0xf]
    %v108 = vld [vmem:[%s1 + $0x150] sm:$0xf]
    %v109 = vld [vmem:[%s1 + $0x154] sm:$0xf]
    %v110 = vld [vmem:[%s1 + $0x158] sm:$0xf]
    %v111 = vld [vmem:[%s1 + $0x15c] sm:$0xf]
    %v112 = vld [vmem:[%s1 + $0x160] sm:$0xf]
    %v113 = vld [vmem:[%s1 + $0x164] sm:$0xf]
    %v114 = vld [vmem:[%s1 + $0x168] sm:$0xf]
    %v115 = vld [vmem:[%s1 + $0x16c] sm:$0xf]
    %v116 = vld [vmem:[%s1 + $0x170] sm:$0xf]
    %v117 = vld [vmem:[%s1 + $0x174] sm:$0xf]
    %v118 = vld [vmem:[%s1 + $0x178] sm:$0xf]
    %v119 = vld [vmem:[%s1 + $0x17c] sm:$0xf]
    %v120 = vld [vmem:[%s1 + $0x180] sm:$0xf]
    %v121 = vld [vmem:[%s1 + $0x184] sm:$0xf]
    %v122 = vld [vmem:[%s1 + $0x188] sm:$0xf]
    %v123 = vld [vmem:[%s1 + $0x18c] sm:$0xf]
    %v124 = vld [vmem:[%s1 + $0x190] sm:$0xf]
    %v125 = vld [vmem:[%s1 + $0x194] sm:$0xf]
    %v126 = vld [vmem:[%s1 + $0x198] sm:$0xf]
    %v127 = vld [vmem:[%s1 + $0x19c] sm:$0xf]
    %v128 = vld [vmem:[%s1 + $0x1a0] sm:$0xf]
    %v129 = vld [vmem:[%s1 + $0x1a4] sm:$0xf]
    %v130 = vld [vmem:[%s1 + $0x1a8] sm:$0xf]
    %v131 = vld [vmem:[%s1 + $0x1ac] sm:$0xf]
    %v132 = vld [vmem:[%s1 + $0x1b0] sm:$0xf]
    %v133 = vld [vmem:[%s1 + $0x1b4] sm:$0xf]
    %v134 = vld [vmem:[%s1 + $0x1b8] sm:$0xf]
    %v135 = vld [vmem:[%s1 + $0x1bc] sm:$0xf]
    %v136 = vld [vmem:[%s1 + $0x1c0] sm:$0xf]
    %v137 = vld [vmem:[%s1 + $0x1c4] sm:$0xf]
    %v138 = vld [vmem:[%s1 + $0x1c8] sm:$0xf]
    %v139 = vld [vmem:[%s1 + $0x1cc] sm:$0xf]
    %v140 = vld [vmem:[%s1 + $0x1d0] sm:$0xf]
    %v141 = vld [vmem:[%s1 + $0x1d4] sm:$0xf]
    %v142 = vld [vmem:[%s1 + $0x1d8] sm:$0xf]
    %v143 = vld [vmem:[%s1 + $0x1dc] sm:$0xf]
    %v144 = vld [vmem:[%s1 + $0x1e0] sm:$0xf]
    %v145 = vld [vmem:[%s1 + $0x1e4] sm:$0xf]
    %v146 = vld [vmem:[%s1 + $0x1e8] sm:$0xf]
    %v147 = vld [vmem:[%s1 + $0x1ec] sm:$0xf]
    %v148 = vld [vmem:[%s1 + $0x1f0] sm:$0xf]
    %v149 = vld [vmem:[%s1 + $0x1f4] sm:$0xf]
    %v150 = vld [vmem:[%s1 + $0x1f8] sm:$0xf]
    %v151 = vld [vmem:[%s1 + $0x1fc] sm:$0xf]
    %v152 = vld [vmem:[%s1 + $0x200] sm:$0xf]
    %v153 = vld [vmem:[%s1 + $0x204] sm:$0xf]
    %v154 = vld [vmem:[%s1 + $0x208] sm:$0xf]
    %v155 = vld [vmem:[%s1 + $0x20c] sm:$0xf]
    %v156 = vld [vmem:[%s1 + $0x210] sm:$0xf]
    %v157 = vld [vmem:[%s1 + $0x214] sm:$0xf]
    %v158 = vld [vmem:[%s1 + $0x218] sm:$0xf]
    %v159 = vld [vmem:[%s1 + $0x21c] sm:$0xf]
    %v160 = vld [vmem:[%s1 + $0x220] sm:$0xf]
    %v161 = vld [vmem:[%s1 + $0x224] sm:$0xf]
    %v162 = vld [vmem:[%s1 + $0x228] sm:$0xf]
    %v163 = vld [vmem:[%s1 + $0x22c] sm:$0xf]
    %v164 = vld [vmem:[%s1 + $0x230] sm:$0xf]
    %v165 = vld [vmem:[%s1 + $0x234] sm:$0xf]
    %v166 = vld [vmem:[%s1 + $0x238] sm:$0xf]
    %v167 = vld [vmem:[%s1 + $0x23c] sm:$0xf]
    %v168 = vld [vmem:[%s1 + $0x240] sm:$0xf]
    %v169 = vld [vmem:[%s1 + $0x244] sm:$0xf]
    %v170 = vld [vmem:[%s1 + $0x248] sm:$0xf]
    %v171 = vld [vmem:[%s1 + $0x24c] sm:$0xf]
    %v172 = vld [vmem:[%s1 + $0x250] sm:$0xf]
    %v173 = vld [vmem:[%s1 + $0x254] sm:$0xf]
    %v174 = vld [vmem:[%s1 + $0x258] sm:$0xf]
    %v175 = vld [vmem:[%s1 + $0x25c] sm:$0xf]
    %v176 = vld [vmem:[%s1 + $0x260] sm:$0xf]
    %v177 = vld [vmem:[%s1 + $0x264] sm:$0xf]
    %v178 = vld [vmem:[%s1 + $0x268] sm:$0xf]
    %v179 = vld [vmem:[%s1 + $0x26c] sm:$0xf]
    %v180 = vld [vmem:[%s1 + $0x270] sm:$0xf]
    %v181 = vld [vmem:[%s1 + $0x274] sm:$0xf]
    %v182 = vld [vmem:[%s1 + $0x278] sm:$0xf]
    %v183 = vld [vmem:[%s1 + $0x27c] sm:$0xf]
    %v184 = vld [vmem:[%s1 + $0x280] sm:$0xf]
    %v185 = vld [vmem:[%s1 + $0x284] sm:$0xf]
    %v186 = vld [vmem:[%s1 + $0x288] sm:$0xf]
    %v187 = vld [vmem:[%s1 + $0x28c] sm:$0xf]
    %v188 = vld [vmem:[%s1 + $0x290] sm:$0xf]
    %v189 = vld [vmem:[%s1 + $0x294] sm:$0xf]
    %v190 = vld [vmem:[%s1 + $0x298] sm:$0xf]
    %v191 = vld [vmem:[%s1 + $0x29c] sm:$0xf]
    %v192 = vld [vmem:[%s1 + $0x2a0] sm:$0xf]
    %v193 = vld [vmem:[%s1 + $0x2a4] sm:$0xf]
    %v194 = vld [vmem:[%s1 + $0x2a8] sm:$0xf]
    %v195 = vld [vmem:[%s1 + $0x2ac] sm:$0xf]
    %v196 = vld [vmem:[%s1 + $0x2b0] sm:$0xf]
    %v197 = vld [vmem:[%s1 + $0x2b4] sm:$0xf]
    %v198 = vld [vmem:[%s1 + $0x2b8] sm:$0xf]
    %v199 = vld [vmem:[%s1 + $0x2bc] sm:$0xf]
    %v200 = vld [vmem:[%s1 + $0x2c0] sm:$0xf]
    %v201 = vld [vmem:[%s1 + $0x2c4] sm:$0xf]
    %v202 = vld [vmem:[%s1 + $0x2c8] sm:$0xf]
    %v203 = vld [vmem:[%s1 + $0x2cc] sm:$0xf]
    %v204 = vld [vmem:[%s1 + $0x2d0] sm:$0xf]
    %v205 = vld [vmem:[%s1 + $0x2d4] sm:$0xf]
    %v206 = vld [vmem:[%s1 + $0x2d8] sm:$0xf]
    %v207 = vld [vmem:[%s1 + $0x2dc] sm:$0xf]
    %v208 = vld [vmem:[%s1 + $0x2e0] sm:$0xf]
    %v209 = vld [vmem:[%s1 + $0x2e4] sm:$0xf]
    %v210 = vld [vmem:[%s1 + $0x2e8] sm:$0xf]
    %v211 = vld [vmem:[%s1 + $0x2ec] sm:$0xf]
    %v212 = vld [vmem:[%s1 + $0x2f0] sm:$0xf]
    %v213 = vld [vmem:[%s1 + $0x2f4] sm:$0xf]
    %v214 = vld [vmem:[%s1 + $0x2f8] sm:$0xf]
    %v215 = vld [vmem:[%s1 + $0x2fc] sm:$0xf]
    %v216 = vld [vmem:[%s1 + $0x300] sm:$0xf]
    %v217 = vld [vmem:[%s1 + $0x304] sm:$0xf]
    %v218 = vld [vmem:[%s1 + $0x308] sm:$0xf]
    %v219 = vld [vmem:[%s1 + $0x30c] sm:$0xf]
    %v220 = vld [vmem:[%s1 + $0x310] sm:$0xf]
    %v221 = vld [vmem:[%s1 + $0x314] sm:$0xf]
    %v222 = vld [vmem:[%s1 + $0x318] sm:$0xf]
    %v223 = vld [vmem:[%s1 + $0x31c] sm:$0xf]
    %v224 = vld [vmem:[%s1 + $0x320] sm:$0xf]
    %v225 = vld [vmem:[%s1 + $0x324] sm:$0xf]
    %v226 = vld [vmem:[%s1 + $0x328] sm:$0xf]
    %v227 = vld [vmem:[%s1 + $0x32c] sm:$0xf]
    %v228 = vld [vmem:[%s1 + $0x330] sm:$0xf]
    %v229 = vld [vmem:[%s1 + $0x334] sm:$0xf]
    %v230 = vld [vmem:[%s1 + $0x338] sm:$0xf]
    %v231 = vld [vmem:[%s1 + $0x33c] sm:$0xf]
    %v232 = vld [vmem:[%s1 + $0x340] sm:$0xf]
    %v233 = vld [vmem:[%s1 + $0x344] sm:$0xf]
    %v234 = vld [vmem:[%s1 + $0x348] sm:$0xf]
    %v235 = vld [vmem:[%s1 + $0x34c] sm:$0xf]
    %v236 = vld [vmem:[%s1 + $0x350] sm:$0xf]
    %v237 = vld [vmem:[%s1 + $0x354] sm:$0xf]
    %v238 = vld [vmem:[%s1 + $0x358] sm:$0xf]
    %v239 = vld [vmem:[%s1 + $0x35c] sm:$0xf]
    %v240 = vld [vmem:[%s1 + $0x360] sm:$0xf]
    %v241 = vld [vmem:[%s1 + $0x364] sm:$0xf]
    %v242 = vld [vmem:[%s1 + $0x368] sm:$0xf]
    %v243 = vld [vmem:[%s1 + $0x36c] sm:$0xf]
    %v244 = vld [vmem:[%s1 + $0x370] sm:$0xf]
    %v245 = vld [vmem:[%s1 + $0x374] sm:$0xf]
    %v246 = vld [vmem:[%s1 + $0x378] sm:$0xf]
    %v247 = vld [vmem:[%s1 + $0x37c] sm:$0xf]
    %v248 = vld [vmem:[%s1 + $0x380] sm:$0xf]
    %v249 = vld [vmem:[%s1 + $0x384] sm:$0xf]
    %v250 = vld [vmem:[%s1 + $0x388] sm:$0xf]
    %v251 = vld [vmem:[%s1 + $0x38c] sm:$0xf]
    %v252 = vld [vmem:[%s1 + $0x390] sm:$0xf]
    %v253 = vld [vmem:[%s1 + $0x394] sm:$0xf]
    %v254 = vld [vmem:[%s1 + $0x398] sm:$0xf]
    %v255 = vld [vmem:[%s1 + $0x39c] sm:$0xf]
    %v256 = vld [vmem:[%s1 + $0x3a0] sm:$0xf]
    %v257 = vld [vmem:[%s1 + $0x3a4] sm:$0xf]
    %v258 = vld [vmem:[%s1 + $0x3a8] sm:$0xf]
    %v259 = vld [vmem:[%s1 + $0x3ac] sm:$0xf]
    %v260 = vld [vmem:[%s1 + $0x3b0] sm:$0xf]
    %v261 = vld [vmem:[%s1 + $0x3b4] sm:$0xf]
    %v262 = vld [vmem:[%s1 + $0x3b8] sm:$0xf]
    %v263 = vld [vmem:[%s1 + $0x3bc] sm:$0xf]
    %v264 = vld [vmem:[%s1 + $0x3c0] sm:$0xf]
    %v265 = vld [vmem:[%s1 + $0x3c4] sm:$0xf]
    %v266 = vld [vmem:[%s1 + $0x3c8] sm:$0xf]
    %v267 = vld [vmem:[%s1 + $0x3cc] sm:$0xf]
    %v268 = vld [vmem:[%s1 + $0x3d0] sm:$0xf]
    %v269 = vld [vmem:[%s1 + $0x3d4] sm:$0xf]
    %v270 = vld [vmem:[%s1 + $0x3d8] sm:$0xf]
    %v271 = vld [vmem:[%s1 + $0x3dc] sm:$0xf]
    %v272 = vld [vmem:[%s1 + $0x3e0] sm:$0xf]
    %v273 = vld [vmem:[%s1 + $0x3e4] sm:$0xf]
    %v274 = vld [vmem:[%s1 + $0x3e8] sm:$0xf]
    %v275 = vld [vmem:[%s1 + $0x3ec] sm:$0xf]
    %v276 = vld [vmem:[%s1 + $0x3f0] sm:$0xf]
    %v277 = vld [vmem:[%s1 + $0x3f4] sm:$0xf]
    %v278 = vld [vmem:[%s1 + $0x3f8] sm:$0xf]
    %v279 = vld [vmem:[%s1 + $0x3fc] sm:$0xf]
    %v280 = vld [vmem:[%s2] sm:$0x1]
    %v282 = vlaneseq
    %v283 = vshrl.u32 %v282, 7
    %v284 = vsub.s32 0, %v283
    %v285 = vrot.slane %v280, %v284
    %v295 = vcombine.low %v16, %v18
    %v296 = vcombine.high %v16, %v18
    %v297 = vcombine.low %v20, %v22
    %v298 = vcombine.high %v20, %v22
    %v300 = vunpack.c.l.s4 1966171168
    %v301 = vunpack.c.0.s8 %v300
    %v302 = vlaneseq
    %v303 = vshrl.u32 %v302, 7
    %v304 = vsub.s32 %v301, %v303
    %v305 = vrot.slane %v295, %v304
    %v307 = vunpack.c.l.s4 1966171168
    %v308 = vunpack.c.0.s8 %v307
    %v309 = vlaneseq
    %v310 = vshrl.u32 %v309, 7
    %v311 = vsub.s32 %v308, %v310
    %v312 = vrot.slane %v296, %v311
    %v314 = vunpack.c.l.s4 1966171168
    %v315 = vunpack.c.0.s8 %v314
    %v316 = vlaneseq
    %v317 = vshrl.u32 %v316, 7
    %v318 = vsub.s32 %v315, %v317
    %v319 = vrot.slane %v297, %v318
    %v321 = vunpack.c.l.s4 1966171168
    %v322 = vunpack.c.0.s8 %v321
    %v323 = vlaneseq
    %v324 = vshrl.u32 %v323, 7
    %v325 = vsub.s32 %v322, %v324
    %v326 = vrot.slane %v298, %v325
    %v327 = vcombine.low %v305, %v319
    %v328 = vcombine.high %v305, %v319
    %v329 = vcombine.low %v312, %v326
    %v330 = vcombine.high %v312, %v326
    %v332 = vunpack.c.l.s4 1966171168
    %v333 = vunpack.c.0.s8 %v332
    %v334 = vlaneseq
    %v335 = vshrl.u32 %v334, 7
    %v336 = vsub.s32 %v333, %v335
    %v337 = vrot.slane %v327, %v336
    %v339 = vunpack.c.l.s4 1966171168
    %v340 = vunpack.c.0.s8 %v339
    %v341 = vlaneseq
    %v342 = vshrl.u32 %v341, 7
    %v343 = vsub.s32 %v340, %v342
    %v344 = vrot.slane %v329, %v343
    %v346 = vunpack.c.l.s4 1966171168
    %v347 = vunpack.c.0.s8 %v346
    %v348 = vlaneseq
    %v349 = vshrl.u32 %v348, 7
    %v350 = vsub.s32 %v347, %v349
    %v351 = vrot.slane %v328, %v350
    %v353 = vunpack.c.l.s4 1966171168
    %v354 = vunpack.c.0.s8 %v353
    %v355 = vlaneseq
    %v356 = vshrl.u32 %v355, 7
    %v357 = vsub.s32 %v354, %v356
    %v358 = vrot.slane %v330, %v357
    %v359 = vcombine.high %v337, %v337
    %v360 = vcombine.high %v344, %v344
    %v361 = vcombine.high %v351, %v351
    %v362 = vcombine.high %v358, %v358
    %v363 = vcombine.low %v17, %v19
    %v364 = vcombine.high %v17, %v19
    %v365 = vcombine.low %v21, %v23
    %v366 = vcombine.high %v21, %v23
    %v368 = vunpack.c.l.s4 1966171168
    %v369 = vunpack.c.0.s8 %v368
    %v370 = vlaneseq
    %v371 = vshrl.u32 %v370, 7
    %v372 = vsub.s32 %v369, %v371
    %v373 = vrot.slane %v363, %v372
    %v375 = vunpack.c.l.s4 1966171168
    %v376 = vunpack.c.0.s8 %v375
    %v377 = vlaneseq
    %v378 = vshrl.u32 %v377, 7
    %v379 = vsub.s32 %v376, %v378
    %v380 = vrot.slane %v364, %v379
    %v382 = vunpack.c.l.s4 1966171168
    %v383 = vunpack.c.0.s8 %v382
    %v384 = vlaneseq
    %v385 = vshrl.u32 %v384, 7
    %v386 = vsub.s32 %v383, %v385
    %v387 = vrot.slane %v365, %v386
    %v389 = vunpack.c.l.s4 1966171168
    %v390 = vunpack.c.0.s8 %v389
    %v391 = vlaneseq
    %v392 = vshrl.u32 %v391, 7
    %v393 = vsub.s32 %v390, %v392
    %v394 = vrot.slane %v366, %v393
    %v395 = vcombine.low %v373, %v387
    %v396 = vcombine.high %v373, %v387
    %v397 = vcombine.low %v380, %v394
    %v398 = vcombine.high %v380, %v394
    %v400 = vunpack.c.l.s4 1966171168
    %v401 = vunpack.c.0.s8 %v400
    %v402 = vlaneseq
    %v403 = vshrl.u32 %v402, 7
    %v404 = vsub.s32 %v401, %v403
    %v405 = vrot.slane %v395, %v404
    %v407 = vunpack.c.l.s4 1966171168
    %v408 = vunpack.c.0.s8 %v407
    %v409 = vlaneseq
    %v410 = vshrl.u32 %v409, 7
    %v411 = vsub.s32 %v408, %v410
    %v412 = vrot.slane %v397, %v411
    %v414 = vunpack.c.l.s4 1966171168
    %v415 = vunpack.c.0.s8 %v414
    %v416 = vlaneseq
    %v417 = vshrl.u32 %v416, 7
    %v418 = vsub.s32 %v415, %v417
    %v419 = vrot.slane %v396, %v418
    %v421 = vunpack.c.l.s4 1966171168
    %v422 = vunpack.c.0.s8 %v421
    %v423 = vlaneseq
    %v424 = vshrl.u32 %v423, 7
    %v425 = vsub.s32 %v422, %v424
    %v426 = vrot.slane %v398, %v425
    %v427 = vcombine.high %v405, %v405
    %v428 = vcombine.high %v412, %v412
    %v429 = vcombine.high %v419, %v419
    %v430 = vcombine.high %v426, %v426
    %v703 = vunpack.c.l.b16 %v24
    %v704 = vunpack.c.l.b16 %v25
    %v705 = vunpack.c.l.b16 %v26
    %v706 = vunpack.c.l.b16 %v27
    %v707 = vunpack.c.l.b16 %v28
    %v708 = vunpack.c.l.b16 %v29
    %v709 = vunpack.c.l.b16 %v30
    %v710 = vunpack.c.l.b16 %v31
    %v711 = vunpack.c.l.b16 %v32
    %v712 = vunpack.c.l.b16 %v33
    %v713 = vunpack.c.l.b16 %v34
    %v714 = vunpack.c.l.b16 %v35
    %v715 = vunpack.c.l.b16 %v36
    %v716 = vunpack.c.l.b16 %v37
    %v717 = vunpack.c.l.b16 %v38
    %v718 = vunpack.c.l.b16 %v39
    %v719 = vunpack.c.l.b16 %v40
    %v720 = vunpack.c.l.b16 %v41
    %v721 = vunpack.c.l.b16 %v42
    %v722 = vunpack.c.l.b16 %v43
    %v723 = vunpack.c.l.b16 %v44
    %v724 = vunpack.c.l.b16 %v45
    %v725 = vunpack.c.l.b16 %v46
    %v726 = vunpack.c.l.b16 %v47
    %v727 = vunpack.c.l.b16 %v48
    %v728 = vunpack.c.l.b16 %v49
    %v729 = vunpack.c.l.b16 %v50
    %v730 = vunpack.c.l.b16 %v51
    %v731 = vunpack.c.l.b16 %v52
    %v732 = vunpack.c.l.b16 %v53
    %v733 = vunpack.c.l.b16 %v54
    %v734 = vunpack.c.l.b16 %v55
    %v735 = vunpack.c.l.b16 %v56
    %v736 = vunpack.c.l.b16 %v57
    %v737 = vunpack.c.l.b16 %v58
    %v738 = vunpack.c.l.b16 %v59
    %v739 = vunpack.c.l.b16 %v60
    %v740 = vunpack.c.l.b16 %v61
    %v741 = vunpack.c.l.b16 %v62
    %v742 = vunpack.c.l.b16 %v63
    %v743 = vunpack.c.l.b16 %v64
    %v744 = vunpack.c.l.b16 %v65
    %v745 = vunpack.c.l.b16 %v66
    %v746 = vunpack.c.l.b16 %v67
    %v747 = vunpack.c.l.b16 %v68
    %v748 = vunpack.c.l.b16 %v69
    %v749 = vunpack.c.l.b16 %v70
    %v750 = vunpack.c.l.b16 %v71
    %v751 = vunpack.c.l.b16 %v72
    %v752 = vunpack.c.l.b16 %v73
    %v753 = vunpack.c.l.b16 %v74
    %v754 = vunpack.c.l.b16 %v75
    %v755 = vunpack.c.l.b16 %v76
    %v756 = vunpack.c.l.b16 %v77
    %v757 = vunpack.c.l.b16 %v78
    %v758 = vunpack.c.l.b16 %v79
    %v759 = vunpack.c.l.b16 %v80
    %v760 = vunpack.c.l.b16 %v81
    %v761 = vunpack.c.l.b16 %v82
    %v762 = vunpack.c.l.b16 %v83
    %v763 = vunpack.c.l.b16 %v84
    %v764 = vunpack.c.l.b16 %v85
    %v765 = vunpack.c.l.b16 %v86
    %v766 = vunpack.c.l.b16 %v87
    %v767 = vunpack.c.l.b16 %v88
    %v768 = vunpack.c.l.b16 %v89
    %v769 = vunpack.c.l.b16 %v90
    %v770 = vunpack.c.l.b16 %v91
    %v771 = vunpack.c.l.b16 %v92
    %v772 = vunpack.c.l.b16 %v93
    %v773 = vunpack.c.l.b16 %v94
    %v774 = vunpack.c.l.b16 %v95
    %v775 = vunpack.c.l.b16 %v96
    %v776 = vunpack.c.l.b16 %v97
    %v777 = vunpack.c.l.b16 %v98
    %v778 = vunpack.c.l.b16 %v99
    %v779 = vunpack.c.l.b16 %v100
    %v780 = vunpack.c.l.b16 %v101
    %v781 = vunpack.c.l.b16 %v102
    %v782 = vunpack.c.l.b16 %v103
    %v783 = vunpack.c.l.b16 %v104
    %v784 = vunpack.c.l.b16 %v105
    %v785 = vunpack.c.l.b16 %v106
    %v786 = vunpack.c.l.b16 %v107
    %v787 = vunpack.c.l.b16 %v108
    %v788 = vunpack.c.l.b16 %v109
    %v789 = vunpack.c.l.b16 %v110
    %v790 = vunpack.c.l.b16 %v111
    %v791 = vunpack.c.l.b16 %v112
    %v792 = vunpack.c.l.b16 %v113
    %v793 = vunpack.c.l.b16 %v114
    %v794 = vunpack.c.l.b16 %v115
    %v795 = vunpack.c.l.b16 %v116
    %v796 = vunpack.c.l.b16 %v117
    %v797 = vunpack.c.l.b16 %v118
    %v798 = vunpack.c.l.b16 %v119
    %v799 = vunpack.c.l.b16 %v120
    %v800 = vunpack.c.l.b16 %v121
    %v801 = vunpack.c.l.b16 %v122
    %v802 = vunpack.c.l.b16 %v123
    %v803 = vunpack.c.l.b16 %v124
    %v804 = vunpack.c.l.b16 %v125
    %v805 = vunpack.c.l.b16 %v126
    %v806 = vunpack.c.l.b16 %v127
    %v807 = vunpack.c.l.b16 %v128
    %v808 = vunpack.c.l.b16 %v129
    %v809 = vunpack.c.l.b16 %v130
    %v810 = vunpack.c.l.b16 %v131
    %v811 = vunpack.c.l.b16 %v132
    %v812 = vunpack.c.l.b16 %v133
    %v813 = vunpack.c.l.b16 %v134
    %v814 = vunpack.c.l.b16 %v135
    %v815 = vunpack.c.l.b16 %v136
    %v816 = vunpack.c.l.b16 %v137
    %v817 = vunpack.c.l.b16 %v138
    %v818 = vunpack.c.l.b16 %v139
    %v819 = vunpack.c.l.b16 %v140
    %v820 = vunpack.c.l.b16 %v141
    %v821 = vunpack.c.l.b16 %v142
    %v822 = vunpack.c.l.b16 %v143
    %v823 = vunpack.c.l.b16 %v144
    %v824 = vunpack.c.l.b16 %v145
    %v825 = vunpack.c.l.b16 %v146
    %v826 = vunpack.c.l.b16 %v147
    %v827 = vunpack.c.l.b16 %v148
    %v828 = vunpack.c.l.b16 %v149
    %v829 = vunpack.c.l.b16 %v150
    %v830 = vunpack.c.l.b16 %v151
    %v831 = vunpack.c.l.b16 %v152
    %v832 = vunpack.c.l.b16 %v153
    %v833 = vunpack.c.l.b16 %v154
    %v834 = vunpack.c.l.b16 %v155
    %v835 = vunpack.c.l.b16 %v156
    %v836 = vunpack.c.l.b16 %v157
    %v837 = vunpack.c.l.b16 %v158
    %v838 = vunpack.c.l.b16 %v159
    %v839 = vunpack.c.l.b16 %v160
    %v840 = vunpack.c.l.b16 %v161
    %v841 = vunpack.c.l.b16 %v162
    %v842 = vunpack.c.l.b16 %v163
    %v843 = vunpack.c.l.b16 %v164
    %v844 = vunpack.c.l.b16 %v165
    %v845 = vunpack.c.l.b16 %v166
    %v846 = vunpack.c.l.b16 %v167
    %v847 = vunpack.c.l.b16 %v168
    %v848 = vunpack.c.l.b16 %v169
    %v849 = vunpack.c.l.b16 %v170
    %v850 = vunpack.c.l.b16 %v171
    %v851 = vunpack.c.l.b16 %v172
    %v852 = vunpack.c.l.b16 %v173
    %v853 = vunpack.c.l.b16 %v174
    %v854 = vunpack.c.l.b16 %v175
    %v855 = vunpack.c.l.b16 %v176
    %v856 = vunpack.c.l.b16 %v177
    %v857 = vunpack.c.l.b16 %v178
    %v858 = vunpack.c.l.b16 %v179
    %v859 = vunpack.c.l.b16 %v180
    %v860 = vunpack.c.l.b16 %v181
    %v861 = vunpack.c.l.b16 %v182
    %v862 = vunpack.c.l.b16 %v183
    %v863 = vunpack.c.l.b16 %v184
    %v864 = vunpack.c.l.b16 %v185
    %v865 = vunpack.c.l.b16 %v186
    %v866 = vunpack.c.l.b16 %v187
    %v867 = vunpack.c.l.b16 %v188
    %v868 = vunpack.c.l.b16 %v189
    %v869 = vunpack.c.l.b16 %v190
    %v870 = vunpack.c.l.b16 %v191
    %v871 = vunpack.c.l.b16 %v192
    %v872 = vunpack.c.l.b16 %v193
    %v873 = vunpack.c.l.b16 %v194
    %v874 = vunpack.c.l.b16 %v195
    %v875 = vunpack.c.l.b16 %v196
    %v876 = vunpack.c.l.b16 %v197
    %v877 = vunpack.c.l.b16 %v198
    %v878 = vunpack.c.l.b16 %v199
    %v879 = vunpack.c.l.b16 %v200
    %v880 = vunpack.c.l.b16 %v201
    %v881 = vunpack.c.l.b16 %v202
    %v882 = vunpack.c.l.b16 %v203
    %v883 = vunpack.c.l.b16 %v204
    %v884 = vunpack.c.l.b16 %v205
    %v885 = vunpack.c.l.b16 %v206
    %v886 = vunpack.c.l.b16 %v207
    %v887 = vunpack.c.l.b16 %v208
    %v888 = vunpack.c.l.b16 %v209
    %v889 = vunpack.c.l.b16 %v210
    %v890 = vunpack.c.l.b16 %v211
    %v891 = vunpack.c.l.b16 %v212
    %v892 = vunpack.c.l.b16 %v213
    %v893 = vunpack.c.l.b16 %v214
    %v894 = vunpack.c.l.b16 %v215
    %v895 = vunpack.c.l.b16 %v216
    %v896 = vunpack.c.l.b16 %v217
    %v897 = vunpack.c.l.b16 %v218
    %v898 = vunpack.c.l.b16 %v219
    %v899 = vunpack.c.l.b16 %v220
    %v900 = vunpack.c.l.b16 %v221
    %v901 = vunpack.c.l.b16 %v222
    %v902 = vunpack.c.l.b16 %v223
    %v903 = vunpack.c.l.b16 %v224
    %v904 = vunpack.c.l.b16 %v225
    %v905 = vunpack.c.l.b16 %v226
    %v906 = vunpack.c.l.b16 %v227
    %v907 = vunpack.c.l.b16 %v228
    %v908 = vunpack.c.l.b16 %v229
    %v909 = vunpack.c.l.b16 %v230
    %v910 = vunpack.c.l.b16 %v231
    %v911 = vunpack.c.l.b16 %v232
    %v912 = vunpack.c.l.b16 %v233
    %v913 = vunpack.c.l.b16 %v234
    %v914 = vunpack.c.l.b16 %v235
    %v915 = vunpack.c.l.b16 %v236
    %v916 = vunpack.c.l.b16 %v237
    %v917 = vunpack.c.l.b16 %v238
    %v918 = vunpack.c.l.b16 %v239
    %v919 = vunpack.c.l.b16 %v240
    %v920 = vunpack.c.l.b16 %v241
    %v921 = vunpack.c.l.b16 %v242
    %v922 = vunpack.c.l.b16 %v243
    %v923 = vunpack.c.l.b16 %v244
    %v924 = vunpack.c.l.b16 %v245
    %v925 = vunpack.c.l.b16 %v246
    %v926 = vunpack.c.l.b16 %v247
    %v927 = vunpack.c.l.b16 %v248
    %v928 = vunpack.c.l.b16 %v249
    %v929 = vunpack.c.l.b16 %v250
    %v930 = vunpack.c.l.b16 %v251
    %v931 = vunpack.c.l.b16 %v252
    %v932 = vunpack.c.l.b16 %v253
    %v933 = vunpack.c.l.b16 %v254
    %v934 = vunpack.c.l.b16 %v255
    %v935 = vunpack.c.l.b16 %v256
    %v936 = vunpack.c.l.b16 %v257
    %v937 = vunpack.c.l.b16 %v258
    %v938 = vunpack.c.l.b16 %v259
    %v939 = vunpack.c.l.b16 %v260
    %v940 = vunpack.c.l.b16 %v261
    %v941 = vunpack.c.l.b16 %v262
    %v942 = vunpack.c.l.b16 %v263
    %v943 = vunpack.c.l.b16 %v264
    %v944 = vunpack.c.l.b16 %v265
    %v945 = vunpack.c.l.b16 %v266
    %v946 = vunpack.c.l.b16 %v267
    %v947 = vunpack.c.l.b16 %v268
    %v948 = vunpack.c.l.b16 %v269
    %v949 = vunpack.c.l.b16 %v270
    %v950 = vunpack.c.l.b16 %v271
    %v951 = vunpack.c.l.b16 %v272
    %v952 = vunpack.c.l.b16 %v273
    %v953 = vunpack.c.l.b16 %v274
    %v954 = vunpack.c.l.b16 %v275
    %v955 = vunpack.c.l.b16 %v276
    %v956 = vunpack.c.l.b16 %v277
    %v957 = vunpack.c.l.b16 %v278
    %v958 = vunpack.c.l.b16 %v279
    %v959 = vpack.c.b16 %v704, %v703
    %v960 = vpack.c.b16 %v706, %v705
    %v961 = vpack.c.b16 %v708, %v707
    %v962 = vpack.c.b16 %v710, %v709
    %v963 = vpack.c.b16 %v712, %v711
    %v964 = vpack.c.b16 %v714, %v713
    %v965 = vpack.c.b16 %v716, %v715
    %v966 = vpack.c.b16 %v718, %v717
    %v967 = vpack.c.b16 %v720, %v719
    %v968 = vpack.c.b16 %v722, %v721
    %v969 = vpack.c.b16 %v724, %v723
    %v970 = vpack.c.b16 %v726, %v725
    %v971 = vpack.c.b16 %v728, %v727
    %v972 = vpack.c.b16 %v730, %v729
    %v973 = vpack.c.b16 %v732, %v731
    %v974 = vpack.c.b16 %v734, %v733
    %v975 = vpack.c.b16 %v736, %v735
    %v976 = vpack.c.b16 %v738, %v737
    %v977 = vpack.c.b16 %v740, %v739
    %v978 = vpack.c.b16 %v742, %v741
    %v979 = vpack.c.b16 %v744, %v743
    %v980 = vpack.c.b16 %v746, %v745
    %v981 = vpack.c.b16 %v748, %v747
    %v982 = vpack.c.b16 %v750, %v749
    %v983 = vpack.c.b16 %v752, %v751
    %v984 = vpack.c.b16 %v754, %v753
    %v985 = vpack.c.b16 %v756, %v755
    %v986 = vpack.c.b16 %v758, %v757
    %v987 = vpack.c.b16 %v760, %v759
    %v988 = vpack.c.b16 %v762, %v761
    %v989 = vpack.c.b16 %v764, %v763
    %v990 = vpack.c.b16 %v766, %v765
    %v991 = vpack.c.b16 %v768, %v767
    %v992 = vpack.c.b16 %v770, %v769
    %v993 = vpack.c.b16 %v772, %v771
    %v994 = vpack.c.b16 %v774, %v773
    %v995 = vpack.c.b16 %v776, %v775
    %v996 = vpack.c.b16 %v778, %v777
    %v997 = vpack.c.b16 %v780, %v779
    %v998 = vpack.c.b16 %v782, %v781
    %v999 = vpack.c.b16 %v784, %v783
    %v1000 = vpack.c.b16 %v786, %v785
    %v1001 = vpack.c.b16 %v788, %v787
    %v1002 = vpack.c.b16 %v790, %v789
    %v1003 = vpack.c.b16 %v792, %v791
    %v1004 = vpack.c.b16 %v794, %v793
    %v1005 = vpack.c.b16 %v796, %v795
    %v1006 = vpack.c.b16 %v798, %v797
    %v1007 = vpack.c.b16 %v800, %v799
    %v1008 = vpack.c.b16 %v802, %v801
    %v1009 = vpack.c.b16 %v804, %v803
    %v1010 = vpack.c.b16 %v806, %v805
    %v1011 = vpack.c.b16 %v808, %v807
    %v1012 = vpack.c.b16 %v810, %v809
    %v1013 = vpack.c.b16 %v812, %v811
    %v1014 = vpack.c.b16 %v814, %v813
    %v1015 = vpack.c.b16 %v816, %v815
    %v1016 = vpack.c.b16 %v818, %v817
    %v1017 = vpack.c.b16 %v820, %v819
    %v1018 = vpack.c.b16 %v822, %v821
    %v1019 = vpack.c.b16 %v824, %v823
    %v1020 = vpack.c.b16 %v826, %v825
    %v1021 = vpack.c.b16 %v828, %v827
    %v1022 = vpack.c.b16 %v830, %v829
    %v1023 = vpack.c.b16 %v832, %v831
    %v1024 = vpack.c.b16 %v834, %v833
    %v1025 = vpack.c.b16 %v836, %v835
    %v1026 = vpack.c.b16 %v838, %v837
    %v1027 = vpack.c.b16 %v840, %v839
    %v1028 = vpack.c.b16 %v842, %v841
    %v1029 = vpack.c.b16 %v844, %v843
    %v1030 = vpack.c.b16 %v846, %v845
    %v1031 = vpack.c.b16 %v848, %v847
    %v1032 = vpack.c.b16 %v850, %v849
    %v1033 = vpack.c.b16 %v852, %v851
    %v1034 = vpack.c.b16 %v854, %v853
    %v1035 = vpack.c.b16 %v856, %v855
    %v1036 = vpack.c.b16 %v858, %v857
    %v1037 = vpack.c.b16 %v860, %v859
    %v1038 = vpack.c.b16 %v862, %v861
    %v1039 = vpack.c.b16 %v864, %v863
    %v1040 = vpack.c.b16 %v866, %v865
    %v1041 = vpack.c.b16 %v868, %v867
    %v1042 = vpack.c.b16 %v870, %v869
    %v1043 = vpack.c.b16 %v872, %v871
    %v1044 = vpack.c.b16 %v874, %v873
    %v1045 = vpack.c.b16 %v876, %v875
    %v1046 = vpack.c.b16 %v878, %v877
    %v1047 = vpack.c.b16 %v880, %v879
    %v1048 = vpack.c.b16 %v882, %v881
    %v1049 = vpack.c.b16 %v884, %v883
    %v1050 = vpack.c.b16 %v886, %v885
    %v1051 = vpack.c.b16 %v888, %v887
    %v1052 = vpack.c.b16 %v890, %v889
    %v1053 = vpack.c.b16 %v892, %v891
    %v1054 = vpack.c.b16 %v894, %v893
    %v1055 = vpack.c.b16 %v896, %v895
    %v1056 = vpack.c.b16 %v898, %v897
    %v1057 = vpack.c.b16 %v900, %v899
    %v1058 = vpack.c.b16 %v902, %v901
    %v1059 = vpack.c.b16 %v904, %v903
    %v1060 = vpack.c.b16 %v906, %v905
    %v1061 = vpack.c.b16 %v908, %v907
    %v1062 = vpack.c.b16 %v910, %v909
    %v1063 = vpack.c.b16 %v912, %v911
    %v1064 = vpack.c.b16 %v914, %v913
    %v1065 = vpack.c.b16 %v916, %v915
    %v1066 = vpack.c.b16 %v918, %v917
    %v1067 = vpack.c.b16 %v920, %v919
    %v1068 = vpack.c.b16 %v922, %v921
    %v1069 = vpack.c.b16 %v924, %v923
    %v1070 = vpack.c.b16 %v926, %v925
    %v1071 = vpack.c.b16 %v928, %v927
    %v1072 = vpack.c.b16 %v930, %v929
    %v1073 = vpack.c.b16 %v932, %v931
    %v1074 = vpack.c.b16 %v934, %v933
    %v1075 = vpack.c.b16 %v936, %v935
    %v1076 = vpack.c.b16 %v938, %v937
    %v1077 = vpack.c.b16 %v940, %v939
    %v1078 = vpack.c.b16 %v942, %v941
    %v1079 = vpack.c.b16 %v944, %v943
    %v1080 = vpack.c.b16 %v946, %v945
    %v1081 = vpack.c.b16 %v948, %v947
    %v1082 = vpack.c.b16 %v950, %v949
    %v1083 = vpack.c.b16 %v952, %v951
    %v1084 = vpack.c.b16 %v954, %v953
    %v1085 = vpack.c.b16 %v956, %v955
    %v1086 = vpack.c.b16 %v958, %v957
    %1215 = vmatprep.subr.bf16.mxu0 0
    %1216 = vmatpush1.bf16.msra.mxu0 %v966
    %1217 = vmatprep.subr.bf16.mxu0 0
    %1218 = vmatpush1.bf16.msra.mxu0 %v965
    %1219 = vmatprep.subr.bf16.mxu0 0
    %1220 = vmatpush1.bf16.msra.mxu0 %v964
    %1221 = vmatprep.subr.bf16.mxu0 0
    %1222 = vmatpush1.bf16.msra.mxu0 %v963
    %1223 = vmatprep.subr.bf16.mxu0 0
    %1224 = vmatpush1.bf16.msra.mxu0 %v962
    %1225 = vmatprep.subr.bf16.mxu0 0
    %1226 = vmatpush1.bf16.msra.mxu0 %v961
    %1227 = vmatprep.subr.bf16.mxu0 0
    %1228 = vmatpush1.bf16.msra.mxu0 %v960
    %1229 = vmatprep.subr.bf16.mxu0 0
    %1230 = vmatpush1.bf16.msra.mxu0 %v959
    %1231 = vmatprep.subr.bf16.mxu0 0
    %1232 = vmatpush2.bf16.msra.mxu0 %v974
    %1233 = vmatprep.subr.bf16.mxu0 0
    %1234 = vmatpush2.bf16.msra.mxu0 %v973
    %1235 = vmatprep.subr.bf16.mxu0 0
    %1236 = vmatpush2.bf16.msra.mxu0 %v972
    %1237 = vmatprep.subr.bf16.mxu0 0
    %1238 = vmatpush2.bf16.msra.mxu0 %v971
    %1239 = vmatprep.subr.bf16.mxu0 0
    %1240 = vmatpush2.bf16.msra.mxu0 %v970
    %1241 = vmatprep.subr.bf16.mxu0 0
    %1242 = vmatpush2.bf16.msra.mxu0 %v969
    %1243 = vmatprep.subr.bf16.mxu0 0
    %1244 = vmatpush2.bf16.msra.mxu0 %v968
    %1245 = vmatprep.subr.bf16.mxu0 0
    %1246 = vmatpush2.bf16.msra.mxu0 %v967
    %1247 = vmatprep.mubr.bf16.mxu0 %v351
    %1248 = vmatmul.mubr.bf16.gmra.mxu0 %v337
    %v1249 = vpop.f32.mrf.mxu0
    %v1250 = vadd.f32 %v285, %v1249
    %v1251 = vpop.f32.mrf.mxu0
    %v1252 = vpop.f32.mrf.mxu0
    %v1253 = vpop.f32.mrf.mxu0
    %1254 = vdwg.mxu0
    %1255 = vmatprep.subr.bf16.mxu0 0
    %1256 = vmatpush1.bf16.msra.mxu0 %v982
    %1257 = vmatprep.subr.bf16.mxu0 0
    %1258 = vmatpush1.bf16.msra.mxu0 %v981
    %1259 = vmatprep.subr.bf16.mxu0 0
    %1260 = vmatpush1.bf16.msra.mxu0 %v980
    %1261 = vmatprep.subr.bf16.mxu0 0
    %1262 = vmatpush1.bf16.msra.mxu0 %v979
    %1263 = vmatprep.subr.bf16.mxu0 0
    %1264 = vmatpush1.bf16.msra.mxu0 %v978
    %1265 = vmatprep.subr.bf16.mxu0 0
    %1266 = vmatpush1.bf16.msra.mxu0 %v977
    %1267 = vmatprep.subr.bf16.mxu0 0
    %1268 = vmatpush1.bf16.msra.mxu0 %v976
    %1269 = vmatprep.subr.bf16.mxu0 0
    %1270 = vmatpush1.bf16.msra.mxu0 %v975
    %1271 = vmatprep.subr.bf16.mxu0 0
    %1272 = vmatpush2.bf16.msra.mxu0 %v990
    %1273 = vmatprep.subr.bf16.mxu0 0
    %1274 = vmatpush2.bf16.msra.mxu0 %v989
    %1275 = vmatprep.subr.bf16.mxu0 0
    %1276 = vmatpush2.bf16.msra.mxu0 %v988
    %1277 = vmatprep.subr.bf16.mxu0 0
    %1278 = vmatpush2.bf16.msra.mxu0 %v987
    %1279 = vmatprep.subr.bf16.mxu0 0
    %1280 = vmatpush2.bf16.msra.mxu0 %v986
    %1281 = vmatprep.subr.bf16.mxu0 0
    %1282 = vmatpush2.bf16.msra.mxu0 %v985
    %1283 = vmatprep.subr.bf16.mxu0 0
    %1284 = vmatpush2.bf16.msra.mxu0 %v984
    %1285 = vmatprep.subr.bf16.mxu0 0
    %1286 = vmatpush2.bf16.msra.mxu0 %v983
    %1287 = vmatprep.mubr.bf16.mxu0 %v361
    %1288 = vmatmul.mubr.bf16.gmra.mxu0 %v359
    %v1289 = vpop.f32.mrf.mxu0
    %v1290 = vadd.f32 %v1250, %v1289
    %v1291 = vpop.f32.mrf.mxu0
    %v1292 = vpop.f32.mrf.mxu0
    %v1293 = vpop.f32.mrf.mxu0
    %1294 = vdwg.mxu0
    %1295 = vmatprep.subr.bf16.mxu0 0
    %1296 = vmatpush1.bf16.msra.mxu0 %v998
    %1297 = vmatprep.subr.bf16.mxu0 0
    %1298 = vmatpush1.bf16.msra.mxu0 %v997
    %1299 = vmatprep.subr.bf16.mxu0 0
    %1300 = vmatpush1.bf16.msra.mxu0 %v996
    %1301 = vmatprep.subr.bf16.mxu0 0
    %1302 = vmatpush1.bf16.msra.mxu0 %v995
    %1303 = vmatprep.subr.bf16.mxu0 0
    %1304 = vmatpush1.bf16.msra.mxu0 %v994
    %1305 = vmatprep.subr.bf16.mxu0 0
    %1306 = vmatpush1.bf16.msra.mxu0 %v993
    %1307 = vmatprep.subr.bf16.mxu0 0
    %1308 = vmatpush1.bf16.msra.mxu0 %v992
    %1309 = vmatprep.subr.bf16.mxu0 0
    %1310 = vmatpush1.bf16.msra.mxu0 %v991
    %1311 = vmatprep.subr.bf16.mxu0 0
    %1312 = vmatpush2.bf16.msra.mxu0 %v1006
    %1313 = vmatprep.subr.bf16.mxu0 0
    %1314 = vmatpush2.bf16.msra.mxu0 %v1005
    %1315 = vmatprep.subr.bf16.mxu0 0
    %1316 = vmatpush2.bf16.msra.mxu0 %v1004
    %1317 = vmatprep.subr.bf16.mxu0 0
    %1318 = vmatpush2.bf16.msra.mxu0 %v1003
    %1319 = vmatprep.subr.bf16.mxu0 0
    %1320 = vmatpush2.bf16.msra.mxu0 %v1002
    %1321 = vmatprep.subr.bf16.mxu0 0
    %1322 = vmatpush2.bf16.msra.mxu0 %v1001
    %1323 = vmatprep.subr.bf16.mxu0 0
    %1324 = vmatpush2.bf16.msra.mxu0 %v1000
    %1325 = vmatprep.subr.bf16.mxu0 0
    %1326 = vmatpush2.bf16.msra.mxu0 %v999
    %1327 = vmatprep.mubr.bf16.mxu0 %v358
    %1328 = vmatmul.mubr.bf16.gmra.mxu0 %v344
    %v1329 = vpop.f32.mrf.mxu0
    %v1330 = vadd.f32 %v1290, %v1329
    %v1331 = vpop.f32.mrf.mxu0
    %v1332 = vpop.f32.mrf.mxu0
    %v1333 = vpop.f32.mrf.mxu0
    %1334 = vdwg.mxu0
    %1335 = vmatprep.subr.bf16.mxu0 0
    %1336 = vmatpush1.bf16.msra.mxu0 %v1014
    %1337 = vmatprep.subr.bf16.mxu0 0
    %1338 = vmatpush1.bf16.msra.mxu0 %v1013
    %1339 = vmatprep.subr.bf16.mxu0 0
    %1340 = vmatpush1.bf16.msra.mxu0 %v1012
    %1341 = vmatprep.subr.bf16.mxu0 0
    %1342 = vmatpush1.bf16.msra.mxu0 %v1011
    %1343 = vmatprep.subr.bf16.mxu0 0
    %1344 = vmatpush1.bf16.msra.mxu0 %v1010
    %1345 = vmatprep.subr.bf16.mxu0 0
    %1346 = vmatpush1.bf16.msra.mxu0 %v1009
    %1347 = vmatprep.subr.bf16.mxu0 0
    %1348 = vmatpush1.bf16.msra.mxu0 %v1008
    %1349 = vmatprep.subr.bf16.mxu0 0
    %1350 = vmatpush1.bf16.msra.mxu0 %v1007
    %1351 = vmatprep.subr.bf16.mxu0 0
    %1352 = vmatpush2.bf16.msra.mxu0 %v1022
    %1353 = vmatprep.subr.bf16.mxu0 0
    %1354 = vmatpush2.bf16.msra.mxu0 %v1021
    %1355 = vmatprep.subr.bf16.mxu0 0
    %1356 = vmatpush2.bf16.msra.mxu0 %v1020
    %1357 = vmatprep.subr.bf16.mxu0 0
    %1358 = vmatpush2.bf16.msra.mxu0 %v1019
    %1359 = vmatprep.subr.bf16.mxu0 0
    %1360 = vmatpush2.bf16.msra.mxu0 %v1018
    %1361 = vmatprep.subr.bf16.mxu0 0
    %1362 = vmatpush2.bf16.msra.mxu0 %v1017
    %1363 = vmatprep.subr.bf16.mxu0 0
    %1364 = vmatpush2.bf16.msra.mxu0 %v1016
    %1365 = vmatprep.subr.bf16.mxu0 0
    %1366 = vmatpush2.bf16.msra.mxu0 %v1015
    %1367 = vmatprep.mubr.bf16.mxu0 %v362
    %1368 = vmatmul.mubr.bf16.gmra.mxu0 %v360
    %v1369 = vpop.f32.mrf.mxu0
    %v1370 = vadd.f32 %v1330, %v1369
    %v1371 = vpop.f32.mrf.mxu0
    %v1372 = vpop.f32.mrf.mxu0
    %v1373 = vpop.f32.mrf.mxu0
    %1374 = vdwg.mxu0
    %1375 = vmatprep.subr.bf16.mxu0 0
    %1376 = vmatpush1.bf16.msra.mxu0 %v1030
    %1377 = vmatprep.subr.bf16.mxu0 0
    %1378 = vmatpush1.bf16.msra.mxu0 %v1029
    %1379 = vmatprep.subr.bf16.mxu0 0
    %1380 = vmatpush1.bf16.msra.mxu0 %v1028
    %1381 = vmatprep.subr.bf16.mxu0 0
    %1382 = vmatpush1.bf16.msra.mxu0 %v1027
    %1383 = vmatprep.subr.bf16.mxu0 0
    %1384 = vmatpush1.bf16.msra.mxu0 %v1026
    %1385 = vmatprep.subr.bf16.mxu0 0
    %1386 = vmatpush1.bf16.msra.mxu0 %v1025
    %1387 = vmatprep.subr.bf16.mxu0 0
    %1388 = vmatpush1.bf16.msra.mxu0 %v1024
    %1389 = vmatprep.subr.bf16.mxu0 0
    %1390 = vmatpush1.bf16.msra.mxu0 %v1023
    %1391 = vmatprep.subr.bf16.mxu0 0
    %1392 = vmatpush2.bf16.msra.mxu0 %v1038
    %1393 = vmatprep.subr.bf16.mxu0 0
    %1394 = vmatpush2.bf16.msra.mxu0 %v1037
    %1395 = vmatprep.subr.bf16.mxu0 0
    %1396 = vmatpush2.bf16.msra.mxu0 %v1036
    %1397 = vmatprep.subr.bf16.mxu0 0
    %1398 = vmatpush2.bf16.msra.mxu0 %v1035
    %1399 = vmatprep.subr.bf16.mxu0 0
    %1400 = vmatpush2.bf16.msra.mxu0 %v1034
    %1401 = vmatprep.subr.bf16.mxu0 0
    %1402 = vmatpush2.bf16.msra.mxu0 %v1033
    %1403 = vmatprep.subr.bf16.mxu0 0
    %1404 = vmatpush2.bf16.msra.mxu0 %v1032
    %1405 = vmatprep.subr.bf16.mxu0 0
    %1406 = vmatpush2.bf16.msra.mxu0 %v1031
    %1407 = vmatprep.mubr.bf16.mxu0 %v419
    %1408 = vmatmul.mubr.bf16.gmra.mxu0 %v405
    %v1409 = vpop.f32.mrf.mxu0
    %v1410 = vadd.f32 %v1370, %v1409
    %v1411 = vpop.f32.mrf.mxu0
    %v1412 = vpop.f32.mrf.mxu0
    %v1413 = vpop.f32.mrf.mxu0
    %1414 = vdwg.mxu0
    %1415 = vmatprep.subr.bf16.mxu0 0
    %1416 = vmatpush1.bf16.msra.mxu0 %v1046
    %1417 = vmatprep.subr.bf16.mxu0 0
    %1418 = vmatpush1.bf16.msra.mxu0 %v1045
    %1419 = vmatprep.subr.bf16.mxu0 0
    %1420 = vmatpush1.bf16.msra.mxu0 %v1044
    %1421 = vmatprep.subr.bf16.mxu0 0
    %1422 = vmatpush1.bf16.msra.mxu0 %v1043
    %1423 = vmatprep.subr.bf16.mxu0 0
    %1424 = vmatpush1.bf16.msra.mxu0 %v1042
    %1425 = vmatprep.subr.bf16.mxu0 0
    %1426 = vmatpush1.bf16.msra.mxu0 %v1041
    %1427 = vmatprep.subr.bf16.mxu0 0
    %1428 = vmatpush1.bf16.msra.mxu0 %v1040
    %1429 = vmatprep.subr.bf16.mxu0 0
    %1430 = vmatpush1.bf16.msra.mxu0 %v1039
    %1431 = vmatprep.subr.bf16.mxu0 0
    %1432 = vmatpush2.bf16.msra.mxu0 %v1054
    %1433 = vmatprep.subr.bf16.mxu0 0
    %1434 = vmatpush2.bf16.msra.mxu0 %v1053
    %1435 = vmatprep.subr.bf16.mxu0 0
    %1436 = vmatpush2.bf16.msra.mxu0 %v1052
    %1437 = vmatprep.subr.bf16.mxu0 0
    %1438 = vmatpush2.bf16.msra.mxu0 %v1051
    %1439 = vmatprep.subr.bf16.mxu0 0
    %1440 = vmatpush2.bf16.msra.mxu0 %v1050
    %1441 = vmatprep.subr.bf16.mxu0 0
    %1442 = vmatpush2.bf16.msra.mxu0 %v1049
    %1443 = vmatprep.subr.bf16.mxu0 0
    %1444 = vmatpush2.bf16.msra.mxu0 %v1048
    %1445 = vmatprep.subr.bf16.mxu0 0
    %1446 = vmatpush2.bf16.msra.mxu0 %v1047
    %1447 = vmatprep.mubr.bf16.mxu0 %v429
    %1448 = vmatmul.mubr.bf16.gmra.mxu0 %v427
    %v1449 = vpop.f32.mrf.mxu0
    %v1450 = vadd.f32 %v1410, %v1449
    %v1451 = vpop.f32.mrf.mxu0
    %v1452 = vpop.f32.mrf.mxu0
    %v1453 = vpop.f32.mrf.mxu0
    %1454 = vdwg.mxu0
    %1455 = vmatprep.subr.bf16.mxu0 0
    %1456 = vmatpush1.bf16.msra.mxu0 %v1062
    %1457 = vmatprep.subr.bf16.mxu0 0
    %1458 = vmatpush1.bf16.msra.mxu0 %v1061
    %1459 = vmatprep.subr.bf16.mxu0 0
    %1460 = vmatpush1.bf16.msra.mxu0 %v1060
    %1461 = vmatprep.subr.bf16.mxu0 0
    %1462 = vmatpush1.bf16.msra.mxu0 %v1059
    %1463 = vmatprep.subr.bf16.mxu0 0
    %1464 = vmatpush1.bf16.msra.mxu0 %v1058
    %1465 = vmatprep.subr.bf16.mxu0 0
    %1466 = vmatpush1.bf16.msra.mxu0 %v1057
    %1467 = vmatprep.subr.bf16.mxu0 0
    %1468 = vmatpush1.bf16.msra.mxu0 %v1056
    %1469 = vmatprep.subr.bf16.mxu0 0
    %1470 = vmatpush1.bf16.msra.mxu0 %v1055
    %1471 = vmatprep.subr.bf16.mxu0 0
    %1472 = vmatpush2.bf16.msra.mxu0 %v1070
    %1473 = vmatprep.subr.bf16.mxu0 0
    %1474 = vmatpush2.bf16.msra.mxu0 %v1069
    %1475 = vmatprep.subr.bf16.mxu0 0
    %1476 = vmatpush2.bf16.msra.mxu0 %v1068
    %1477 = vmatprep.subr.bf16.mxu0 0
    %1478 = vmatpush2.bf16.msra.mxu0 %v1067
    %1479 = vmatprep.subr.bf16.mxu0 0
    %1480 = vmatpush2.bf16.msra.mxu0 %v1066
    %1481 = vmatprep.subr.bf16.mxu0 0
    %1482 = vmatpush2.bf16.msra.mxu0 %v1065
    %1483 = vmatprep.subr.bf16.mxu0 0
    %1484 = vmatpush2.bf16.msra.mxu0 %v1064
    %1485 = vmatprep.subr.bf16.mxu0 0
    %1486 = vmatpush2.bf16.msra.mxu0 %v1063
    %1487 = vmatprep.mubr.bf16.mxu0 %v426
    %1488 = vmatmul.mubr.bf16.gmra.mxu0 %v412
    %v1489 = vpop.f32.mrf.mxu0
    %v1490 = vadd.f32 %v1450, %v1489
    %v1491 = vpop.f32.mrf.mxu0
    %v1492 = vpop.f32.mrf.mxu0
    %v1493 = vpop.f32.mrf.mxu0
    %1494 = vdwg.mxu0
    %1495 = vmatprep.subr.bf16.mxu0 0
    %1496 = vmatpush1.bf16.msra.mxu0 %v1078
    %1497 = vmatprep.subr.bf16.mxu0 0
    %1498 = vmatpush1.bf16.msra.mxu0 %v1077
    %1499 = vmatprep.subr.bf16.mxu0 0
    %1500 = vmatpush1.bf16.msra.mxu0 %v1076
    %1501 = vmatprep.subr.bf16.mxu0 0
    %1502 = vmatpush1.bf16.msra.mxu0 %v1075
    %1503 = vmatprep.subr.bf16.mxu0 0
    %1504 = vmatpush1.bf16.msra.mxu0 %v1074
    %1505 = vmatprep.subr.bf16.mxu0 0
    %1506 = vmatpush1.bf16.msra.mxu0 %v1073
    %1507 = vmatprep.subr.bf16.mxu0 0
    %1508 = vmatpush1.bf16.msra.mxu0 %v1072
    %1509 = vmatprep.subr.bf16.mxu0 0
    %1510 = vmatpush1.bf16.msra.mxu0 %v1071
    %1511 = vmatprep.subr.bf16.mxu0 0
    %1512 = vmatpush2.bf16.msra.mxu0 %v1086
    %1513 = vmatprep.subr.bf16.mxu0 0
    %1514 = vmatpush2.bf16.msra.mxu0 %v1085
    %1515 = vmatprep.subr.bf16.mxu0 0
    %1516 = vmatpush2.bf16.msra.mxu0 %v1084
    %1517 = vmatprep.subr.bf16.mxu0 0
    %1518 = vmatpush2.bf16.msra.mxu0 %v1083
    %1519 = vmatprep.subr.bf16.mxu0 0
    %1520 = vmatpush2.bf16.msra.mxu0 %v1082
    %1521 = vmatprep.subr.bf16.mxu0 0
    %1522 = vmatpush2.bf16.msra.mxu0 %v1081
    %1523 = vmatprep.subr.bf16.mxu0 0
    %1524 = vmatpush2.bf16.msra.mxu0 %v1080
    %1525 = vmatprep.subr.bf16.mxu0 0
    %1526 = vmatpush2.bf16.msra.mxu0 %v1079
    %1527 = vmatprep.mubr.bf16.mxu0 %v430
    %1528 = vmatmul.mubr.bf16.gmra.mxu0 %v428
    %v1529 = vpop.f32.mrf.mxu0
    %v1530 = vadd.f32 %v1490, %v1529
    %v1531 = vpop.f32.mrf.mxu0
    %v1532 = vpop.f32.mrf.mxu0
    %v1533 = vpop.f32.mrf.mxu0
    %1534 = vdwg.mxu0
    %1535 = vst [vmem:[#allocation2] sm:$0xff] %v1530
    // Predicated region
    $region14: #{basic_model_forward.7} parent=1 // pred_check
      _
    $region15: #{basic_model_forward.7} parent=1 // pred_check_branch
      %1537 = sbr.rel (0) target = $region17
    $region16: #{basic_model_forward.7} parent=1 // pred_region
      %s1539 = ssub.s32 128, 32
      %1540 = vsyncadd [#allocation3], %s1539
      %s1541 = sshll.u32 [#allocation2], 4
      %s1542 = int_to_ptr.vmem [resolvable:$true] %s1541
      %1547 = dma.vmem_to_hbm [thread:$0]  %s1542, 32, %s3, [#allocation3], 32, 32, 2
    $region17: #{basic_model_forward.7} parent=1 // pred_fallthru
      _
    // Predicated region
    $region18: #{basic_model_forward.7} parent=1 // pred_check
      _
    $region19: #{basic_model_forward.7} parent=1 // pred_check_branch
      %1549 = sbr.rel (0) target = $region21
    $region20: #{basic_model_forward.7} parent=1 // pred_region
      %1550 = dma.done [#allocation3], 128
    $region21: #{basic_model_forward.7} parent=1 // pred_fallthru
      _
    %1551 = vsyncpa [#allocation3], 1

</llo_original>
